<compile_context>
chip_gen: v5e
topology: v5e:2x2
jax: 0.10.0
libtpu: 0.0.40
codegen_flags: <defaults>
</compile_context>

<pallas_src>
import functools

import jax
import jax.numpy as jnp
from jax import lax
from jax.experimental import pallas as pl
from jax.experimental.pallas import tpu as pltpu


_VMEM_LIMIT = 32 * 1024 * 1024  # well under v7x's 64 MiB physical VMEM


# ----------------------------- Pallas kernels ------------------------------


def _gemm_fused_kernel(a_ref, w_ref, b_ref, o_ref, acc_ref, *,
                       epilogue, slope, eps, n_samples, spatial):
    """Tiled GEMM with fused epilogue.

    acc += A_tile @ W_tile over the K grid axis; at the last K step:
      "lrelu"    : out = LeakyReLU(acc + bias)
      "in_lrelu" : out = LeakyReLU(InstanceNorm2d(acc + bias))  (needs tm == full M)
      otherwise  : out = acc + bias
    """
    k = pl.program_id(2)

    @pl.when(k == 0)
    def _init():
        acc_ref[...] = jnp.zeros_like(acc_ref)

    acc_ref[...] += jnp.dot(a_ref[...], w_ref[...],
                            preferred_element_type=jnp.float32)

    @pl.when(k == pl.num_programs(2) - 1)
    def _finalize():
        y = acc_ref[...] + b_ref[...]               # (tm, tn), bias broadcasts
        if epilogue == "lrelu":
            y = jnp.where(y > 0, y, slope * y)
        elif epilogue == "in_lrelu":
            # Rows are (n, oh, ow) n-major: rows [n*spatial, (n+1)*spatial) belong to
            # sample n.  Per-sample, per-column (= per-channel) biased mean/var over
            # the spatial rows == InstanceNorm2d(eps), then LeakyReLU.  Pad rows sit
            # after the last sample and are excluded by the masks.
            row = lax.broadcasted_iota(jnp.int32, y.shape, 0)
            inv_s = jnp.float32(1.0 / spatial)
            out = y
            for n in range(n_samples):              # n_samples is small & static
                m = (row >= n * spatial) & (row < (n + 1) * spatial)
                xm = jnp.where(m, y, 0.0)
                mean = jnp.sum(xm, axis=0, keepdims=True) * inv_s
                diff = jnp.where(m, y - mean, 0.0)
                var = jnp.sum(diff * diff, axis=0, keepdims=True) * inv_s
                z = (y - mean) * lax.rsqrt(var + eps)
                z = jnp.where(z > 0, z, slope * z)
                out = jnp.where(m, z, out)
            y = out
        o_ref[...] = y


def _rowdot_bias_kernel(a_ref, w_ref, b_ref, o_ref):
    """out[m, 0] = sum_k a[m, k] * w[0, k] + b   (VPU multiply + lane reduce).

    Used for the final Cout=1 conv so the MXU is not padded to 128 output columns.
    """
    prod = a_ref[...] * w_ref[...]                  # (Mp, K); w broadcasts over rows
    o_ref[...] = jnp.sum(prod, axis=1, keepdims=True) + b_ref[...]


# ------------------------------ JAX wrappers --------------------------------


def _round_up(x, m):
    return (x + m - 1) // m * m


def _gemm_fused(a, w, b, *, epilogue, n_samples, spatial, slope=0.2, eps=1e-5):
    """a: (M, K) bf16, w: (K, N) bf16, b: (1, N) f32 -> (M, N) f32."""
    M, K = a.shape
    Kw, N = w.shape
    assert K == Kw
    # For the fused InstanceNorm epilogue the whole M range must live in one output
    # tile (the norm reduces over rows); at these layer sizes M <= 512, so that is
    # always cheap.  Otherwise tile M at 256.
    if epilogue == "in_lrelu" or M % 256 != 0:
        tm = M
    else:
        tm = 256
    tn = 256 if N % 256 == 0 else N                 # 256-aligned where possible (v6e MXU)
    tk = 512 if K % 512 == 0 else K
    gm, gn, gk = M // tm, N // tn, K // tk

    kernel = functools.partial(
        _gemm_fused_kernel, epilogue=epilogue, slope=slope, eps=eps,
        n_samples=n_samples, spatial=spatial)

    return pl.pallas_call(
        kernel,
        out_shape=jax.ShapeDtypeStruct((M, N), jnp.float32),
        grid=(gm, gn, gk),
        in_specs=[
            pl.BlockSpec((tm, tk), lambda i, j, k: (i, k)),
            pl.BlockSpec((tk, tn), lambda i, j, k: (k, j)),
            pl.BlockSpec((1, tn), lambda i, j, k: (0, j)),
        ],
        out_specs=pl.BlockSpec((tm, tn), lambda i, j, k: (i, j)),
        scratch_shapes=[pltpu.VMEM((tm, tn), jnp.float32)],
        compiler_params=pltpu.CompilerParams(
            dimension_semantics=("parallel", "parallel", "arbitrary"),
            vmem_limit_bytes=_VMEM_LIMIT),
    )(a, w, b)


def _im2col_nhwc(x_nhwc, k, stride, pad):
    """x: (N, H, W, C) -> (N, Ho, Wo, C*k*k); features ordered (C, kh, kw),
    matching PyTorch's Conv2d weight flatten (Cout, Cin*k*k)."""
    return lax.conv_general_dilated_patches(
        x_nhwc, (k, k), (stride, stride), ((pad, pad), (pad, pad)),
        dimension_numbers=("NHWC", "HWIO", "NHWC"))


def _conv_layer(x_nhwc, w_kn, b_1n, *, k, stride, pad, epilogue):
    """PyTorch-semantics Conv2d with fused bias / InstanceNorm / LeakyReLU epilogue."""
    N = x_nhwc.shape[0]
    patches = _im2col_nhwc(x_nhwc.astype(jnp.bfloat16), k, stride, pad)
    _, Ho, Wo, K = patches.shape
    M = N * Ho * Wo
    a = patches.reshape(M, K)
    Mp = _round_up(M, 16)                       # sublane-friendly row count for bf16
    if Mp != M:
        a = jnp.pad(a, ((0, Mp - M), (0, 0)))   # zero pad rows: masked in IN, sliced off
    out = _gemm_fused(a, w_kn, b_1n, epilogue=epilogue,
                      n_samples=N, spatial=Ho * Wo)
    return out[:M].reshape(N, Ho, Wo, -1)


def _final_conv1(x_nhwc, w_1k, b_11, *, k, stride, pad):
    """Final Conv2d with Cout=1 via the VPU row-dot kernel."""
    N = x_nhwc.shape[0]
    patches = _im2col_nhwc(x_nhwc.astype(jnp.float32), k, stride, pad)
    _, Ho, Wo, K = patches.shape
    M = N * Ho * Wo
    a = patches.reshape(M, K)
    Mp = _round_up(M, 8)
    if Mp != M:
        a = jnp.pad(a, ((0, Mp - M), (0, 0)))
    out = pl.pallas_call(
        _rowdot_bias_kernel,
        out_shape=jax.ShapeDtypeStruct((Mp, 1), jnp.float32),
        grid=(1,),
        in_specs=[
            pl.BlockSpec((Mp, K), lambda i: (0, 0)),
            pl.BlockSpec((1, K), lambda i: (0, 0)),
            pl.BlockSpec((1, 1), lambda i: (0, 0)),
        ],
        out_specs=pl.BlockSpec((Mp, 1), lambda i: (0, 0)),
        compiler_params=pltpu.CompilerParams(
            dimension_semantics=("arbitrary",),
            vmem_limit_bytes=_VMEM_LIMIT),
    )(a, w_1k, b_11)
    return out[:M].reshape(N, Ho, Wo, 1)


def discriminator_forward(x_nchw, prepped):
    """Forward pass of the PyTorch Discriminator (NCHW in, NCHW out)."""
    N, C, H, W = x_nchw.shape
    x = x_nchw.astype(jnp.float32)
    # F.interpolate(scale_factor=0.5, mode='area') == 2x2 average pool.
    x = x.reshape(N, C, H // 2, 2, W // 2, 2).mean(axis=(3, 5))
    x = x.transpose(0, 2, 3, 1)                                   # NHWC internally

    x = _conv_layer(x, prepped["w1"], prepped["b1"], k=4, stride=2, pad=1, epilogue="lrelu")
    x = _conv_layer(x, prepped["w2"], prepped["b2"], k=4, stride=2, pad=1, epilogue="in_lrelu")
    x = _conv_layer(x, prepped["w3"], prepped["b3"], k=4, stride=2, pad=1, epilogue="in_lrelu")
    x = _conv_layer(x, prepped["w4"], prepped["b4"], k=4, stride=1, pad=1, epilogue="in_lrelu")
    x = _final_conv1(x, prepped["w5"], prepped["b5"], k=4, stride=1, pad=1)
    return x.transpose(0, 3, 1, 2)                                # back to NCHW


def prepare_params(params):
    """Hoisted out of the forward pass: reshape/transpose/cast PyTorch-layout weights."""
    pp = {}
    for i in range(1, 5):
        w = params[f"w{i}"]                                        # (Cout, Cin, k, k)
        cout = w.shape[0]
        pp[f"w{i}"] = w.reshape(cout, -1).T.astype(jnp.bfloat16)   # (Cin*k*k, Cout)
        pp[f"b{i}"] = params[f"b{i}"].reshape(1, cout).astype(jnp.float32)
    pp["w5"] = params["w5"].reshape(1, -1).astype(jnp.float32)     # (1, Cin*k*k)
    pp["b5"] = params["b5"].reshape(1, 1).astype(jnp.float32)
    return pp


def init_params(key, input_nc):
    """Deterministic synthetic weights with the exact shapes of the PyTorch module."""
    shapes = [
        (64, input_nc, 4, 4),
        (128, 64, 4, 4),
        (256, 128, 4, 4),
        (512, 256, 4, 4),
        (1, 512, 4, 4),
    ]
    params = {}
    keys = jax.random.split(key, 2 * len(shapes))
    for i, shp in enumerate(shapes):
        fan_in = shp[1] * shp[2] * shp[3]
        bound = 1.0 / (fan_in ** 0.5)
        params[f"w{i + 1}"] = jax.random.uniform(
            keys[2 * i], shp, jnp.float32, minval=-bound, maxval=bound
        )
        params[f"b{i + 1}"] = jax.random.uniform(
            keys[2 * i + 1], (shp[0],), jnp.float32, minval=-bound, maxval=bound
        )
    return params


if __name__ == "__main__":
    input_nc = 4
    key = jax.random.PRNGKey(0)
    kx, kp = jax.random.split(key)
    # Spatial size 64 is the smallest that keeps all five conv stages non-degenerate:
    # 64 -> pool 32 -> 16 -> 8 -> 4 -> 3 -> 2; output is (2, 1, 2, 2).
    x = jax.random.normal(kx, (2, input_nc, 64, 64), dtype=jnp.float32)
    params = init_params(kp, input_nc)
    prepped = prepare_params(params)   # weight layout prep done once, outside forward

    fwd = jax.jit(discriminator_forward)
    out = jax.block_until_ready(fwd(x, prepped))
    assert out.shape == (2, 1, 2, 2), out.shape
    assert bool(jnp.all(jnp.isfinite(out)))
    print("KERNEL_OK")
</pallas_src>

<mosaic_0001>
module attributes {stable_mosaic.version = 11 : i64} {
  func.func @_gemm_fused_kernel(%arg0: i32, %arg1: i32, %arg2: i32, %arg3: memref<256x64xbf16, #tpu.memory_space<vmem>>, %arg4: memref<64x64xbf16, #tpu.memory_space<vmem>>, %arg5: memref<1x64xf32, #tpu.memory_space<vmem>>, %arg6: memref<256x64xf32, #tpu.memory_space<vmem>>, %arg7: memref<256x64xf32, #tpu.memory_space<vmem>>) attributes {dimension_semantics = [#tpu.dimension_semantics<parallel>, #tpu.dimension_semantics<parallel>, #tpu.dimension_semantics<arbitrary>], iteration_bounds = array<i64: 2, 1, 1>, scalar_prefetch = 0 : i64, scratch_operands = 1 : i64, tpu.core_type = #tpu.core_type<tc>, window_params = [{transform_indices = @transform_0, window_bounds = array<i64: 256, 64>}, {transform_indices = @transform_1, window_bounds = array<i64: 64, 64>}, {transform_indices = @transform_2, window_bounds = array<i64: 1, 64>}, {transform_indices = @transform_3, window_bounds = array<i64: 256, 64>}]} {
    %c0_i32 = arith.constant 0 : i32
    %0 = arith.cmpi eq, %arg2, %c0_i32 : i32
    %1 = arith.extui %0 : i1 to i32
    %c0_i32_0 = arith.constant 0 : i32
    %2 = arith.cmpi ne, %1, %c0_i32_0 : i32
    scf.if %2 {
      %cst_10 = arith.constant 0.000000e+00 : f32
      %12 = vector.broadcast %cst_10 : f32 to vector<256x64xf32>
      %c0_11 = arith.constant 0 : index
      %c0_12 = arith.constant 0 : index
      %13 = vector.load %arg7[%c0_11, %c0_12] : memref<256x64xf32, #tpu.memory_space<vmem>>, vector<256x64xf32>
      tpu.vector_store %arg7[%c0_11, %c0_12], %12 {strides = array<i32>} : memref<256x64xf32, #tpu.memory_space<vmem>>, vector<256x64xf32>,
    } else {
    }
    %c0 = arith.constant 0 : index
    %c0_1 = arith.constant 0 : index
    %3 = vector.load %arg7[%c0, %c0_1] : memref<256x64xf32, #tpu.memory_space<vmem>>, vector<256x64xf32>
    %c0_2 = arith.constant 0 : index
    %c0_3 = arith.constant 0 : index
    %4 = vector.load %arg3[%c0_2, %c0_3] : memref<256x64xbf16, #tpu.memory_space<vmem>>, vector<256x64xbf16>
    %c0_4 = arith.constant 0 : index
    %c0_5 = arith.constant 0 : index
    %5 = vector.load %arg4[%c0_4, %c0_5] : memref<64x64xbf16, #tpu.memory_space<vmem>>, vector<64x64xbf16>
    %cst = arith.constant dense<0.000000e+00> : vector<256x64xf32>
    %6 = tpu.matmul %4, %5, %cst {dimension_numbers = #tpu.dot_dimension_numbers<[1], [0], [0], [1], [0, 0, 1, 1], [], []>} : vector<256x64xbf16>, vector<64x64xbf16>, vector<256x64xf32> -> vector<256x64xf32>
    %7 = arith.addf %3, %6 : vector<256x64xf32>
    %c0_6 = arith.constant 0 : index
    %c0_7 = arith.constant 0 : index
    %8 = vector.load %arg7[%c0_6, %c0_7] : memref<256x64xf32, #tpu.memory_space<vmem>>, vector<256x64xf32>
    tpu.vector_store %arg7[%c0_6, %c0_7], %7 {strides = array<i32>} : memref<256x64xf32, #tpu.memory_space<vmem>>, vector<256x64xf32>,
    %c0_i32_8 = arith.constant 0 : i32
    %9 = arith.cmpi eq, %arg2, %c0_i32_8 : i32
    %10 = arith.extui %9 : i1 to i32
    %c0_i32_9 = arith.constant 0 : i32
    %11 = arith.cmpi ne, %10, %c0_i32_9 : i32
    scf.if %11 {
      %c0_10 = arith.constant 0 : index
      %c0_11 = arith.constant 0 : index
      %12 = vector.load %arg7[%c0_10, %c0_11] : memref<256x64xf32, #tpu.memory_space<vmem>>, vector<256x64xf32>
      %c0_12 = arith.constant 0 : index
      %c0_13 = arith.constant 0 : index
      %13 = vector.load %arg5[%c0_12, %c0_13] : memref<1x64xf32, #tpu.memory_space<vmem>>, vector<1x64xf32>
      %14 = vector.broadcast %13 : vector<1x64xf32> to vector<256x64xf32>
      %15 = arith.addf %12, %14 : vector<256x64xf32>
      %cst_14 = arith.constant 0.000000e+00 : f32
      %16 = vector.broadcast %cst_14 : f32 to vector<256x64xf32>
      %17 = arith.cmpf ogt, %15, %16 : vector<256x64xf32>
      %cst_15 = arith.constant 2.000000e-01 : f32
      %18 = vector.broadcast %cst_15 : f32 to vector<256x64xf32>
      %19 = arith.mulf %18, %15 : vector<256x64xf32>
      %20 = arith.select %17, %15, %19 : vector<256x64xi1>, vector<256x64xf32>
      %c0_16 = arith.constant 0 : index
      %c0_17 = arith.constant 0 : index
      %21 = vector.load %arg6[%c0_16, %c0_17] : memref<256x64xf32, #tpu.memory_space<vmem>>, vector<256x64xf32>
      tpu.vector_store %arg6[%c0_16, %c0_17], %20 {strides = array<i32>} : memref<256x64xf32, #tpu.memory_space<vmem>>, vector<256x64xf32>,
    } else {
    }
    return
  }
  func.func @transform_0(%arg0: i32, %arg1: i32, %arg2: i32) -> (i32, i32) {
    %c0_i32 = arith.constant 0 : i32
    return %arg0, %arg2 : i32, i32
  }
  func.func @transform_1(%arg0: i32, %arg1: i32, %arg2: i32) -> (i32, i32) {
    %c0_i32 = arith.constant 0 : i32
    return %arg2, %arg1 : i32, i32
  }
  func.func @transform_2(%arg0: i32, %arg1: i32, %arg2: i32) -> (i32, i32) {
    %c0_i32 = arith.constant 0 : i32
    %c0_i32_0 = arith.constant 0 : i32
    return %c0_i32, %arg1 : i32, i32
  }
  func.func @transform_3(%arg0: i32, %arg1: i32, %arg2: i32) -> (i32, i32) {
    %c0_i32 = arith.constant 0 : i32
    return %arg0, %arg1 : i32, i32
  }
}

module attributes {stable_mosaic.version = 11 : i64} {
  func.func @_gemm_fused_kernel(%arg0: i32, %arg1: i32, %arg2: i32, %arg3: memref<128x512xbf16, #tpu.memory_space<vmem>>, %arg4: memref<512x128xbf16, #tpu.memory_space<vmem>>, %arg5: memref<1x128xf32, #tpu.memory_space<vmem>>, %arg6: memref<128x128xf32, #tpu.memory_space<vmem>>, %arg7: memref<128x128xf32, #tpu.memory_space<vmem>>) attributes {dimension_semantics = [#tpu.dimension_semantics<parallel>, #tpu.dimension_semantics<parallel>, #tpu.dimension_semantics<arbitrary>], iteration_bounds = array<i64: 1, 1, 2>, scalar_prefetch = 0 : i64, scratch_operands = 1 : i64, tpu.core_type = #tpu.core_type<tc>, window_params = [{transform_indices = @transform_0, window_bounds = array<i64: 128, 512>}, {transform_indices = @transform_1, window_bounds = array<i64: 512, 128>}, {transform_indices = @transform_2, window_bounds = array<i64: 1, 128>}, {transform_indices = @transform_3, window_bounds = array<i64: 128, 128>}]} {
    %c0_i32 = arith.constant 0 : i32
    %0 = arith.cmpi eq, %arg2, %c0_i32 : i32
    %1 = arith.extui %0 : i1 to i32
    %c0_i32_0 = arith.constant 0 : i32
    %2 = arith.cmpi ne, %1, %c0_i32_0 : i32
    scf.if %2 {
      %cst_9 = arith.constant 0.000000e+00 : f32
      %12 = vector.broadcast %cst_9 : f32 to vector<128x128xf32>
      %c0_10 = arith.constant 0 : index
      %c0_11 = arith.constant 0 : index
      %13 = vector.load %arg7[%c0_10, %c0_11] : memref<128x128xf32, #tpu.memory_space<vmem>>, vector<128x128xf32>
      tpu.vector_store %arg7[%c0_10, %c0_11], %12 {strides = array<i32>} : memref<128x128xf32, #tpu.memory_space<vmem>>, vector<128x128xf32>,
    } else {
    }
    %c0 = arith.constant 0 : index
    %c0_1 = arith.constant 0 : index
    %3 = vector.load %arg7[%c0, %c0_1] : memref<128x128xf32, #tpu.memory_space<vmem>>, vector<128x128xf32>
    %c0_2 = arith.constant 0 : index
    %c0_3 = arith.constant 0 : index
    %4 = vector.load %arg3[%c0_2, %c0_3] : memref<128x512xbf16, #tpu.memory_space<vmem>>, vector<128x512xbf16>
    %c0_4 = arith.constant 0 : index
    %c0_5 = arith.constant 0 : index
    %5 = vector.load %arg4[%c0_4, %c0_5] : memref<512x128xbf16, #tpu.memory_space<vmem>>, vector<512x128xbf16>
    %cst = arith.constant dense<0.000000e+00> : vector<128x128xf32>
    %6 = tpu.matmul %4, %5, %cst {dimension_numbers = #tpu.dot_dimension_numbers<[1], [0], [0], [1], [0, 0, 1, 1], [], []>} : vector<128x512xbf16>, vector<512x128xbf16>, vector<128x128xf32> -> vector<128x128xf32>
    %7 = arith.addf %3, %6 : vector<128x128xf32>
    %c0_6 = arith.constant 0 : index
    %c0_7 = arith.constant 0 : index
    %8 = vector.load %arg7[%c0_6, %c0_7] : memref<128x128xf32, #tpu.memory_space<vmem>>, vector<128x128xf32>
    tpu.vector_store %arg7[%c0_6, %c0_7], %7 {strides = array<i32>} : memref<128x128xf32, #tpu.memory_space<vmem>>, vector<128x128xf32>,
    %c1_i32 = arith.constant 1 : i32
    %9 = arith.cmpi eq, %arg2, %c1_i32 : i32
    %10 = arith.extui %9 : i1 to i32
    %c0_i32_8 = arith.constant 0 : i32
    %11 = arith.cmpi ne, %10, %c0_i32_8 : i32
    scf.if %11 {
      %c0_9 = arith.constant 0 : index
      %c0_10 = arith.constant 0 : index
      %12 = vector.load %arg7[%c0_9, %c0_10] : memref<128x128xf32, #tpu.memory_space<vmem>>, vector<128x128xf32>
      %c0_11 = arith.constant 0 : index
      %c0_12 = arith.constant 0 : index
      %13 = vector.load %arg5[%c0_11, %c0_12] : memref<1x128xf32, #tpu.memory_space<vmem>>, vector<1x128xf32>
      %14 = vector.broadcast %13 : vector<1x128xf32> to vector<128x128xf32>
      %15 = arith.addf %12, %14 : vector<128x128xf32>
      %16 = tpu.iota {dimensions = array<i32: 0>} : vector<128x128xi32>
      %c0_i32_13 = arith.constant 0 : i32
      %17 = vector.broadcast %c0_i32_13 : i32 to vector<128x128xi32>
      %18 = arith.cmpi sge, %16, %17 : vector<128x128xi32>
      %c64_i32 = arith.constant 64 : i32
      %19 = vector.broadcast %c64_i32 : i32 to vector<128x128xi32>
      %20 = arith.cmpi slt, %16, %19 : vector<128x128xi32>
      %21 = arith.andi %18, %20 : vector<128x128xi1>
      %cst_14 = arith.constant 0.000000e+00 : f32
      %22 = vector.broadcast %cst_14 : f32 to vector<128x128xf32>
      %23 = arith.select %21, %15, %22 : vector<128x128xi1>, vector<128x128xf32>
      %cst_15 = arith.constant dense<0.000000e+00> : vector<128xf32>
      %24 = vector.multi_reduction <add>, %23, %cst_15 [0] : vector<128x128xf32> to vector<128xf32>
      %25 = vector.shape_cast %24 : vector<128xf32> to vector<1x128xf32>
      %cst_16 = arith.constant 1.562500e-02 : f32
      %26 = vector.broadcast %cst_16 : f32 to vector<1x128xf32>
      %27 = arith.mulf %25, %26 : vector<1x128xf32>
      %28 = vector.broadcast %27 : vector<1x128xf32> to vector<128x128xf32>
      %29 = arith.subf %15, %28 : vector<128x128xf32>
      %cst_17 = arith.constant 0.000000e+00 : f32
      %30 = vector.broadcast %cst_17 : f32 to vector<128x128xf32>
      %31 = arith.select %21, %29, %30 : vector<128x128xi1>, vector<128x128xf32>
      %32 = arith.mulf %31, %31 : vector<128x128xf32>
      %cst_18 = arith.constant dense<0.000000e+00> : vector<128xf32>
      %33 = vector.multi_reduction <add>, %32, %cst_18 [0] : vector<128x128xf32> to vector<128xf32>
      %34 = vector.shape_cast %33 : vector<128xf32> to vector<1x128xf32>
      %cst_19 = arith.constant 1.562500e-02 : f32
      %35 = vector.broadcast %cst_19 : f32 to vector<1x128xf32>
      %36 = arith.mulf %34, %35 : vector<1x128xf32>
      %37 = vector.broadcast %27 : vector<1x128xf32> to vector<128x128xf32>
      %38 = arith.subf %15, %37 : vector<128x128xf32>
      %cst_20 = arith.constant 9.99999974E-6 : f32
      %39 = vector.broadcast %cst_20 : f32 to vector<1x128xf32>
      %40 = arith.addf %36, %39 : vector<1x128xf32>
      %41 = math.rsqrt %40 : vector<1x128xf32>
      %42 = vector.broadcast %41 : vector<1x128xf32> to vector<128x128xf32>
      %43 = arith.mulf %38, %42 : vector<128x128xf32>
      %cst_21 = arith.constant 0.000000e+00 : f32
      %44 = vector.broadcast %cst_21 : f32 to vector<128x128xf32>
      %45 = arith.cmpf ogt, %43, %44 : vector<128x128xf32>
      %cst_22 = arith.constant 2.000000e-01 : f32
      %46 = vector.broadcast %cst_22 : f32 to vector<128x128xf32>
      %47 = arith.mulf %46, %43 : vector<128x128xf32>
      %48 = arith.select %45, %43, %47 : vector<128x128xi1>, vector<128x128xf32>
      %49 = arith.select %21, %48, %15 : vector<128x128xi1>, vector<128x128xf32>
      %c64_i32_23 = arith.constant 64 : i32
      %50 = vector.broadcast %c64_i32_23 : i32 to vector<128x128xi32>
      %51 = arith.cmpi sge, %16, %50 : vector<128x128xi32>
      %c128_i32 = arith.constant 128 : i32
      %52 = vector.broadcast %c128_i32 : i32 to vector<128x128xi32>
      %53 = arith.cmpi slt, %16, %52 : vector<128x128xi32>
      %54 = arith.andi %51, %53 : vector<128x128xi1>
      %cst_24 = arith.constant 0.000000e+00 : f32
      %55 = vector.broadcast %cst_24 : f32 to vector<128x128xf32>
      %56 = arith.select %54, %15, %55 : vector<128x128xi1>, vector<128x128xf32>
      %cst_25 = arith.constant dense<0.000000e+00> : vector<128xf32>
      %57 = vector.multi_reduction <add>, %56, %cst_25 [0] : vector<128x128xf32> to vector<128xf32>
      %58 = vector.shape_cast %57 : vector<128xf32> to vector<1x128xf32>
      %cst_26 = arith.constant 1.562500e-02 : f32
      %59 = vector.broadcast %cst_26 : f32 to vector<1x128xf32>
      %60 = arith.mulf %58, %59 : vector<1x128xf32>
      %61 = vector.broadcast %60 : vector<1x128xf32> to vector<128x128xf32>
      %62 = arith.subf %15, %61 : vector<128x128xf32>
      %cst_27 = arith.constant 0.000000e+00 : f32
      %63 = vector.broadcast %cst_27 : f32 to vector<128x128xf32>
      %64 = arith.select %54, %62, %63 : vector<128x128xi1>, vector<128x128xf32>
      %65 = arith.mulf %64, %64 : vector<128x128xf32>
      %cst_28 = arith.constant dense<0.000000e+00> : vector<128xf32>
      %66 = vector.multi_reduction <add>, %65, %cst_28 [0] : vector<128x128xf32> to vector<128xf32>
      %67 = vector.shape_cast %66 : vector<128xf32> to vector<1x128xf32>
      %cst_29 = arith.constant 1.562500e-02 : f32
      %68 = vector.broadcast %cst_29 : f32 to vector<1x128xf32>
      %69 = arith.mulf %67, %68 : vector<1x128xf32>
      %70 = vector.broadcast %60 : vector<1x128xf32> to vector<128x128xf32>
      %71 = arith.subf %15, %70 : vector<128x128xf32>
      %cst_30 = arith.constant 9.99999974E-6 : f32
      %72 = vector.broadcast %cst_30 : f32 to vector<1x128xf32>
      %73 = arith.addf %69, %72 : vector<1x128xf32>
      %74 = math.rsqrt %73 : vector<1x128xf32>
      %75 = vector.broadcast %74 : vector<1x128xf32> to vector<128x128xf32>
      %76 = arith.mulf %71, %75 : vector<128x128xf32>
      %cst_31 = arith.constant 0.000000e+00 : f32
      %77 = vector.broadcast %cst_31 : f32 to vector<128x128xf32>
      %78 = arith.cmpf ogt, %76, %77 : vector<128x128xf32>
      %cst_32 = arith.constant 2.000000e-01 : f32
      %79 = vector.broadcast %cst_32 : f32 to vector<128x128xf32>
      %80 = arith.mulf %79, %76 : vector<128x128xf32>
      %81 = arith.select %78, %76, %80 : vector<128x128xi1>, vector<128x128xf32>
      %82 = arith.select %54, %81, %49 : vector<128x128xi1>, vector<128x128xf32>
      %c0_33 = arith.constant 0 : index
      %c0_34 = arith.constant 0 : index
      %83 = vector.load %arg6[%c0_33, %c0_34] : memref<128x128xf32, #tpu.memory_space<vmem>>, vector<128x128xf32>
      tpu.vector_store %arg6[%c0_33, %c0_34], %82 {strides = array<i32>} : memref<128x128xf32, #tpu.memory_space<vmem>>, vector<128x128xf32>,
    } else {
    }
    return
  }
  func.func @transform_0(%arg0: i32, %arg1: i32, %arg2: i32) -> (i32, i32) {
    %c0_i32 = arith.constant 0 : i32
    return %arg0, %arg2 : i32, i32
  }
  func.func @transform_1(%arg0: i32, %arg1: i32, %arg2: i32) -> (i32, i32) {
    %c0_i32 = arith.constant 0 : i32
    return %arg2, %arg1 : i32, i32
  }
  func.func @transform_2(%arg0: i32, %arg1: i32, %arg2: i32) -> (i32, i32) {
    %c0_i32 = arith.constant 0 : i32
    %c0_i32_0 = arith.constant 0 : i32
    return %c0_i32, %arg1 : i32, i32
  }
  func.func @transform_3(%arg0: i32, %arg1: i32, %arg2: i32) -> (i32, i32) {
    %c0_i32 = arith.constant 0 : i32
    return %arg0, %arg1 : i32, i32
  }
}

module attributes {stable_mosaic.version = 11 : i64} {
  func.func @_gemm_fused_kernel(%arg0: i32, %arg1: i32, %arg2: i32, %arg3: memref<32x512xbf16, #tpu.memory_space<vmem>>, %arg4: memref<512x256xbf16, #tpu.memory_space<vmem>>, %arg5: memref<1x256xf32, #tpu.memory_space<vmem>>, %arg6: memref<32x256xf32, #tpu.memory_space<vmem>>, %arg7: memref<32x256xf32, #tpu.memory_space<vmem>>) attributes {dimension_semantics = [#tpu.dimension_semantics<parallel>, #tpu.dimension_semantics<parallel>, #tpu.dimension_semantics<arbitrary>], iteration_bounds = array<i64: 1, 1, 4>, scalar_prefetch = 0 : i64, scratch_operands = 1 : i64, tpu.core_type = #tpu.core_type<tc>, window_params = [{transform_indices = @transform_0, window_bounds = array<i64: 32, 512>}, {transform_indices = @transform_1, window_bounds = array<i64: 512, 256>}, {transform_indices = @transform_2, window_bounds = array<i64: 1, 256>}, {transform_indices = @transform_3, window_bounds = array<i64: 32, 256>}]} {
    %c0_i32 = arith.constant 0 : i32
    %0 = arith.cmpi eq, %arg2, %c0_i32 : i32
    %1 = arith.extui %0 : i1 to i32
    %c0_i32_0 = arith.constant 0 : i32
    %2 = arith.cmpi ne, %1, %c0_i32_0 : i32
    scf.if %2 {
      %cst_9 = arith.constant 0.000000e+00 : f32
      %12 = vector.broadcast %cst_9 : f32 to vector<32x256xf32>
      %c0_10 = arith.constant 0 : index
      %c0_11 = arith.constant 0 : index
      %13 = vector.load %arg7[%c0_10, %c0_11] : memref<32x256xf32, #tpu.memory_space<vmem>>, vector<32x256xf32>
      tpu.vector_store %arg7[%c0_10, %c0_11], %12 {strides = array<i32>} : memref<32x256xf32, #tpu.memory_space<vmem>>, vector<32x256xf32>,
    } else {
    }
    %c0 = arith.constant 0 : index
    %c0_1 = arith.constant 0 : index
    %3 = vector.load %arg7[%c0, %c0_1] : memref<32x256xf32, #tpu.memory_space<vmem>>, vector<32x256xf32>
    %c0_2 = arith.constant 0 : index
    %c0_3 = arith.constant 0 : index
    %4 = vector.load %arg3[%c0_2, %c0_3] : memref<32x512xbf16, #tpu.memory_space<vmem>>, vector<32x512xbf16>
    %c0_4 = arith.constant 0 : index
    %c0_5 = arith.constant 0 : index
    %5 = vector.load %arg4[%c0_4, %c0_5] : memref<512x256xbf16, #tpu.memory_space<vmem>>, vector<512x256xbf16>
    %cst = arith.constant dense<0.000000e+00> : vector<32x256xf32>
    %6 = tpu.matmul %4, %5, %cst {dimension_numbers = #tpu.dot_dimension_numbers<[1], [0], [0], [1], [0, 0, 1, 1], [], []>} : vector<32x512xbf16>, vector<512x256xbf16>, vector<32x256xf32> -> vector<32x256xf32>
    %7 = arith.addf %3, %6 : vector<32x256xf32>
    %c0_6 = arith.constant 0 : index
    %c0_7 = arith.constant 0 : index
    %8 = vector.load %arg7[%c0_6, %c0_7] : memref<32x256xf32, #tpu.memory_space<vmem>>, vector<32x256xf32>
    tpu.vector_store %arg7[%c0_6, %c0_7], %7 {strides = array<i32>} : memref<32x256xf32, #tpu.memory_space<vmem>>, vector<32x256xf32>,
    %c3_i32 = arith.constant 3 : i32
    %9 = arith.cmpi eq, %arg2, %c3_i32 : i32
    %10 = arith.extui %9 : i1 to i32
    %c0_i32_8 = arith.constant 0 : i32
    %11 = arith.cmpi ne, %10, %c0_i32_8 : i32
    scf.if %11 {
      %c0_9 = arith.constant 0 : index
      %c0_10 = arith.constant 0 : index
      %12 = vector.load %arg7[%c0_9, %c0_10] : memref<32x256xf32, #tpu.memory_space<vmem>>, vector<32x256xf32>
      %c0_11 = arith.constant 0 : index
      %c0_12 = arith.constant 0 : index
      %13 = vector.load %arg5[%c0_11, %c0_12] : memref<1x256xf32, #tpu.memory_space<vmem>>, vector<1x256xf32>
      %14 = vector.broadcast %13 : vector<1x256xf32> to vector<32x256xf32>
      %15 = arith.addf %12, %14 : vector<32x256xf32>
      %16 = tpu.iota {dimensions = array<i32: 0>} : vector<32x256xi32>
      %c0_i32_13 = arith.constant 0 : i32
      %17 = vector.broadcast %c0_i32_13 : i32 to vector<32x256xi32>
      %18 = arith.cmpi sge, %16, %17 : vector<32x256xi32>
      %c16_i32 = arith.constant 16 : i32
      %19 = vector.broadcast %c16_i32 : i32 to vector<32x256xi32>
      %20 = arith.cmpi slt, %16, %19 : vector<32x256xi32>
      %21 = arith.andi %18, %20 : vector<32x256xi1>
      %cst_14 = arith.constant 0.000000e+00 : f32
      %22 = vector.broadcast %cst_14 : f32 to vector<32x256xf32>
      %23 = arith.select %21, %15, %22 : vector<32x256xi1>, vector<32x256xf32>
      %cst_15 = arith.constant dense<0.000000e+00> : vector<256xf32>
      %24 = vector.multi_reduction <add>, %23, %cst_15 [0] : vector<32x256xf32> to vector<256xf32>
      %25 = vector.shape_cast %24 : vector<256xf32> to vector<1x256xf32>
      %cst_16 = arith.constant 6.250000e-02 : f32
      %26 = vector.broadcast %cst_16 : f32 to vector<1x256xf32>
      %27 = arith.mulf %25, %26 : vector<1x256xf32>
      %28 = vector.broadcast %27 : vector<1x256xf32> to vector<32x256xf32>
      %29 = arith.subf %15, %28 : vector<32x256xf32>
      %cst_17 = arith.constant 0.000000e+00 : f32
      %30 = vector.broadcast %cst_17 : f32 to vector<32x256xf32>
      %31 = arith.select %21, %29, %30 : vector<32x256xi1>, vector<32x256xf32>
      %32 = arith.mulf %31, %31 : vector<32x256xf32>
      %cst_18 = arith.constant dense<0.000000e+00> : vector<256xf32>
      %33 = vector.multi_reduction <add>, %32, %cst_18 [0] : vector<32x256xf32> to vector<256xf32>
      %34 = vector.shape_cast %33 : vector<256xf32> to vector<1x256xf32>
      %cst_19 = arith.constant 6.250000e-02 : f32
      %35 = vector.broadcast %cst_19 : f32 to vector<1x256xf32>
      %36 = arith.mulf %34, %35 : vector<1x256xf32>
      %37 = vector.broadcast %27 : vector<1x256xf32> to vector<32x256xf32>
      %38 = arith.subf %15, %37 : vector<32x256xf32>
      %cst_20 = arith.constant 9.99999974E-6 : f32
      %39 = vector.broadcast %cst_20 : f32 to vector<1x256xf32>
      %40 = arith.addf %36, %39 : vector<1x256xf32>
      %41 = math.rsqrt %40 : vector<1x256xf32>
      %42 = vector.broadcast %41 : vector<1x256xf32> to vector<32x256xf32>
      %43 = arith.mulf %38, %42 : vector<32x256xf32>
      %cst_21 = arith.constant 0.000000e+00 : f32
      %44 = vector.broadcast %cst_21 : f32 to vector<32x256xf32>
      %45 = arith.cmpf ogt, %43, %44 : vector<32x256xf32>
      %cst_22 = arith.constant 2.000000e-01 : f32
      %46 = vector.broadcast %cst_22 : f32 to vector<32x256xf32>
      %47 = arith.mulf %46, %43 : vector<32x256xf32>
      %48 = arith.select %45, %43, %47 : vector<32x256xi1>, vector<32x256xf32>
      %49 = arith.select %21, %48, %15 : vector<32x256xi1>, vector<32x256xf32>
      %c16_i32_23 = arith.constant 16 : i32
      %50 = vector.broadcast %c16_i32_23 : i32 to vector<32x256xi32>
      %51 = arith.cmpi sge, %16, %50 : vector<32x256xi32>
      %c32_i32 = arith.constant 32 : i32
      %52 = vector.broadcast %c32_i32 : i32 to vector<32x256xi32>
      %53 = arith.cmpi slt, %16, %52 : vector<32x256xi32>
      %54 = arith.andi %51, %53 : vector<32x256xi1>
      %cst_24 = arith.constant 0.000000e+00 : f32
      %55 = vector.broadcast %cst_24 : f32 to vector<32x256xf32>
      %56 = arith.select %54, %15, %55 : vector<32x256xi1>, vector<32x256xf32>
      %cst_25 = arith.constant dense<0.000000e+00> : vector<256xf32>
      %57 = vector.multi_reduction <add>, %56, %cst_25 [0] : vector<32x256xf32> to vector<256xf32>
      %58 = vector.shape_cast %57 : vector<256xf32> to vector<1x256xf32>
      %cst_26 = arith.constant 6.250000e-02 : f32
      %59 = vector.broadcast %cst_26 : f32 to vector<1x256xf32>
      %60 = arith.mulf %58, %59 : vector<1x256xf32>
      %61 = vector.broadcast %60 : vector<1x256xf32> to vector<32x256xf32>
      %62 = arith.subf %15, %61 : vector<32x256xf32>
      %cst_27 = arith.constant 0.000000e+00 : f32
      %63 = vector.broadcast %cst_27 : f32 to vector<32x256xf32>
      %64 = arith.select %54, %62, %63 : vector<32x256xi1>, vector<32x256xf32>
      %65 = arith.mulf %64, %64 : vector<32x256xf32>
      %cst_28 = arith.constant dense<0.000000e+00> : vector<256xf32>
      %66 = vector.multi_reduction <add>, %65, %cst_28 [0] : vector<32x256xf32> to vector<256xf32>
      %67 = vector.shape_cast %66 : vector<256xf32> to vector<1x256xf32>
      %cst_29 = arith.constant 6.250000e-02 : f32
      %68 = vector.broadcast %cst_29 : f32 to vector<1x256xf32>
      %69 = arith.mulf %67, %68 : vector<1x256xf32>
      %70 = vector.broadcast %60 : vector<1x256xf32> to vector<32x256xf32>
      %71 = arith.subf %15, %70 : vector<32x256xf32>
      %cst_30 = arith.constant 9.99999974E-6 : f32
      %72 = vector.broadcast %cst_30 : f32 to vector<1x256xf32>
      %73 = arith.addf %69, %72 : vector<1x256xf32>
      %74 = math.rsqrt %73 : vector<1x256xf32>
      %75 = vector.broadcast %74 : vector<1x256xf32> to vector<32x256xf32>
      %76 = arith.mulf %71, %75 : vector<32x256xf32>
      %cst_31 = arith.constant 0.000000e+00 : f32
      %77 = vector.broadcast %cst_31 : f32 to vector<32x256xf32>
      %78 = arith.cmpf ogt, %76, %77 : vector<32x256xf32>
      %cst_32 = arith.constant 2.000000e-01 : f32
      %79 = vector.broadcast %cst_32 : f32 to vector<32x256xf32>
      %80 = arith.mulf %79, %76 : vector<32x256xf32>
      %81 = arith.select %78, %76, %80 : vector<32x256xi1>, vector<32x256xf32>
      %82 = arith.select %54, %81, %49 : vector<32x256xi1>, vector<32x256xf32>
      %c0_33 = arith.constant 0 : index
      %c0_34 = arith.constant 0 : index
      %83 = vector.load %arg6[%c0_33, %c0_34] : memref<32x256xf32, #tpu.memory_space<vmem>>, vector<32x256xf32>
      tpu.vector_store %arg6[%c0_33, %c0_34], %82 {strides = array<i32>} : memref<32x256xf32, #tpu.memory_space<vmem>>, vector<32x256xf32>,
    } else {
    }
    return
  }
  func.func @transform_0(%arg0: i32, %arg1: i32, %arg2: i32) -> (i32, i32) {
    %c0_i32 = arith.constant 0 : i32
    return %arg0, %arg2 : i32, i32
  }
  func.func @transform_1(%arg0: i32, %arg1: i32, %arg2: i32) -> (i32, i32) {
    %c0_i32 = arith.constant 0 : i32
    return %arg2, %arg1 : i32, i32
  }
  func.func @transform_2(%arg0: i32, %arg1: i32, %arg2: i32) -> (i32, i32) {
    %c0_i32 = arith.constant 0 : i32
    %c0_i32_0 = arith.constant 0 : i32
    return %c0_i32, %arg1 : i32, i32
  }
  func.func @transform_3(%arg0: i32, %arg1: i32, %arg2: i32) -> (i32, i32) {
    %c0_i32 = arith.constant 0 : i32
    return %arg0, %arg1 : i32, i32
  }
}

module attributes {stable_mosaic.version = 11 : i64} {
  func.func @_gemm_fused_kernel(%arg0: i32, %arg1: i32, %arg2: i32, %arg3: memref<32x512xbf16, #tpu.memory_space<vmem>>, %arg4: memref<512x256xbf16, #tpu.memory_space<vmem>>, %arg5: memref<1x256xf32, #tpu.memory_space<vmem>>, %arg6: memref<32x256xf32, #tpu.memory_space<vmem>>, %arg7: memref<32x256xf32, #tpu.memory_space<vmem>>) attributes {dimension_semantics = [#tpu.dimension_semantics<parallel>, #tpu.dimension_semantics<parallel>, #tpu.dimension_semantics<arbitrary>], iteration_bounds = array<i64: 1, 2, 8>, scalar_prefetch = 0 : i64, scratch_operands = 1 : i64, tpu.core_type = #tpu.core_type<tc>, window_params = [{transform_indices = @transform_0, window_bounds = array<i64: 32, 512>}, {transform_indices = @transform_1, window_bounds = array<i64: 512, 256>}, {transform_indices = @transform_2, window_bounds = array<i64: 1, 256>}, {transform_indices = @transform_3, window_bounds = array<i64: 32, 256>}]} {
    %c0_i32 = arith.constant 0 : i32
    %0 = arith.cmpi eq, %arg2, %c0_i32 : i32
    %1 = arith.extui %0 : i1 to i32
    %c0_i32_0 = arith.constant 0 : i32
    %2 = arith.cmpi ne, %1, %c0_i32_0 : i32
    scf.if %2 {
      %cst_9 = arith.constant 0.000000e+00 : f32
      %12 = vector.broadcast %cst_9 : f32 to vector<32x256xf32>
      %c0_10 = arith.constant 0 : index
      %c0_11 = arith.constant 0 : index
      %13 = vector.load %arg7[%c0_10, %c0_11] : memref<32x256xf32, #tpu.memory_space<vmem>>, vector<32x256xf32>
      tpu.vector_store %arg7[%c0_10, %c0_11], %12 {strides = array<i32>} : memref<32x256xf32, #tpu.memory_space<vmem>>, vector<32x256xf32>,
    } else {
    }
    %c0 = arith.constant 0 : index
    %c0_1 = arith.constant 0 : index
    %3 = vector.load %arg7[%c0, %c0_1] : memref<32x256xf32, #tpu.memory_space<vmem>>, vector<32x256xf32>
    %c0_2 = arith.constant 0 : index
    %c0_3 = arith.constant 0 : index
    %4 = vector.load %arg3[%c0_2, %c0_3] : memref<32x512xbf16, #tpu.memory_space<vmem>>, vector<32x512xbf16>
    %c0_4 = arith.constant 0 : index
    %c0_5 = arith.constant 0 : index
    %5 = vector.load %arg4[%c0_4, %c0_5] : memref<512x256xbf16, #tpu.memory_space<vmem>>, vector<512x256xbf16>
    %cst = arith.constant dense<0.000000e+00> : vector<32x256xf32>
    %6 = tpu.matmul %4, %5, %cst {dimension_numbers = #tpu.dot_dimension_numbers<[1], [0], [0], [1], [0, 0, 1, 1], [], []>} : vector<32x512xbf16>, vector<512x256xbf16>, vector<32x256xf32> -> vector<32x256xf32>
    %7 = arith.addf %3, %6 : vector<32x256xf32>
    %c0_6 = arith.constant 0 : index
    %c0_7 = arith.constant 0 : index
    %8 = vector.load %arg7[%c0_6, %c0_7] : memref<32x256xf32, #tpu.memory_space<vmem>>, vector<32x256xf32>
    tpu.vector_store %arg7[%c0_6, %c0_7], %7 {strides = array<i32>} : memref<32x256xf32, #tpu.memory_space<vmem>>, vector<32x256xf32>,
    %c7_i32 = arith.constant 7 : i32
    %9 = arith.cmpi eq, %arg2, %c7_i32 : i32
    %10 = arith.extui %9 : i1 to i32
    %c0_i32_8 = arith.constant 0 : i32
    %11 = arith.cmpi ne, %10, %c0_i32_8 : i32
    scf.if %11 {
      %c0_9 = arith.constant 0 : index
      %c0_10 = arith.constant 0 : index
      %12 = vector.load %arg7[%c0_9, %c0_10] : memref<32x256xf32, #tpu.memory_space<vmem>>, vector<32x256xf32>
      %c0_11 = arith.constant 0 : index
      %c0_12 = arith.constant 0 : index
      %13 = vector.load %arg5[%c0_11, %c0_12] : memref<1x256xf32, #tpu.memory_space<vmem>>, vector<1x256xf32>
      %14 = vector.broadcast %13 : vector<1x256xf32> to vector<32x256xf32>
      %15 = arith.addf %12, %14 : vector<32x256xf32>
      %16 = tpu.iota {dimensions = array<i32: 0>} : vector<32x256xi32>
      %c0_i32_13 = arith.constant 0 : i32
      %17 = vector.broadcast %c0_i32_13 : i32 to vector<32x256xi32>
      %18 = arith.cmpi sge, %16, %17 : vector<32x256xi32>
      %c9_i32 = arith.constant 9 : i32
      %19 = vector.broadcast %c9_i32 : i32 to vector<32x256xi32>
      %20 = arith.cmpi slt, %16, %19 : vector<32x256xi32>
      %21 = arith.andi %18, %20 : vector<32x256xi1>
      %cst_14 = arith.constant 0.000000e+00 : f32
      %22 = vector.broadcast %cst_14 : f32 to vector<32x256xf32>
      %23 = arith.select %21, %15, %22 : vector<32x256xi1>, vector<32x256xf32>
      %cst_15 = arith.constant dense<0.000000e+00> : vector<256xf32>
      %24 = vector.multi_reduction <add>, %23, %cst_15 [0] : vector<32x256xf32> to vector<256xf32>
      %25 = vector.shape_cast %24 : vector<256xf32> to vector<1x256xf32>
      %cst_16 = arith.constant 0.111111112 : f32
      %26 = vector.broadcast %cst_16 : f32 to vector<1x256xf32>
      %27 = arith.mulf %25, %26 : vector<1x256xf32>
      %28 = vector.broadcast %27 : vector<1x256xf32> to vector<32x256xf32>
      %29 = arith.subf %15, %28 : vector<32x256xf32>
      %cst_17 = arith.constant 0.000000e+00 : f32
      %30 = vector.broadcast %cst_17 : f32 to vector<32x256xf32>
      %31 = arith.select %21, %29, %30 : vector<32x256xi1>, vector<32x256xf32>
      %32 = arith.mulf %31, %31 : vector<32x256xf32>
      %cst_18 = arith.constant dense<0.000000e+00> : vector<256xf32>
      %33 = vector.multi_reduction <add>, %32, %cst_18 [0] : vector<32x256xf32> to vector<256xf32>
      %34 = vector.shape_cast %33 : vector<256xf32> to vector<1x256xf32>
      %cst_19 = arith.constant 0.111111112 : f32
      %35 = vector.broadcast %cst_19 : f32 to vector<1x256xf32>
      %36 = arith.mulf %34, %35 : vector<1x256xf32>
      %37 = vector.broadcast %27 : vector<1x256xf32> to vector<32x256xf32>
      %38 = arith.subf %15, %37 : vector<32x256xf32>
      %cst_20 = arith.constant 9.99999974E-6 : f32
      %39 = vector.broadcast %cst_20 : f32 to vector<1x256xf32>
      %40 = arith.addf %36, %39 : vector<1x256xf32>
      %41 = math.rsqrt %40 : vector<1x256xf32>
      %42 = vector.broadcast %41 : vector<1x256xf32> to vector<32x256xf32>
      %43 = arith.mulf %38, %42 : vector<32x256xf32>
      %cst_21 = arith.constant 0.000000e+00 : f32
      %44 = vector.broadcast %cst_21 : f32 to vector<32x256xf32>
      %45 = arith.cmpf ogt, %43, %44 : vector<32x256xf32>
      %cst_22 = arith.constant 2.000000e-01 : f32
      %46 = vector.broadcast %cst_22 : f32 to vector<32x256xf32>
      %47 = arith.mulf %46, %43 : vector<32x256xf32>
      %48 = arith.select %45, %43, %47 : vector<32x256xi1>, vector<32x256xf32>
      %49 = arith.select %21, %48, %15 : vector<32x256xi1>, vector<32x256xf32>
      %c9_i32_23 = arith.constant 9 : i32
      %50 = vector.broadcast %c9_i32_23 : i32 to vector<32x256xi32>
      %51 = arith.cmpi sge, %16, %50 : vector<32x256xi32>
      %c18_i32 = arith.constant 18 : i32
      %52 = vector.broadcast %c18_i32 : i32 to vector<32x256xi32>
      %53 = arith.cmpi slt, %16, %52 : vector<32x256xi32>
      %54 = arith.andi %51, %53 : vector<32x256xi1>
      %cst_24 = arith.constant 0.000000e+00 : f32
      %55 = vector.broadcast %cst_24 : f32 to vector<32x256xf32>
      %56 = arith.select %54, %15, %55 : vector<32x256xi1>, vector<32x256xf32>
      %cst_25 = arith.constant dense<0.000000e+00> : vector<256xf32>
      %57 = vector.multi_reduction <add>, %56, %cst_25 [0] : vector<32x256xf32> to vector<256xf32>
      %58 = vector.shape_cast %57 : vector<256xf32> to vector<1x256xf32>
      %cst_26 = arith.constant 0.111111112 : f32
      %59 = vector.broadcast %cst_26 : f32 to vector<1x256xf32>
      %60 = arith.mulf %58, %59 : vector<1x256xf32>
      %61 = vector.broadcast %60 : vector<1x256xf32> to vector<32x256xf32>
      %62 = arith.subf %15, %61 : vector<32x256xf32>
      %cst_27 = arith.constant 0.000000e+00 : f32
      %63 = vector.broadcast %cst_27 : f32 to vector<32x256xf32>
      %64 = arith.select %54, %62, %63 : vector<32x256xi1>, vector<32x256xf32>
      %65 = arith.mulf %64, %64 : vector<32x256xf32>
      %cst_28 = arith.constant dense<0.000000e+00> : vector<256xf32>
      %66 = vector.multi_reduction <add>, %65, %cst_28 [0] : vector<32x256xf32> to vector<256xf32>
      %67 = vector.shape_cast %66 : vector<256xf32> to vector<1x256xf32>
      %cst_29 = arith.constant 0.111111112 : f32
      %68 = vector.broadcast %cst_29 : f32 to vector<1x256xf32>
      %69 = arith.mulf %67, %68 : vector<1x256xf32>
      %70 = vector.broadcast %60 : vector<1x256xf32> to vector<32x256xf32>
      %71 = arith.subf %15, %70 : vector<32x256xf32>
      %cst_30 = arith.constant 9.99999974E-6 : f32
      %72 = vector.broadcast %cst_30 : f32 to vector<1x256xf32>
      %73 = arith.addf %69, %72 : vector<1x256xf32>
      %74 = math.rsqrt %73 : vector<1x256xf32>
      %75 = vector.broadcast %74 : vector<1x256xf32> to vector<32x256xf32>
      %76 = arith.mulf %71, %75 : vector<32x256xf32>
      %cst_31 = arith.constant 0.000000e+00 : f32
      %77 = vector.broadcast %cst_31 : f32 to vector<32x256xf32>
      %78 = arith.cmpf ogt, %76, %77 : vector<32x256xf32>
      %cst_32 = arith.constant 2.000000e-01 : f32
      %79 = vector.broadcast %cst_32 : f32 to vector<32x256xf32>
      %80 = arith.mulf %79, %76 : vector<32x256xf32>
      %81 = arith.select %78, %76, %80 : vector<32x256xi1>, vector<32x256xf32>
      %82 = arith.select %54, %81, %49 : vector<32x256xi1>, vector<32x256xf32>
      %c0_33 = arith.constant 0 : index
      %c0_34 = arith.constant 0 : index
      %83 = vector.load %arg6[%c0_33, %c0_34] : memref<32x256xf32, #tpu.memory_space<vmem>>, vector<32x256xf32>
      tpu.vector_store %arg6[%c0_33, %c0_34], %82 {strides = array<i32>} : memref<32x256xf32, #tpu.memory_space<vmem>>, vector<32x256xf32>,
    } else {
    }
    return
  }
  func.func @transform_0(%arg0: i32, %arg1: i32, %arg2: i32) -> (i32, i32) {
    %c0_i32 = arith.constant 0 : i32
    return %arg0, %arg2 : i32, i32
  }
  func.func @transform_1(%arg0: i32, %arg1: i32, %arg2: i32) -> (i32, i32) {
    %c0_i32 = arith.constant 0 : i32
    return %arg2, %arg1 : i32, i32
  }
  func.func @transform_2(%arg0: i32, %arg1: i32, %arg2: i32) -> (i32, i32) {
    %c0_i32 = arith.constant 0 : i32
    %c0_i32_0 = arith.constant 0 : i32
    return %c0_i32, %arg1 : i32, i32
  }
  func.func @transform_3(%arg0: i32, %arg1: i32, %arg2: i32) -> (i32, i32) {
    %c0_i32 = arith.constant 0 : i32
    return %arg0, %arg1 : i32, i32
  }
}

module attributes {stable_mosaic.version = 11 : i64} {
  func.func @_rowdot_bias_kernel(%arg0: i32, %arg1: memref<8x8192xf32, #tpu.memory_space<vmem>>, %arg2: memref<1x8192xf32, #tpu.memory_space<vmem>>, %arg3: memref<1x1xf32, #tpu.memory_space<vmem>>, %arg4: memref<8x1xf32, #tpu.memory_space<vmem>>) attributes {dimension_semantics = [#tpu.dimension_semantics<arbitrary>], iteration_bounds = array<i64: 1>, scalar_prefetch = 0 : i64, scratch_operands = 0 : i64, tpu.core_type = #tpu.core_type<tc>, window_params = [{pipeline_mode = #tpu.pipeline_mode<synchronous>, transform_indices = @transform_0, window_bounds = array<i64: 8, 8192>}, {pipeline_mode = #tpu.pipeline_mode<synchronous>, transform_indices = @transform_1, window_bounds = array<i64: 1, 8192>}, {pipeline_mode = #tpu.pipeline_mode<synchronous>, transform_indices = @transform_2, window_bounds = array<i64: 1, 1>}, {pipeline_mode = #tpu.pipeline_mode<synchronous>, transform_indices = @transform_3, window_bounds = array<i64: 8, 1>}]} {
    %c0 = arith.constant 0 : index
    %c0_0 = arith.constant 0 : index
    %0 = vector.load %arg1[%c0, %c0_0] : memref<8x8192xf32, #tpu.memory_space<vmem>>, vector<8x8192xf32>
    %c0_1 = arith.constant 0 : index
    %c0_2 = arith.constant 0 : index
    %1 = vector.load %arg2[%c0_1, %c0_2] : memref<1x8192xf32, #tpu.memory_space<vmem>>, vector<1x8192xf32>
    %2 = vector.broadcast %1 : vector<1x8192xf32> to vector<8x8192xf32>
    %3 = arith.mulf %0, %2 : vector<8x8192xf32>
    %cst = arith.constant dense<0.000000e+00> : vector<8xf32>
    %4 = vector.multi_reduction <add>, %3, %cst [1] : vector<8x8192xf32> to vector<8xf32>
    %5 = vector.shape_cast %4 : vector<8xf32> to vector<8x1xf32>
    %c0_3 = arith.constant 0 : index
    %c0_4 = arith.constant 0 : index
    %6 = vector.load %arg3[%c0_3, %c0_4] : memref<1x1xf32, #tpu.memory_space<vmem>>, vector<1x1xf32>
    %7 = vector.broadcast %6 : vector<1x1xf32> to vector<8x1xf32>
    %8 = arith.addf %5, %7 : vector<8x1xf32>
    %c0_5 = arith.constant 0 : index
    %c0_6 = arith.constant 0 : index
    %9 = vector.load %arg4[%c0_5, %c0_6] : memref<8x1xf32, #tpu.memory_space<vmem>>, vector<8x1xf32>
    tpu.vector_store %arg4[%c0_5, %c0_6], %8 {strides = array<i32>} : memref<8x1xf32, #tpu.memory_space<vmem>>, vector<8x1xf32>,
    return
  }
  func.func @transform_0(%arg0: i32) -> (i32, i32) {
    %c0_i32 = arith.constant 0 : i32
    %c0_i32_0 = arith.constant 0 : i32
    %c0_i32_1 = arith.constant 0 : i32
    return %c0_i32, %c0_i32_0 : i32, i32
  }
  func.func @transform_1(%arg0: i32) -> (i32, i32) {
    %c0_i32 = arith.constant 0 : i32
    %c0_i32_0 = arith.constant 0 : i32
    %c0_i32_1 = arith.constant 0 : i32
    return %c0_i32, %c0_i32_0 : i32, i32
  }
  func.func @transform_2(%arg0: i32) -> (i32, i32) {
    %c0_i32 = arith.constant 0 : i32
    %c0_i32_0 = arith.constant 0 : i32
    %c0_i32_1 = arith.constant 0 : i32
    return %c0_i32, %c0_i32_0 : i32, i32
  }
  func.func @transform_3(%arg0: i32) -> (i32, i32) {
    %c0_i32 = arith.constant 0 : i32
    %c0_i32_0 = arith.constant 0 : i32
    %c0_i32_1 = arith.constant 0 : i32
    return %c0_i32, %c0_i32_0 : i32, i32
  }
}

</mosaic_0001>

<llo_original>
// kernel: discriminator_forward.5
$region0: #{discriminator_forward.5}
  #allocation0 [shape = 'u32[]', space=smem, size = 0x4, offset = 0x4, fixed_abs, tag = 'smem constant byte address 0x4 - core index']
  #allocation1 [shape = 'u32[72,128]{1,0:T(1,128)}', space=vmem, size = 0x9000, scoped, tag = 'internal scratch']
  #allocation2 [shape = 'f32[256,64]{1,0:T(8,128)}', space=vmem, size = 0x20000, scoped, tag = 'scratch operand']
  %s0 = inlined_call_operand.vmem [shape: bf16[512,64], index: 0, kind: input, shape index: {}]
  %s1 = inlined_call_operand.vmem [shape: bf16[64,64], index: 1, kind: input, shape index: {}]
  %s2 = inlined_call_operand.vmem [shape: f32[1,64], index: 2, kind: input, shape index: {}]
  %s3 = inlined_call_operand.vmem [shape: f32[512,64], index: 3, kind: output, shape index: {}]
  %s4 = sld [smem:[#allocation0]]
  $region53: #{discriminator_forward.5} parent=0
    _
  %s6 = ssub.s32 1, %s4
  %s7 = scalar_select 0, %s6, %s4
  loop: start=0, step=1, limit=4
  $region2: #{discriminator_forward.5} parent=0 // loop_pre_header
    _
  $region3: #{discriminator_forward.5} parent=0 // loop_header
    %s9 = sphi 0, %s13
    %p10 = scmp.ge.s32.totalorder %s9, 4
    %s16 = sphi 0, %s35
    %s17 = sphi 0, %s31
    %s18 = sphi 0, %s27
    %s19 = sphi 0, %s16
    %s20 = sphi 0, %s17
    %s21 = sphi 0, %s18
    %s22 = sphi 0, %s19
    %s23 = sphi 0, %s20
    %s24 = sphi 0, %s21
    %s40 = sphi 0, %s42
    %s43 = sphi 0, %s40
    %s44 = sphi 0, %s43
    %s60 = sphi 0, %s44
    %s68 = sphi 0, %s70
    %s71 = sphi 0, %s68
    %s72 = sphi 0, %s71
    %s88 = sphi 0, %s72
    %s94 = sphi 0, %s96
    %s97 = sphi 0, %s94
    %s98 = sphi 0, %s97
    %s114 = sphi 0, %s98
    %s122 = sphi 0, %s124
    %s125 = sphi 0, %s122
    %s126 = sphi 0, %s125
    %s142 = sphi 0, %s126
  $region4: #{discriminator_forward.5} parent=0 // loop_header_branch
    %12 = sbr.rel (%p10) target = $region8
  $region5: #{discriminator_forward.5} parent=0 // loop_body
    %s14 = ssub.s32 %s9, 1
    %s15 = ssub.s32 %s9, 2
    %s25 = sadd.s32 1, %s18
    %p26 = scmp.ge.s32.totalorder %s25, 1
    %s27 = scalar_select %p26, 0, %s25
    %s28 = sadd.s32 1, %s17
    %s29 = scalar_select %p26, %s28, %s17
    %p30 = scmp.ge.s32.totalorder %s29, 1
    %s31 = scalar_select %p30, 0, %s29
    %s32 = sadd.s32 1, %s16
    %s33 = scalar_select %p30, %s32, %s16
    %p34 = scmp.ge.s32.totalorder %s33, 2
    %s35 = scalar_select %p34, 0, %s33
    %s36 = ssub.s32 %s16, %s35
    %s37 = ssub.s32 %s18, %s27
    %s38 = sor.u32 %s36, %s37
    %p39 = scmp.eq.s32.totalorder %s38, 0
    %s41 = sadd.s32 %s40, 1
    %s42 = scalar_select %p39, %s40, %s41
    %p45 = pneg %p39
    %p46 = scmp.eq.s32.totalorder %s9, 1
    %p47 = por %p45, %p46
    %p48 = scmp.ne.s32.totalorder %s40, %s43
    %p49 = scmp.eq.s32.totalorder %s9, 0
    %p50 = por %p48, %p49
    %p51 = scmp.ne.s32.totalorder %s40, %s43
    %p52 = scmp.eq.s32.totalorder %s14, 1
    %p53 = por %p51, %p52
    %p54 = scmp.ne.s32.totalorder %s43, %s44
    %p55 = scmp.eq.s32.totalorder %s14, 0
    %p56 = por %p54, %p55
    %p57 = scmp.ne.s32.totalorder %s43, %s44
    %p58 = scmp.eq.s32.totalorder %s15, 1
    %p59 = por %p57, %p58
    %p61 = scmp.ne.s32.totalorder %s44, %s60
    %p62 = scmp.eq.s32.totalorder %s15, 0
    %p63 = por %p61, %p62
    %s64 = ssub.s32 %s18, %s27
    %s65 = ssub.s32 %s17, %s31
    %s66 = sor.u32 %s64, %s65
    %p67 = scmp.eq.s32.totalorder %s66, 0
    %s69 = sadd.s32 %s68, 1
    %s70 = scalar_select %p67, %s68, %s69
    %p73 = pneg %p67
    %p74 = scmp.eq.s32.totalorder %s9, 1
    %p75 = por %p73, %p74
    %p76 = scmp.ne.s32.totalorder %s68, %s71
    %p77 = scmp.eq.s32.totalorder %s9, 0
    %p78 = por %p76, %p77
    %p79 = scmp.ne.s32.totalorder %s68, %s71
    %p80 = scmp.eq.s32.totalorder %s14, 1
    %p81 = por %p79, %p80
    %p82 = scmp.ne.s32.totalorder %s71, %s72
    %p83 = scmp.eq.s32.totalorder %s14, 0
    %p84 = por %p82, %p83
    %p85 = scmp.ne.s32.totalorder %s71, %s72
    %p86 = scmp.eq.s32.totalorder %s15, 1
    %p87 = por %p85, %p86
    %p89 = scmp.ne.s32.totalorder %s72, %s88
    %p90 = scmp.eq.s32.totalorder %s15, 0
    %p91 = por %p89, %p90
    %s92 = ssub.s32 %s17, %s31
    %p93 = scmp.eq.s32.totalorder %s92, 0
    %s95 = sadd.s32 %s94, 1
    %s96 = scalar_select %p93, %s94, %s95
    %p99 = pneg %p93
    %p100 = scmp.eq.s32.totalorder %s9, 1
    %p101 = por %p99, %p100
    %p102 = scmp.ne.s32.totalorder %s94, %s97
    %p103 = scmp.eq.s32.totalorder %s9, 0
    %p104 = por %p102, %p103
    %p105 = scmp.ne.s32.totalorder %s94, %s97
    %p106 = scmp.eq.s32.totalorder %s14, 1
    %p107 = por %p105, %p106
    %p108 = scmp.ne.s32.totalorder %s97, %s98
    %p109 = scmp.eq.s32.totalorder %s14, 0
    %p110 = por %p108, %p109
    %p111 = scmp.ne.s32.totalorder %s97, %s98
    %p112 = scmp.eq.s32.totalorder %s15, 1
    %p113 = por %p111, %p112
    %p115 = scmp.ne.s32.totalorder %s98, %s114
    %p116 = scmp.eq.s32.totalorder %s15, 0
    %p117 = por %p115, %p116
    %s118 = ssub.s32 %s16, %s35
    %s119 = ssub.s32 %s17, %s31
    %s120 = sor.u32 %s118, %s119
    %p121 = scmp.eq.s32.totalorder %s120, 0
    %s123 = sadd.s32 %s122, 1
    %s124 = scalar_select %p121, %s122, %s123
    %p127 = pneg %p121
    %p128 = scmp.eq.s32.totalorder %s9, 1
    %p129 = por %p127, %p128
    %p130 = scmp.ne.s32.totalorder %s122, %s125
    %p131 = scmp.eq.s32.totalorder %s9, 0
    %p132 = por %p130, %p131
    %p133 = scmp.ne.s32.totalorder %s122, %s125
    %p134 = scmp.eq.s32.totalorder %s14, 1
    %p135 = por %p133, %p134
    %p136 = scmp.ne.s32.totalorder %s125, %s126
    %p137 = scmp.eq.s32.totalorder %s14, 0
    %p138 = por %p136, %p137
    %p139 = scmp.ne.s32.totalorder %s125, %s126
    %p140 = scmp.eq.s32.totalorder %s15, 1
    %p141 = por %p139, %p140
    %p143 = scmp.ne.s32.totalorder %s126, %s142
    %p144 = scmp.eq.s32.totalorder %s15, 0
    %p145 = por %p143, %p144
    %p146 = scmp.le.s32.totalorder 1, %s9
    %p147 = scmp.lt.s32.totalorder %s9, 3
    %p148 = pnand %p146, %p147
    %p149 = pneg %p148
    // Predicated region
    $region9: #{discriminator_forward.5} parent=5 // pred_check
      _
    $region10: #{discriminator_forward.5} parent=5 // pred_check_branch
      %151 = sbr.rel (%p148) target = $region12
    $region11: #{discriminator_forward.5} parent=5 // pred_region
      %s152 = ssub.s32 %s9, 1
      // Predicated region
      $region13: #{discriminator_forward.5} parent=11 // pred_check
        %p153 = pneg %p84
      $region14: #{discriminator_forward.5} parent=11 // pred_check_branch
        %155 = sbr.rel (%p153) target = $region16
      $region15: #{discriminator_forward.5} parent=11 // pred_region
        %s156 = smul.u32 8, %s21
        %p157 = scmp.lt.s32.totalorder %s156, 7
        %s158 = scalar_select %p157, %s156, 7
        %p159 = scmp.lt.s32.totalorder %s20, 0
        %s160 = scalar_select %p159, %s20, 0
        %s161 = sadd.s32 %s160, %s158
        %s162 = smul.addr %s161, 4
        %s163 = scalar_lea.vmem %s1, %s162
        %s164 = smul.u32 8, %s21
      $region16: #{discriminator_forward.5} parent=11 // pred_fallthru
        _
      // Predicated region
      $region17: #{discriminator_forward.5} parent=11 // pred_check
        %p165 = pneg %p110
      $region18: #{discriminator_forward.5} parent=11 // pred_check_branch
        %167 = sbr.rel (%p165) target = $region20
      $region19: #{discriminator_forward.5} parent=11 // pred_region
        %p168 = scmp.lt.s32.totalorder %s20, 0
        %s169 = scalar_select %p168, %s20, 0
        %s170 = scalar_lea.vmem %s2, %s169
      $region20: #{discriminator_forward.5} parent=11 // pred_fallthru
        _
    $region12: #{discriminator_forward.5} parent=5 // pred_fallthru
      _
    %p171 = scmp.lt.s32.totalorder %s9, 2
    // Predicated region
    $region21: #{discriminator_forward.5} parent=5 // pred_check
      %p172 = pneg %p171
    $region22: #{discriminator_forward.5} parent=5 // pred_check_branch
      %174 = sbr.rel (%p172) target = $region24
    $region23: #{discriminator_forward.5} parent=5 // pred_region
      // Predicated region
      $region25: #{discriminator_forward.5} parent=23 // pred_check
        %p175 = pneg %p50
      $region26: #{discriminator_forward.5} parent=23 // pred_check_branch
        %177 = sbr.rel (%p175) target = $region28
      $region27: #{discriminator_forward.5} parent=23 // pred_region
        %s178 = smul.u32 32, %s16
        %p179 = scmp.lt.s32.totalorder %s178, 63
        %s180 = scalar_select %p179, %s178, 63
        %p181 = scmp.lt.s32.totalorder %s18, 0
        %s182 = scalar_select %p181, %s18, 0
        %s183 = sadd.s32 %s182, %s180
        %s184 = smul.addr %s183, 4
        %s185 = scalar_lea.vmem %s0, %s184
        %s186 = smul.u32 32, %s16
      $region28: #{discriminator_forward.5} parent=23 // pred_fallthru
        _
    $region24: #{discriminator_forward.5} parent=5 // pred_fallthru
      _
    %p187 = scmp.le.s32.totalorder 1, %s9
    %p188 = scmp.lt.s32.totalorder %s9, 3
    %p189 = pnand %p187, %p188
    %p190 = pneg %p189
    // Predicated region
    $region29: #{discriminator_forward.5} parent=5 // pred_check
      _
    $region30: #{discriminator_forward.5} parent=5 // pred_check_branch
      %192 = sbr.rel (%p189) target = $region32
    $region31: #{discriminator_forward.5} parent=5 // pred_region
      %s193 = ssub.s32 %s9, 1
      %s194 = smul.u32 32, %s19
      %p195 = scmp.lt.s32.totalorder %s194, 63
      %s196 = scalar_select %p195, %s194, 63
      %p197 = scmp.lt.s32.totalorder %s21, 0
      %s198 = scalar_select %p197, %s21, 0
      %s199 = sadd.s32 %s198, %s196
      %s200 = smul.addr %s199, 4
      %s201 = scalar_lea.vmem %s0, %s200
      %p202 = pneg %p56
      %p203 = pneg %p53
      %s204 = smul.u32 8, %s21
      %p205 = scmp.lt.s32.totalorder %s204, 7
      %s206 = scalar_select %p205, %s204, 7
      %p207 = scmp.lt.s32.totalorder %s20, 0
      %s208 = scalar_select %p207, %s20, 0
      %s209 = sadd.s32 %s208, %s206
      %s210 = smul.addr %s209, 4
      %s211 = scalar_lea.vmem %s1, %s210
      %p212 = pneg %p84
      %p213 = pneg %p81
      %p214 = scmp.lt.s32.totalorder %s20, 0
      %s215 = scalar_select %p214, %s20, 0
      %s216 = scalar_lea.vmem %s2, %s215
      %p217 = pneg %p110
      %p218 = pneg %p107
      %p219 = pneg %p138
      %p220 = pneg %p135
      %s221 = smul.u32 32, %s19
      %p222 = scmp.lt.s32.totalorder %s221, 63
      %s223 = scalar_select %p222, %s221, 63
      %p224 = scmp.lt.s32.totalorder %s20, 0
      %s225 = scalar_select %p224, %s20, 0
      %s226 = sadd.s32 %s225, %s223
      %s227 = smul.addr %s226, 8
      %s228 = scalar_lea.vmem %s3, %s227
      %s229 = smul.u32 32, %s19
      %p230 = scmp.lt.s32.totalorder %s229, 63
      %s231 = scalar_select %p230, %s229, 63
      %p232 = scmp.lt.s32.totalorder %s21, 0
      %s233 = scalar_select %p232, %s21, 0
      %s234 = sadd.s32 %s233, %s231
      %s235 = smul.addr %s234, 4
      %s236 = scalar_lea.vmem %s0, %s235
      %s237 = smul.u32 32, %s19
      %s238 = smul.u32 8, %s21
      %p239 = scmp.lt.s32.totalorder %s238, 7
      %s240 = scalar_select %p239, %s238, 7
      %p241 = scmp.lt.s32.totalorder %s20, 0
      %s242 = scalar_select %p241, %s20, 0
      %s243 = sadd.s32 %s242, %s240
      %s244 = smul.addr %s243, 4
      %s245 = scalar_lea.vmem %s1, %s244
      %s246 = smul.u32 8, %s21
      %p247 = scmp.lt.s32.totalorder %s20, 0
      %s248 = scalar_select %p247, %s20, 0
      %s249 = scalar_lea.vmem %s2, %s248
      %s250 = smul.u32 32, %s19
      %p251 = scmp.lt.s32.totalorder %s250, 63
      %s252 = scalar_select %p251, %s250, 63
      %p253 = scmp.lt.s32.totalorder %s20, 0
      %s254 = scalar_select %p253, %s20, 0
      %s255 = sadd.s32 %s254, %s252
      %s256 = smul.addr %s255, 8
      %s257 = scalar_lea.vmem %s3, %s256
      %s258 = smul.u32 32, %s19
      %p260 = scmp.eq.s32.totalorder %s21, 0
      // Predicated region
      $region33: #{discriminator_forward.5} parent=31 // pred_check
        %p261 = pneg %p260
      $region34: #{discriminator_forward.5} parent=31 // pred_check_branch
        %263 = sbr.rel (%p261) target = $region36
      $region35: #{discriminator_forward.5} parent=31 // pred_region
        %vm264 = vcmask 523264
        %265 = vst.msk [vmem:[#allocation2] sm:$0xff] %vm264, 0.0
        %266 = vst.msk [vmem:[#allocation2 + $0x8] sm:$0xff] %vm264, 0.0
        %267 = vst.msk [vmem:[#allocation2 + $0x10] sm:$0xff] %vm264, 0.0
        %268 = vst.msk [vmem:[#allocation2 + $0x18] sm:$0xff] %vm264, 0.0
        %269 = vst.msk [vmem:[#allocation2 + $0x20] sm:$0xff] %vm264, 0.0
        %270 = vst.msk [vmem:[#allocation2 + $0x28] sm:$0xff] %vm264, 0.0
        %271 = vst.msk [vmem:[#allocation2 + $0x30] sm:$0xff] %vm264, 0.0
        %272 = vst.msk [vmem:[#allocation2 + $0x38] sm:$0xff] %vm264, 0.0
        %273 = vst.msk [vmem:[#allocation2 + $0x40] sm:$0xff] %vm264, 0.0
        %274 = vst.msk [vmem:[#allocation2 + $0x48] sm:$0xff] %vm264, 0.0
        %275 = vst.msk [vmem:[#allocation2 + $0x50] sm:$0xff] %vm264, 0.0
        %276 = vst.msk [vmem:[#allocation2 + $0x58] sm:$0xff] %vm264, 0.0
        %277 = vst.msk [vmem:[#allocation2 + $0x60] sm:$0xff] %vm264, 0.0
        %278 = vst.msk [vmem:[#allocation2 + $0x68] sm:$0xff] %vm264, 0.0
        %279 = vst.msk [vmem:[#allocation2 + $0x70] sm:$0xff] %vm264, 0.0
        %280 = vst.msk [vmem:[#allocation2 + $0x78] sm:$0xff] %vm264, 0.0
        %281 = vst.msk [vmem:[#allocation2 + $0x80] sm:$0xff] %vm264, 0.0
        %282 = vst.msk [vmem:[#allocation2 + $0x88] sm:$0xff] %vm264, 0.0
        %283 = vst.msk [vmem:[#allocation2 + $0x90] sm:$0xff] %vm264, 0.0
        %284 = vst.msk [vmem:[#allocation2 + $0x98] sm:$0xff] %vm264, 0.0
        %285 = vst.msk [vmem:[#allocation2 + $0xa0] sm:$0xff] %vm264, 0.0
        %286 = vst.msk [vmem:[#allocation2 + $0xa8] sm:$0xff] %vm264, 0.0
        %287 = vst.msk [vmem:[#allocation2 + $0xb0] sm:$0xff] %vm264, 0.0
        %288 = vst.msk [vmem:[#allocation2 + $0xb8] sm:$0xff] %vm264, 0.0
        %289 = vst.msk [vmem:[#allocation2 + $0xc0] sm:$0xff] %vm264, 0.0
        %290 = vst.msk [vmem:[#allocation2 + $0xc8] sm:$0xff] %vm264, 0.0
        %291 = vst.msk [vmem:[#allocation2 + $0xd0] sm:$0xff] %vm264, 0.0
        %292 = vst.msk [vmem:[#allocation2 + $0xd8] sm:$0xff] %vm264, 0.0
        %293 = vst.msk [vmem:[#allocation2 + $0xe0] sm:$0xff] %vm264, 0.0
        %294 = vst.msk [vmem:[#allocation2 + $0xe8] sm:$0xff] %vm264, 0.0
        %295 = vst.msk [vmem:[#allocation2 + $0xf0] sm:$0xff] %vm264, 0.0
        %296 = vst.msk [vmem:[#allocation2 + $0xf8] sm:$0xff] %vm264, 0.0
      $region36: #{discriminator_forward.5} parent=31 // pred_fallthru
        _
      %v297 = vld [vmem:[#allocation2] sm:$0xff]
      %v298 = vld [vmem:[#allocation2 + $0x8] sm:$0xff]
      %v299 = vld [vmem:[#allocation2 + $0x10] sm:$0xff]
      %v300 = vld [vmem:[#allocation2 + $0x18] sm:$0xff]
      %v301 = vld [vmem:[#allocation2 + $0x20] sm:$0xff]
      %v302 = vld [vmem:[#allocation2 + $0x28] sm:$0xff]
      %v303 = vld [vmem:[#allocation2 + $0x30] sm:$0xff]
      %v304 = vld [vmem:[#allocation2 + $0x38] sm:$0xff]
      %v305 = vld [vmem:[#allocation2 + $0x40] sm:$0xff]
      %v306 = vld [vmem:[#allocation2 + $0x48] sm:$0xff]
      %v307 = vld [vmem:[#allocation2 + $0x50] sm:$0xff]
      %v308 = vld [vmem:[#allocation2 + $0x58] sm:$0xff]
      %v309 = vld [vmem:[#allocation2 + $0x60] sm:$0xff]
      %v310 = vld [vmem:[#allocation2 + $0x68] sm:$0xff]
      %v311 = vld [vmem:[#allocation2 + $0x70] sm:$0xff]
      %v312 = vld [vmem:[#allocation2 + $0x78] sm:$0xff]
      %v313 = vld [vmem:[#allocation2 + $0x80] sm:$0xff]
      %v314 = vld [vmem:[#allocation2 + $0x88] sm:$0xff]
      %v315 = vld [vmem:[#allocation2 + $0x90] sm:$0xff]
      %v316 = vld [vmem:[#allocation2 + $0x98] sm:$0xff]
      %v317 = vld [vmem:[#allocation2 + $0xa0] sm:$0xff]
      %v318 = vld [vmem:[#allocation2 + $0xa8] sm:$0xff]
      %v319 = vld [vmem:[#allocation2 + $0xb0] sm:$0xff]
      %v320 = vld [vmem:[#allocation2 + $0xb8] sm:$0xff]
      %v321 = vld [vmem:[#allocation2 + $0xc0] sm:$0xff]
      %v322 = vld [vmem:[#allocation2 + $0xc8] sm:$0xff]
      %v323 = vld [vmem:[#allocation2 + $0xd0] sm:$0xff]
      %v324 = vld [vmem:[#allocation2 + $0xd8] sm:$0xff]
      %v325 = vld [vmem:[#allocation2 + $0xe0] sm:$0xff]
      %v326 = vld [vmem:[#allocation2 + $0xe8] sm:$0xff]
      %v327 = vld [vmem:[#allocation2 + $0xf0] sm:$0xff]
      %v328 = vld [vmem:[#allocation2 + $0xf8] sm:$0xff]
      %v329 = vld [vmem:[%s236] sm:$0xf]
      %v330 = vld [vmem:[%s236 + $0x4] sm:$0xf]
      %v331 = vld [vmem:[%s236 + $0x8] sm:$0xf]
      %v332 = vld [vmem:[%s236 + $0xc] sm:$0xf]
      %v333 = vld [vmem:[%s236 + $0x10] sm:$0xf]
      %v334 = vld [vmem:[%s236 + $0x14] sm:$0xf]
      %v335 = vld [vmem:[%s236 + $0x18] sm:$0xf]
      %v336 = vld [vmem:[%s236 + $0x1c] sm:$0xf]
      %v337 = vld [vmem:[%s236 + $0x20] sm:$0xf]
      %v338 = vld [vmem:[%s236 + $0x24] sm:$0xf]
      %v339 = vld [vmem:[%s236 + $0x28] sm:$0xf]
      %v340 = vld [vmem:[%s236 + $0x2c] sm:$0xf]
      %v341 = vld [vmem:[%s236 + $0x30] sm:$0xf]
      %v342 = vld [vmem:[%s236 + $0x34] sm:$0xf]
      %v343 = vld [vmem:[%s236 + $0x38] sm:$0xf]
      %v344 = vld [vmem:[%s236 + $0x3c] sm:$0xf]
      %v345 = vld [vmem:[%s236 + $0x40] sm:$0xf]
      %v346 = vld [vmem:[%s236 + $0x44] sm:$0xf]
      %v347 = vld [vmem:[%s236 + $0x48] sm:$0xf]
      %v348 = vld [vmem:[%s236 + $0x4c] sm:$0xf]
      %v349 = vld [vmem:[%s236 + $0x50] sm:$0xf]
      %v350 = vld [vmem:[%s236 + $0x54] sm:$0xf]
      %v351 = vld [vmem:[%s236 + $0x58] sm:$0xf]
      %v352 = vld [vmem:[%s236 + $0x5c] sm:$0xf]
      %v353 = vld [vmem:[%s236 + $0x60] sm:$0xf]
      %v354 = vld [vmem:[%s236 + $0x64] sm:$0xf]
      %v355 = vld [vmem:[%s236 + $0x68] sm:$0xf]
      %v356 = vld [vmem:[%s236 + $0x6c] sm:$0xf]
      %v357 = vld [vmem:[%s236 + $0x70] sm:$0xf]
      %v358 = vld [vmem:[%s236 + $0x74] sm:$0xf]
      %v359 = vld [vmem:[%s236 + $0x78] sm:$0xf]
      %v360 = vld [vmem:[%s236 + $0x7c] sm:$0xf]
      %v361 = vld [vmem:[%s245] sm:$0xf]
      %v362 = vld [vmem:[%s245 + $0x4] sm:$0xf]
      %v363 = vld [vmem:[%s245 + $0x8] sm:$0xf]
      %v364 = vld [vmem:[%s245 + $0xc] sm:$0xf]
      %v365 = vld [vmem:[%s245 + $0x10] sm:$0xf]
      %v366 = vld [vmem:[%s245 + $0x14] sm:$0xf]
      %v367 = vld [vmem:[%s245 + $0x18] sm:$0xf]
      %v368 = vld [vmem:[%s245 + $0x1c] sm:$0xf]
      %v401 = vunpack.c.l.b16 %v329
      %v402 = vunpack.c.l.b16 %v330
      %v403 = vunpack.c.l.b16 %v331
      %v404 = vunpack.c.l.b16 %v332
      %v405 = vunpack.c.l.b16 %v333
      %v406 = vunpack.c.l.b16 %v334
      %v407 = vunpack.c.l.b16 %v335
      %v408 = vunpack.c.l.b16 %v336
      %v409 = vunpack.c.l.b16 %v337
      %v410 = vunpack.c.l.b16 %v338
      %v411 = vunpack.c.l.b16 %v339
      %v412 = vunpack.c.l.b16 %v340
      %v413 = vunpack.c.l.b16 %v341
      %v414 = vunpack.c.l.b16 %v342
      %v415 = vunpack.c.l.b16 %v343
      %v416 = vunpack.c.l.b16 %v344
      %v417 = vunpack.c.l.b16 %v345
      %v418 = vunpack.c.l.b16 %v346
      %v419 = vunpack.c.l.b16 %v347
      %v420 = vunpack.c.l.b16 %v348
      %v421 = vunpack.c.l.b16 %v349
      %v422 = vunpack.c.l.b16 %v350
      %v423 = vunpack.c.l.b16 %v351
      %v424 = vunpack.c.l.b16 %v352
      %v425 = vunpack.c.l.b16 %v353
      %v426 = vunpack.c.l.b16 %v354
      %v427 = vunpack.c.l.b16 %v355
      %v428 = vunpack.c.l.b16 %v356
      %v429 = vunpack.c.l.b16 %v357
      %v430 = vunpack.c.l.b16 %v358
      %v431 = vunpack.c.l.b16 %v359
      %v432 = vunpack.c.l.b16 %v360
      %v433 = vpack.c.b16 %v402, %v401
      %v434 = vpack.c.b16 %v404, %v403
      %v435 = vpack.c.b16 %v406, %v405
      %v436 = vpack.c.b16 %v408, %v407
      %v437 = vpack.c.b16 %v410, %v409
      %v438 = vpack.c.b16 %v412, %v411
      %v439 = vpack.c.b16 %v414, %v413
      %v440 = vpack.c.b16 %v416, %v415
      %v441 = vpack.c.b16 %v418, %v417
      %v442 = vpack.c.b16 %v420, %v419
      %v443 = vpack.c.b16 %v422, %v421
      %v444 = vpack.c.b16 %v424, %v423
      %v445 = vpack.c.b16 %v426, %v425
      %v446 = vpack.c.b16 %v428, %v427
      %v447 = vpack.c.b16 %v430, %v429
      %v448 = vpack.c.b16 %v432, %v431
      %v457 = vunpack.c.l.b16 %v361
      %v458 = vunpack.c.l.b16 %v362
      %v459 = vunpack.c.l.b16 %v363
      %v460 = vunpack.c.l.b16 %v364
      %v461 = vunpack.c.l.b16 %v365
      %v462 = vunpack.c.l.b16 %v366
      %v463 = vunpack.c.l.b16 %v367
      %v464 = vunpack.c.l.b16 %v368
      %v465 = vpack.c.b16 %v458, %v457
      %v466 = vpack.c.b16 %v460, %v459
      %v467 = vpack.c.b16 %v462, %v461
      %v468 = vpack.c.b16 %v464, %v463
      %vm473 = vcmask 523264
      %v475 = vsel %vm473, %v433, 0
      %v478 = vsel %vm473, %v434, 0
      %v481 = vsel %vm473, %v435, 0
      %v484 = vsel %vm473, %v436, 0
      %v487 = vsel %vm473, %v437, 0
      %v490 = vsel %vm473, %v438, 0
      %v493 = vsel %vm473, %v439, 0
      %v496 = vsel %vm473, %v440, 0
      %v499 = vsel %vm473, %v441, 0
      %v502 = vsel %vm473, %v442, 0
      %v505 = vsel %vm473, %v443, 0
      %v508 = vsel %vm473, %v444, 0
      %v511 = vsel %vm473, %v445, 0
      %v514 = vsel %vm473, %v446, 0
      %v517 = vsel %vm473, %v447, 0
      %v520 = vsel %vm473, %v448, 0
      %522 = vmatpush.bf16.msra.mxu0 0
      %523 = vmatpush.bf16.msra.mxu0 0
      %524 = vmatpush.bf16.msra.mxu0 0
      %525 = vmatpush.bf16.msra.mxu0 0
      %526 = vmatpush.bf16.msra.mxu0 %v468
      %527 = vmatpush.bf16.msra.mxu0 %v467
      %528 = vmatpush.bf16.msra.mxu0 %v466
      %529 = vmatpush.bf16.msra.mxu0 %v465
      %530 = vmatmul.bf16.gmra.mxu0 %v475
      %v531 = vpop.f32.mrf.mxu0
      %v532 = vadd.f32 0.0, %v531
      %v533 = vpop.f32.mrf.mxu0
      %v534 = vadd.f32 0.0, %v533
      %535 = vmatmul.bf16.gmra.mxu0 %v478
      %v536 = vpop.f32.mrf.mxu0
      %v537 = vadd.f32 0.0, %v536
      %v538 = vpop.f32.mrf.mxu0
      %v539 = vadd.f32 0.0, %v538
      %540 = vmatmul.bf16.gmra.mxu0 %v481
      %v541 = vpop.f32.mrf.mxu0
      %v542 = vadd.f32 0.0, %v541
      %v543 = vpop.f32.mrf.mxu0
      %v544 = vadd.f32 0.0, %v543
      %545 = vmatmul.bf16.gmra.mxu0 %v484
      %v546 = vpop.f32.mrf.mxu0
      %v547 = vadd.f32 0.0, %v546
      %v548 = vpop.f32.mrf.mxu0
      %v549 = vadd.f32 0.0, %v548
      %550 = vmatmul.bf16.gmra.mxu0 %v487
      %v551 = vpop.f32.mrf.mxu0
      %v552 = vadd.f32 0.0, %v551
      %v553 = vpop.f32.mrf.mxu0
      %v554 = vadd.f32 0.0, %v553
      %555 = vmatmul.bf16.gmra.mxu0 %v490
      %v556 = vpop.f32.mrf.mxu0
      %v557 = vadd.f32 0.0, %v556
      %v558 = vpop.f32.mrf.mxu0
      %v559 = vadd.f32 0.0, %v558
      %560 = vmatmul.bf16.gmra.mxu0 %v493
      %v561 = vpop.f32.mrf.mxu0
      %v562 = vadd.f32 0.0, %v561
      %v563 = vpop.f32.mrf.mxu0
      %v564 = vadd.f32 0.0, %v563
      %565 = vmatmul.bf16.gmra.mxu0 %v496
      %v566 = vpop.f32.mrf.mxu0
      %v567 = vadd.f32 0.0, %v566
      %v568 = vpop.f32.mrf.mxu0
      %v569 = vadd.f32 0.0, %v568
      %570 = vmatmul.bf16.gmra.mxu0 %v499
      %v571 = vpop.f32.mrf.mxu0
      %v572 = vadd.f32 0.0, %v571
      %v573 = vpop.f32.mrf.mxu0
      %v574 = vadd.f32 0.0, %v573
      %575 = vmatmul.bf16.gmra.mxu0 %v502
      %v576 = vpop.f32.mrf.mxu0
      %v577 = vadd.f32 0.0, %v576
      %v578 = vpop.f32.mrf.mxu0
      %v579 = vadd.f32 0.0, %v578
      %580 = vmatmul.bf16.gmra.mxu0 %v505
      %v581 = vpop.f32.mrf.mxu0
      %v582 = vadd.f32 0.0, %v581
      %v583 = vpop.f32.mrf.mxu0
      %v584 = vadd.f32 0.0, %v583
      %585 = vmatmul.bf16.gmra.mxu0 %v508
      %v586 = vpop.f32.mrf.mxu0
      %v587 = vadd.f32 0.0, %v586
      %v588 = vpop.f32.mrf.mxu0
      %v589 = vadd.f32 0.0, %v588
      %590 = vmatmul.bf16.gmra.mxu0 %v511
      %v591 = vpop.f32.mrf.mxu0
      %v592 = vadd.f32 0.0, %v591
      %v593 = vpop.f32.mrf.mxu0
      %v594 = vadd.f32 0.0, %v593
      %595 = vmatmul.bf16.gmra.mxu0 %v514
      %v596 = vpop.f32.mrf.mxu0
      %v597 = vadd.f32 0.0, %v596
      %v598 = vpop.f32.mrf.mxu0
      %v599 = vadd.f32 0.0, %v598
      %600 = vmatmul.bf16.gmra.mxu0 %v517
      %v601 = vpop.f32.mrf.mxu0
      %v602 = vadd.f32 0.0, %v601
      %v603 = vpop.f32.mrf.mxu0
      %v604 = vadd.f32 0.0, %v603
      %605 = vmatmul.bf16.gmra.mxu0 %v520
      %v606 = vpop.f32.mrf.mxu0
      %v607 = vadd.f32 0.0, %v606
      %v608 = vpop.f32.mrf.mxu0
      %v609 = vadd.f32 0.0, %v608
      %610 = vdwg.mxu0
      %v611 = vadd.f32 %v297, %v532
      %v612 = vadd.f32 %v298, %v534
      %v613 = vadd.f32 %v299, %v537
      %v614 = vadd.f32 %v300, %v539
      %v615 = vadd.f32 %v301, %v542
      %v616 = vadd.f32 %v302, %v544
      %v617 = vadd.f32 %v303, %v547
      %v618 = vadd.f32 %v304, %v549
      %v619 = vadd.f32 %v305, %v552
      %v620 = vadd.f32 %v306, %v554
      %v621 = vadd.f32 %v307, %v557
      %v622 = vadd.f32 %v308, %v559
      %v623 = vadd.f32 %v309, %v562
      %v624 = vadd.f32 %v310, %v564
      %v625 = vadd.f32 %v311, %v567
      %v626 = vadd.f32 %v312, %v569
      %v627 = vadd.f32 %v313, %v572
      %v628 = vadd.f32 %v314, %v574
      %v629 = vadd.f32 %v315, %v577
      %v630 = vadd.f32 %v316, %v579
      %v631 = vadd.f32 %v317, %v582
      %v632 = vadd.f32 %v318, %v584
      %v633 = vadd.f32 %v319, %v587
      %v634 = vadd.f32 %v320, %v589
      %v635 = vadd.f32 %v321, %v592
      %v636 = vadd.f32 %v322, %v594
      %v637 = vadd.f32 %v323, %v597
      %v638 = vadd.f32 %v324, %v599
      %v639 = vadd.f32 %v325, %v602
      %v640 = vadd.f32 %v326, %v604
      %v641 = vadd.f32 %v327, %v607
      %v642 = vadd.f32 %v328, %v609
      %643 = vst.msk [vmem:[#allocation2] sm:$0xff] %vm473, %v611
      %644 = vst.msk [vmem:[#allocation2 + $0x8] sm:$0xff] %vm473, %v612
      %645 = vst.msk [vmem:[#allocation2 + $0x10] sm:$0xff] %vm473, %v613
      %646 = vst.msk [vmem:[#allocation2 + $0x18] sm:$0xff] %vm473, %v614
      %647 = vst.msk [vmem:[#allocation2 + $0x20] sm:$0xff] %vm473, %v615
      %648 = vst.msk [vmem:[#allocation2 + $0x28] sm:$0xff] %vm473, %v616
      %649 = vst.msk [vmem:[#allocation2 + $0x30] sm:$0xff] %vm473, %v617
      %650 = vst.msk [vmem:[#allocation2 + $0x38] sm:$0xff] %vm473, %v618
      %651 = vst.msk [vmem:[#allocation2 + $0x40] sm:$0xff] %vm473, %v619
      %652 = vst.msk [vmem:[#allocation2 + $0x48] sm:$0xff] %vm473, %v620
      %653 = vst.msk [vmem:[#allocation2 + $0x50] sm:$0xff] %vm473, %v621
      %654 = vst.msk [vmem:[#allocation2 + $0x58] sm:$0xff] %vm473, %v622
      %655 = vst.msk [vmem:[#allocation2 + $0x60] sm:$0xff] %vm473, %v623
      %656 = vst.msk [vmem:[#allocation2 + $0x68] sm:$0xff] %vm473, %v624
      %657 = vst.msk [vmem:[#allocation2 + $0x70] sm:$0xff] %vm473, %v625
      %658 = vst.msk [vmem:[#allocation2 + $0x78] sm:$0xff] %vm473, %v626
      %659 = vst.msk [vmem:[#allocation2 + $0x80] sm:$0xff] %vm473, %v627
      %660 = vst.msk [vmem:[#allocation2 + $0x88] sm:$0xff] %vm473, %v628
      %661 = vst.msk [vmem:[#allocation2 + $0x90] sm:$0xff] %vm473, %v629
      %662 = vst.msk [vmem:[#allocation2 + $0x98] sm:$0xff] %vm473, %v630
      %663 = vst.msk [vmem:[#allocation2 + $0xa0] sm:$0xff] %vm473, %v631
      %664 = vst.msk [vmem:[#allocation2 + $0xa8] sm:$0xff] %vm473, %v632
      %665 = vst.msk [vmem:[#allocation2 + $0xb0] sm:$0xff] %vm473, %v633
      %666 = vst.msk [vmem:[#allocation2 + $0xb8] sm:$0xff] %vm473, %v634
      %667 = vst.msk [vmem:[#allocation2 + $0xc0] sm:$0xff] %vm473, %v635
      %668 = vst.msk [vmem:[#allocation2 + $0xc8] sm:$0xff] %vm473, %v636
      %669 = vst.msk [vmem:[#allocation2 + $0xd0] sm:$0xff] %vm473, %v637
      %670 = vst.msk [vmem:[#allocation2 + $0xd8] sm:$0xff] %vm473, %v638
      %671 = vst.msk [vmem:[#allocation2 + $0xe0] sm:$0xff] %vm473, %v639
      %672 = vst.msk [vmem:[#allocation2 + $0xe8] sm:$0xff] %vm473, %v640
      %673 = vst.msk [vmem:[#allocation2 + $0xf0] sm:$0xff] %vm473, %v641
      %674 = vst.msk [vmem:[#allocation2 + $0xf8] sm:$0xff] %vm473, %v642
      // Predicated region
      $region37: #{discriminator_forward.5} parent=31 // pred_check
        %p675 = pneg %p260
      $region38: #{discriminator_forward.5} parent=31 // pred_check_branch
        %677 = sbr.rel (%p675) target = $region40
      $region39: #{discriminator_forward.5} parent=31 // pred_region
        %v678 = vld [vmem:[#allocation2] sm:$0xff]
        %v679 = vld [vmem:[#allocation2 + $0x8] sm:$0xff]
        %v680 = vld [vmem:[#allocation2 + $0x10] sm:$0xff]
        %v681 = vld [vmem:[#allocation2 + $0x18] sm:$0xff]
        %v682 = vld [vmem:[#allocation2 + $0x20] sm:$0xff]
        %v683 = vld [vmem:[#allocation2 + $0x28] sm:$0xff]
        %v684 = vld [vmem:[#allocation2 + $0x30] sm:$0xff]
        %v685 = vld [vmem:[#allocation2 + $0x38] sm:$0xff]
        %v686 = vld [vmem:[#allocation2 + $0x40] sm:$0xff]
        %v687 = vld [vmem:[#allocation2 + $0x48] sm:$0xff]
        %v688 = vld [vmem:[#allocation2 + $0x50] sm:$0xff]
        %v689 = vld [vmem:[#allocation2 + $0x58] sm:$0xff]
        %v690 = vld [vmem:[#allocation2 + $0x60] sm:$0xff]
        %v691 = vld [vmem:[#allocation2 + $0x68] sm:$0xff]
        %v692 = vld [vmem:[#allocation2 + $0x70] sm:$0xff]
        %v693 = vld [vmem:[#allocation2 + $0x78] sm:$0xff]
        %v694 = vld [vmem:[#allocation2 + $0x80] sm:$0xff]
        %v695 = vld [vmem:[#allocation2 + $0x88] sm:$0xff]
        %v696 = vld [vmem:[#allocation2 + $0x90] sm:$0xff]
        %v697 = vld [vmem:[#allocation2 + $0x98] sm:$0xff]
        %v698 = vld [vmem:[#allocation2 + $0xa0] sm:$0xff]
        %v699 = vld [vmem:[#allocation2 + $0xa8] sm:$0xff]
        %v700 = vld [vmem:[#allocation2 + $0xb0] sm:$0xff]
        %v701 = vld [vmem:[#allocation2 + $0xb8] sm:$0xff]
        %v702 = vld [vmem:[#allocation2 + $0xc0] sm:$0xff]
        %v703 = vld [vmem:[#allocation2 + $0xc8] sm:$0xff]
        %v704 = vld [vmem:[#allocation2 + $0xd0] sm:$0xff]
        %v705 = vld [vmem:[#allocation2 + $0xd8] sm:$0xff]
        %v706 = vld [vmem:[#allocation2 + $0xe0] sm:$0xff]
        %v707 = vld [vmem:[#allocation2 + $0xe8] sm:$0xff]
        %v708 = vld [vmem:[#allocation2 + $0xf0] sm:$0xff]
        %v709 = vld [vmem:[#allocation2 + $0xf8] sm:$0xff]
        %v710 = vld [vmem:[%s249] sm:$0x1]
        %v712 = vperm.slane %v710, 0
        %v714 = vadd.f32 %v678, %v712
        %v715 = vadd.f32 %v679, %v712
        %v716 = vadd.f32 %v680, %v712
        %v717 = vadd.f32 %v681, %v712
        %v718 = vadd.f32 %v682, %v712
        %v719 = vadd.f32 %v683, %v712
        %v720 = vadd.f32 %v684, %v712
        %v721 = vadd.f32 %v685, %v712
        %v722 = vadd.f32 %v686, %v712
        %v723 = vadd.f32 %v687, %v712
        %v724 = vadd.f32 %v688, %v712
        %v725 = vadd.f32 %v689, %v712
        %v726 = vadd.f32 %v690, %v712
        %v727 = vadd.f32 %v691, %v712
        %v728 = vadd.f32 %v692, %v712
        %v729 = vadd.f32 %v693, %v712
        %v730 = vadd.f32 %v694, %v712
        %v731 = vadd.f32 %v695, %v712
        %v732 = vadd.f32 %v696, %v712
        %v733 = vadd.f32 %v697, %v712
        %v734 = vadd.f32 %v698, %v712
        %v735 = vadd.f32 %v699, %v712
        %v736 = vadd.f32 %v700, %v712
        %v737 = vadd.f32 %v701, %v712
        %v738 = vadd.f32 %v702, %v712
        %v739 = vadd.f32 %v703, %v712
        %v740 = vadd.f32 %v704, %v712
        %v741 = vadd.f32 %v705, %v712
        %v742 = vadd.f32 %v706, %v712
        %v743 = vadd.f32 %v707, %v712
        %v744 = vadd.f32 %v708, %v712
        %v745 = vadd.f32 %v709, %v712
        %vm746 = vcmp.gt.f32.partialorder %v714, 0.0
        %vm747 = vcmp.gt.f32.partialorder %v715, 0.0
        %vm748 = vcmp.gt.f32.partialorder %v716, 0.0
        %vm749 = vcmp.gt.f32.partialorder %v717, 0.0
        %vm750 = vcmp.gt.f32.partialorder %v718, 0.0
        %vm751 = vcmp.gt.f32.partialorder %v719, 0.0
        %vm752 = vcmp.gt.f32.partialorder %v720, 0.0
        %vm753 = vcmp.gt.f32.partialorder %v721, 0.0
        %vm754 = vcmp.gt.f32.partialorder %v722, 0.0
        %vm755 = vcmp.gt.f32.partialorder %v723, 0.0
        %vm756 = vcmp.gt.f32.partialorder %v724, 0.0
        %vm757 = vcmp.gt.f32.partialorder %v725, 0.0
        %vm758 = vcmp.gt.f32.partialorder %v726, 0.0
        %vm759 = vcmp.gt.f32.partialorder %v727, 0.0
        %vm760 = vcmp.gt.f32.partialorder %v728, 0.0
        %vm761 = vcmp.gt.f32.partialorder %v729, 0.0
        %vm762 = vcmp.gt.f32.partialorder %v730, 0.0
        %vm763 = vcmp.gt.f32.partialorder %v731, 0.0
        %vm764 = vcmp.gt.f32.partialorder %v732, 0.0
        %vm765 = vcmp.gt.f32.partialorder %v733, 0.0
        %vm766 = vcmp.gt.f32.partialorder %v734, 0.0
        %vm767 = vcmp.gt.f32.partialorder %v735, 0.0
        %vm768 = vcmp.gt.f32.partialorder %v736, 0.0
        %vm769 = vcmp.gt.f32.partialorder %v737, 0.0
        %vm770 = vcmp.gt.f32.partialorder %v738, 0.0
        %vm771 = vcmp.gt.f32.partialorder %v739, 0.0
        %vm772 = vcmp.gt.f32.partialorder %v740, 0.0
        %vm773 = vcmp.gt.f32.partialorder %v741, 0.0
        %vm774 = vcmp.gt.f32.partialorder %v742, 0.0
        %vm775 = vcmp.gt.f32.partialorder %v743, 0.0
        %vm776 = vcmp.gt.f32.partialorder %v744, 0.0
        %vm777 = vcmp.gt.f32.partialorder %v745, 0.0
        %v778 = vmul.f32 %v714, 0.2
        %v779 = vmul.f32 %v715, 0.2
        %v780 = vmul.f32 %v716, 0.2
        %v781 = vmul.f32 %v717, 0.2
        %v782 = vmul.f32 %v718, 0.2
        %v783 = vmul.f32 %v719, 0.2
        %v784 = vmul.f32 %v720, 0.2
        %v785 = vmul.f32 %v721, 0.2
        %v786 = vmul.f32 %v722, 0.2
        %v787 = vmul.f32 %v723, 0.2
        %v788 = vmul.f32 %v724, 0.2
        %v789 = vmul.f32 %v725, 0.2
        %v790 = vmul.f32 %v726, 0.2
        %v791 = vmul.f32 %v727, 0.2
        %v792 = vmul.f32 %v728, 0.2
        %v793 = vmul.f32 %v729, 0.2
        %v794 = vmul.f32 %v730, 0.2
        %v795 = vmul.f32 %v731, 0.2
        %v796 = vmul.f32 %v732, 0.2
        %v797 = vmul.f32 %v733, 0.2
        %v798 = vmul.f32 %v734, 0.2
        %v799 = vmul.f32 %v735, 0.2
        %v800 = vmul.f32 %v736, 0.2
        %v801 = vmul.f32 %v737, 0.2
        %v802 = vmul.f32 %v738, 0.2
        %v803 = vmul.f32 %v739, 0.2
        %v804 = vmul.f32 %v740, 0.2
        %v805 = vmul.f32 %v741, 0.2
        %v806 = vmul.f32 %v742, 0.2
        %v807 = vmul.f32 %v743, 0.2
        %v808 = vmul.f32 %v744, 0.2
        %v809 = vmul.f32 %v745, 0.2
        %v810 = vsel %vm746, %v714, %v778
        %v811 = vsel %vm747, %v715, %v779
        %v812 = vsel %vm748, %v716, %v780
        %v813 = vsel %vm749, %v717, %v781
        %v814 = vsel %vm750, %v718, %v782
        %v815 = vsel %vm751, %v719, %v783
        %v816 = vsel %vm752, %v720, %v784
        %v817 = vsel %vm753, %v721, %v785
        %v818 = vsel %vm754, %v722, %v786
        %v819 = vsel %vm755, %v723, %v787
        %v820 = vsel %vm756, %v724, %v788
        %v821 = vsel %vm757, %v725, %v789
        %v822 = vsel %vm758, %v726, %v790
        %v823 = vsel %vm759, %v727, %v791
        %v824 = vsel %vm760, %v728, %v792
        %v825 = vsel %vm761, %v729, %v793
        %v826 = vsel %vm762, %v730, %v794
        %v827 = vsel %vm763, %v731, %v795
        %v828 = vsel %vm764, %v732, %v796
        %v829 = vsel %vm765, %v733, %v797
        %v830 = vsel %vm766, %v734, %v798
        %v831 = vsel %vm767, %v735, %v799
        %v832 = vsel %vm768, %v736, %v800
        %v833 = vsel %vm769, %v737, %v801
        %v834 = vsel %vm770, %v738, %v802
        %v835 = vsel %vm771, %v739, %v803
        %v836 = vsel %vm772, %v740, %v804
        %v837 = vsel %vm773, %v741, %v805
        %v838 = vsel %vm774, %v742, %v806
        %v839 = vsel %vm775, %v743, %v807
        %v840 = vsel %vm776, %v744, %v808
        %v841 = vsel %vm777, %v745, %v809
        %842 = vst.msk [vmem:[%s257] sm:$0xff] %vm473, %v810
        %843 = vst.msk [vmem:[%s257 + $0x8] sm:$0xff] %vm473, %v811
        %844 = vst.msk [vmem:[%s257 + $0x10] sm:$0xff] %vm473, %v812
        %845 = vst.msk [vmem:[%s257 + $0x18] sm:$0xff] %vm473, %v813
        %846 = vst.msk [vmem:[%s257 + $0x20] sm:$0xff] %vm473, %v814
        %847 = vst.msk [vmem:[%s257 + $0x28] sm:$0xff] %vm473, %v815
        %848 = vst.msk [vmem:[%s257 + $0x30] sm:$0xff] %vm473, %v816
        %849 = vst.msk [vmem:[%s257 + $0x38] sm:$0xff] %vm473, %v817
        %850 = vst.msk [vmem:[%s257 + $0x40] sm:$0xff] %vm473, %v818
        %851 = vst.msk [vmem:[%s257 + $0x48] sm:$0xff] %vm473, %v819
        %852 = vst.msk [vmem:[%s257 + $0x50] sm:$0xff] %vm473, %v820
        %853 = vst.msk [vmem:[%s257 + $0x58] sm:$0xff] %vm473, %v821
        %854 = vst.msk [vmem:[%s257 + $0x60] sm:$0xff] %vm473, %v822
        %855 = vst.msk [vmem:[%s257 + $0x68] sm:$0xff] %vm473, %v823
        %856 = vst.msk [vmem:[%s257 + $0x70] sm:$0xff] %vm473, %v824
        %857 = vst.msk [vmem:[%s257 + $0x78] sm:$0xff] %vm473, %v825
        %858 = vst.msk [vmem:[%s257 + $0x80] sm:$0xff] %vm473, %v826
        %859 = vst.msk [vmem:[%s257 + $0x88] sm:$0xff] %vm473, %v827
        %860 = vst.msk [vmem:[%s257 + $0x90] sm:$0xff] %vm473, %v828
        %861 = vst.msk [vmem:[%s257 + $0x98] sm:$0xff] %vm473, %v829
        %862 = vst.msk [vmem:[%s257 + $0xa0] sm:$0xff] %vm473, %v830
        %863 = vst.msk [vmem:[%s257 + $0xa8] sm:$0xff] %vm473, %v831
        %864 = vst.msk [vmem:[%s257 + $0xb0] sm:$0xff] %vm473, %v832
        %865 = vst.msk [vmem:[%s257 + $0xb8] sm:$0xff] %vm473, %v833
        %866 = vst.msk [vmem:[%s257 + $0xc0] sm:$0xff] %vm473, %v834
        %867 = vst.msk [vmem:[%s257 + $0xc8] sm:$0xff] %vm473, %v835
        %868 = vst.msk [vmem:[%s257 + $0xd0] sm:$0xff] %vm473, %v836
        %869 = vst.msk [vmem:[%s257 + $0xd8] sm:$0xff] %vm473, %v837
        %870 = vst.msk [vmem:[%s257 + $0xe0] sm:$0xff] %vm473, %v838
        %871 = vst.msk [vmem:[%s257 + $0xe8] sm:$0xff] %vm473, %v839
        %872 = vst.msk [vmem:[%s257 + $0xf0] sm:$0xff] %vm473, %v840
        %873 = vst.msk [vmem:[%s257 + $0xf8] sm:$0xff] %vm473, %v841
      $region40: #{discriminator_forward.5} parent=31 // pred_fallthru
        _
      %s874 = smul.u32 32, %s19
      %p875 = scmp.lt.s32.totalorder %s874, 63
      %s876 = scalar_select %p875, %s874, 63
      %p877 = scmp.lt.s32.totalorder %s20, 0
      %s878 = scalar_select %p877, %s20, 0
      %s879 = sadd.s32 %s878, %s876
      %s880 = smul.addr %s879, 8
      %s881 = scalar_lea.vmem %s3, %s880
      // Predicated region
      $region41: #{discriminator_forward.5} parent=31 // pred_check
        %p882 = pneg %p135
      $region42: #{discriminator_forward.5} parent=31 // pred_check_branch
        %884 = sbr.rel (%p882) target = $region44
      $region43: #{discriminator_forward.5} parent=31 // pred_region
        %s885 = smul.u32 32, %s19
      $region44: #{discriminator_forward.5} parent=31 // pred_fallthru
        _
    $region32: #{discriminator_forward.5} parent=5 // pred_fallthru
      _
    %p886 = scmp.le.s32.totalorder 2, %s9
    // Predicated region
    $region45: #{discriminator_forward.5} parent=5 // pred_check
      %p887 = pneg %p886
    $region46: #{discriminator_forward.5} parent=5 // pred_check_branch
      %889 = sbr.rel (%p887) target = $region48
    $region47: #{discriminator_forward.5} parent=5 // pred_region
      %s890 = ssub.s32 %s9, 2
      // Predicated region
      $region49: #{discriminator_forward.5} parent=47 // pred_check
        %p891 = pneg %p141
      $region50: #{discriminator_forward.5} parent=47 // pred_check_branch
        %893 = sbr.rel (%p891) target = $region52
      $region51: #{discriminator_forward.5} parent=47 // pred_region
        %s894 = smul.u32 32, %s22
        %p895 = scmp.lt.s32.totalorder %s894, 63
        %s896 = scalar_select %p895, %s894, 63
        %p897 = scmp.lt.s32.totalorder %s23, 0
        %s898 = scalar_select %p897, %s23, 0
        %s899 = sadd.s32 %s898, %s896
        %s900 = smul.addr %s899, 8
        %s901 = scalar_lea.vmem %s3, %s900
      $region52: #{discriminator_forward.5} parent=47 // pred_fallthru
        _
    $region48: #{discriminator_forward.5} parent=5 // pred_fallthru
      _
  $region6: #{discriminator_forward.5} parent=0 // loop_footer
    %s13 = sadd.s32 1, %s9
  $region7: #{discriminator_forward.5} parent=0 // loop_footer_branch
    %8 = sbr.rel target = $region3
  $region8: #{discriminator_forward.5} parent=0 // loop_exit
    _

// kernel: discriminator_forward.6
$region0: #{discriminator_forward.6}
  #allocation0 [shape = 'u32[]', space=smem, size = 0x4, offset = 0x4, fixed_abs, tag = 'smem constant byte address 0x4 - core index']
  #allocation1 [shape = 'u32[72,128]{1,0:T(1,128)}', space=vmem, size = 0x9000, scoped, tag = 'internal scratch']
  #allocation2 [shape = 'f32[128,128]{1,0:T(8,128)}', space=vmem, size = 0x10000, scoped, tag = 'scratch operand']
  %s0 = inlined_call_operand.vmem [shape: bf16[128,1024], index: 0, kind: input, shape index: {}]
  %s1 = inlined_call_operand.vmem [shape: bf16[1024,128], index: 1, kind: input, shape index: {}]
  %s2 = inlined_call_operand.vmem [shape: f32[1,128], index: 2, kind: input, shape index: {}]
  %s3 = inlined_call_operand.vmem [shape: f32[128,128], index: 3, kind: output, shape index: {}]
  %s4 = sld [smem:[#allocation0]]
  $region76: #{discriminator_forward.6} parent=0
    _
  %s6 = ssub.s32 1, %s4
  %s7 = scalar_select 0, %s6, %s4
  $region1: #{discriminator_forward.6} parent=0
    #allocation3 [shape = 'u8[262144]{0}', space=vmem, size = 0x40000, scoped, tag = 'input window, operand 0']
    loop: start=0, step=1, limit=4
    $region2: #{discriminator_forward.6} parent=1 // loop_pre_header
      _
    $region3: #{discriminator_forward.6} parent=1 // loop_header
      %s9 = sphi 0, %s13
      %p10 = scmp.ge.s32.totalorder %s9, 4
      %s16 = sphi 0, %s35
      %s17 = sphi 0, %s31
      %s18 = sphi 0, %s27
      %s19 = sphi 0, %s16
      %s20 = sphi 0, %s17
      %s21 = sphi 0, %s18
      %s22 = sphi 0, %s19
      %s23 = sphi 0, %s20
      %s24 = sphi 0, %s21
      %s40 = sphi 0, %s42
      %s43 = sphi 0, %s40
      %s44 = sphi 0, %s43
      %s60 = sphi 0, %s44
      %s68 = sphi 0, %s70
      %s71 = sphi 0, %s68
      %s72 = sphi 0, %s71
      %s88 = sphi 0, %s72
      %s94 = sphi 0, %s96
      %s97 = sphi 0, %s94
      %s98 = sphi 0, %s97
      %s114 = sphi 0, %s98
      %s122 = sphi 0, %s124
      %s125 = sphi 0, %s122
      %s126 = sphi 0, %s125
      %s142 = sphi 0, %s126
    $region4: #{discriminator_forward.6} parent=1 // loop_header_branch
      %12 = sbr.rel (%p10) target = $region8
    $region5: #{discriminator_forward.6} parent=1 // loop_body
      %s14 = ssub.s32 %s9, 1
      %s15 = ssub.s32 %s9, 2
      %s25 = sadd.s32 1, %s18
      %p26 = scmp.ge.s32.totalorder %s25, 2
      %s27 = scalar_select %p26, 0, %s25
      %s28 = sadd.s32 1, %s17
      %s29 = scalar_select %p26, %s28, %s17
      %p30 = scmp.ge.s32.totalorder %s29, 1
      %s31 = scalar_select %p30, 0, %s29
      %s32 = sadd.s32 1, %s16
      %s33 = scalar_select %p30, %s32, %s16
      %p34 = scmp.ge.s32.totalorder %s33, 1
      %s35 = scalar_select %p34, 0, %s33
      %s36 = ssub.s32 %s16, %s35
      %s37 = ssub.s32 %s18, %s27
      %s38 = sor.u32 %s36, %s37
      %p39 = scmp.eq.s32.totalorder %s38, 0
      %s41 = sadd.s32 %s40, 1
      %s42 = scalar_select %p39, %s40, %s41
      %p45 = pneg %p39
      %p46 = scmp.eq.s32.totalorder %s9, 1
      %p47 = por %p45, %p46
      %p48 = scmp.ne.s32.totalorder %s40, %s43
      %p49 = scmp.eq.s32.totalorder %s9, 0
      %p50 = por %p48, %p49
      %p51 = scmp.ne.s32.totalorder %s40, %s43
      %p52 = scmp.eq.s32.totalorder %s14, 1
      %p53 = por %p51, %p52
      %p54 = scmp.ne.s32.totalorder %s43, %s44
      %p55 = scmp.eq.s32.totalorder %s14, 0
      %p56 = por %p54, %p55
      %p57 = scmp.ne.s32.totalorder %s43, %s44
      %p58 = scmp.eq.s32.totalorder %s15, 1
      %p59 = por %p57, %p58
      %p61 = scmp.ne.s32.totalorder %s44, %s60
      %p62 = scmp.eq.s32.totalorder %s15, 0
      %p63 = por %p61, %p62
      %s64 = ssub.s32 %s18, %s27
      %s65 = ssub.s32 %s17, %s31
      %s66 = sor.u32 %s64, %s65
      %p67 = scmp.eq.s32.totalorder %s66, 0
      %s69 = sadd.s32 %s68, 1
      %s70 = scalar_select %p67, %s68, %s69
      %p73 = pneg %p67
      %p74 = scmp.eq.s32.totalorder %s9, 1
      %p75 = por %p73, %p74
      %p76 = scmp.ne.s32.totalorder %s68, %s71
      %p77 = scmp.eq.s32.totalorder %s9, 0
      %p78 = por %p76, %p77
      %p79 = scmp.ne.s32.totalorder %s68, %s71
      %p80 = scmp.eq.s32.totalorder %s14, 1
      %p81 = por %p79, %p80
      %p82 = scmp.ne.s32.totalorder %s71, %s72
      %p83 = scmp.eq.s32.totalorder %s14, 0
      %p84 = por %p82, %p83
      %p85 = scmp.ne.s32.totalorder %s71, %s72
      %p86 = scmp.eq.s32.totalorder %s15, 1
      %p87 = por %p85, %p86
      %p89 = scmp.ne.s32.totalorder %s72, %s88
      %p90 = scmp.eq.s32.totalorder %s15, 0
      %p91 = por %p89, %p90
      %s92 = ssub.s32 %s17, %s31
      %p93 = scmp.eq.s32.totalorder %s92, 0
      %s95 = sadd.s32 %s94, 1
      %s96 = scalar_select %p93, %s94, %s95
      %p99 = pneg %p93
      %p100 = scmp.eq.s32.totalorder %s9, 1
      %p101 = por %p99, %p100
      %p102 = scmp.ne.s32.totalorder %s94, %s97
      %p103 = scmp.eq.s32.totalorder %s9, 0
      %p104 = por %p102, %p103
      %p105 = scmp.ne.s32.totalorder %s94, %s97
      %p106 = scmp.eq.s32.totalorder %s14, 1
      %p107 = por %p105, %p106
      %p108 = scmp.ne.s32.totalorder %s97, %s98
      %p109 = scmp.eq.s32.totalorder %s14, 0
      %p110 = por %p108, %p109
      %p111 = scmp.ne.s32.totalorder %s97, %s98
      %p112 = scmp.eq.s32.totalorder %s15, 1
      %p113 = por %p111, %p112
      %p115 = scmp.ne.s32.totalorder %s98, %s114
      %p116 = scmp.eq.s32.totalorder %s15, 0
      %p117 = por %p115, %p116
      %s118 = ssub.s32 %s16, %s35
      %s119 = ssub.s32 %s17, %s31
      %s120 = sor.u32 %s118, %s119
      %p121 = scmp.eq.s32.totalorder %s120, 0
      %s123 = sadd.s32 %s122, 1
      %s124 = scalar_select %p121, %s122, %s123
      %p127 = pneg %p121
      %p128 = scmp.eq.s32.totalorder %s9, 1
      %p129 = por %p127, %p128
      %p130 = scmp.ne.s32.totalorder %s122, %s125
      %p131 = scmp.eq.s32.totalorder %s9, 0
      %p132 = por %p130, %p131
      %p133 = scmp.ne.s32.totalorder %s122, %s125
      %p134 = scmp.eq.s32.totalorder %s14, 1
      %p135 = por %p133, %p134
      %p136 = scmp.ne.s32.totalorder %s125, %s126
      %p137 = scmp.eq.s32.totalorder %s14, 0
      %p138 = por %p136, %p137
      %p139 = scmp.ne.s32.totalorder %s125, %s126
      %p140 = scmp.eq.s32.totalorder %s15, 1
      %p141 = por %p139, %p140
      %p143 = scmp.ne.s32.totalorder %s126, %s142
      %p144 = scmp.eq.s32.totalorder %s15, 0
      %p145 = por %p143, %p144
      %p146 = scmp.le.s32.totalorder 1, %s9
      %p147 = scmp.lt.s32.totalorder %s9, 3
      %p148 = pnand %p146, %p147
      %p149 = pneg %p148
      // Predicated region
      $region9: #{discriminator_forward.6} parent=5 // pred_check
        _
      $region10: #{discriminator_forward.6} parent=5 // pred_check_branch
        %151 = sbr.rel (%p148) target = $region12
      $region11: #{discriminator_forward.6} parent=5 // pred_region
        %s152 = ssub.s32 %s9, 1
        // Predicated region
        $region13: #{discriminator_forward.6} parent=11 // pred_check
          %p153 = pneg %p110
        $region14: #{discriminator_forward.6} parent=11 // pred_check_branch
          %155 = sbr.rel (%p153) target = $region16
        $region15: #{discriminator_forward.6} parent=11 // pred_region
          %p156 = scmp.lt.s32.totalorder %s20, 0
          %s157 = scalar_select %p156, %s20, 0
          %s158 = scalar_lea.vmem %s2, %s157
        $region16: #{discriminator_forward.6} parent=11 // pred_fallthru
          _
      $region12: #{discriminator_forward.6} parent=5 // pred_fallthru
        _
      %p159 = scmp.lt.s32.totalorder %s9, 2
      // Predicated region
      $region17: #{discriminator_forward.6} parent=5 // pred_check
        %p160 = pneg %p159
      $region18: #{discriminator_forward.6} parent=5 // pred_check_branch
        %162 = sbr.rel (%p160) target = $region20
      $region19: #{discriminator_forward.6} parent=5 // pred_region
        // Predicated region
        $region21: #{discriminator_forward.6} parent=19 // pred_check
          %p163 = pneg %p50
        $region22: #{discriminator_forward.6} parent=19 // pred_check_branch
          %165 = sbr.rel (%p163) target = $region24
        $region23: #{discriminator_forward.6} parent=19 // pred_region
          %s166 = sand.u32 %s40, 1
          %s167 = sand.u32 %s40, 1
          %s168 = smul.addr %s167, 256
          %s169 = scalar_lea.vmem [#allocation3], %s168
          %s170 = smul.u32 16, %s16
          %s171 = smul.u32 4, %s18
          %s172 = smul.addr %s170, 8
          %s173 = sadd.s32 %s171, %s172
          %s174 = smul.addr %s173, 4
          %s175 = scalar_lea.vmem %s0, %s174
          // Predicated region
          $region25: #{discriminator_forward.6} parent=23 // pred_check
            _
          $region26: #{discriminator_forward.6} parent=23 // pred_check_branch
            %177 = sbr.rel (0) target = $region28
          $region27: #{discriminator_forward.6} parent=23 // pred_region
            // Predicated region
            $region29: #{discriminator_forward.6} parent=27 // pred_check
              _
            $region30: #{discriminator_forward.6} parent=27 // pred_check_branch
              %179 = sbr.rel (0) target = $region32
            $region31: #{discriminator_forward.6} parent=27 // pred_region
              loop: start=0, step=1, limit=1
              $region33: #{discriminator_forward.6} parent=31 // loop_pre_header
                _
              $region34: #{discriminator_forward.6} parent=31 // loop_header
                %s181 = sphi 0, %s185
                %p182 = scmp.ge.s32.totalorder %s181, 1
                %s186 = sphi %s175, %s175
                %s187 = sphi %s169, %s169
              $region35: #{discriminator_forward.6} parent=31 // loop_header_branch
                %184 = sbr.rel (%p182) target = $region39
              $region36: #{discriminator_forward.6} parent=31 // loop_body
                %v188 = vld [vmem:[%s186] sm:$0xff]
                %189 = vst [vmem:[%s187] sm:$0xff] %v188
                %v190 = vld [vmem:[%s186 + $0x8] sm:$0xff]
                %191 = vst [vmem:[%s187 + $0x8] sm:$0xff] %v190
                %v192 = vld [vmem:[%s186 + $0x20] sm:$0xff]
                %193 = vst [vmem:[%s187 + $0x10] sm:$0xff] %v192
                %v194 = vld [vmem:[%s186 + $0x28] sm:$0xff]
                %195 = vst [vmem:[%s187 + $0x18] sm:$0xff] %v194
                %v196 = vld [vmem:[%s186 + $0x40] sm:$0xff]
                %197 = vst [vmem:[%s187 + $0x20] sm:$0xff] %v196
                %v198 = vld [vmem:[%s186 + $0x48] sm:$0xff]
                %199 = vst [vmem:[%s187 + $0x28] sm:$0xff] %v198
                %v200 = vld [vmem:[%s186 + $0x60] sm:$0xff]
                %201 = vst [vmem:[%s187 + $0x30] sm:$0xff] %v200
                %v202 = vld [vmem:[%s186 + $0x68] sm:$0xff]
                %203 = vst [vmem:[%s187 + $0x38] sm:$0xff] %v202
                %v204 = vld [vmem:[%s186 + $0x80] sm:$0xff]
                %205 = vst [vmem:[%s187 + $0x40] sm:$0xff] %v204
                %v206 = vld [vmem:[%s186 + $0x88] sm:$0xff]
                %207 = vst [vmem:[%s187 + $0x48] sm:$0xff] %v206
                %v208 = vld [vmem:[%s186 + $0xa0] sm:$0xff]
                %209 = vst [vmem:[%s187 + $0x50] sm:$0xff] %v208
                %v210 = vld [vmem:[%s186 + $0xa8] sm:$0xff]
                %211 = vst [vmem:[%s187 + $0x58] sm:$0xff] %v210
                %v212 = vld [vmem:[%s186 + $0xc0] sm:$0xff]
                %213 = vst [vmem:[%s187 + $0x60] sm:$0xff] %v212
                %v214 = vld [vmem:[%s186 + $0xc8] sm:$0xff]
                %215 = vst [vmem:[%s187 + $0x68] sm:$0xff] %v214
                %v216 = vld [vmem:[%s186 + $0xe0] sm:$0xff]
                %217 = vst [vmem:[%s187 + $0x70] sm:$0xff] %v216
                %v218 = vld [vmem:[%s186 + $0xe8] sm:$0xff]
                %219 = vst [vmem:[%s187 + $0x78] sm:$0xff] %v218
                %v220 = vld [vmem:[%s186 + $0x100] sm:$0xff]
                %221 = vst [vmem:[%s187 + $0x80] sm:$0xff] %v220
                %v222 = vld [vmem:[%s186 + $0x108] sm:$0xff]
                %223 = vst [vmem:[%s187 + $0x88] sm:$0xff] %v222
                %v224 = vld [vmem:[%s186 + $0x120] sm:$0xff]
                %225 = vst [vmem:[%s187 + $0x90] sm:$0xff] %v224
                %v226 = vld [vmem:[%s186 + $0x128] sm:$0xff]
                %227 = vst [vmem:[%s187 + $0x98] sm:$0xff] %v226
                %v228 = vld [vmem:[%s186 + $0x140] sm:$0xff]
                %229 = vst [vmem:[%s187 + $0xa0] sm:$0xff] %v228
                %v230 = vld [vmem:[%s186 + $0x148] sm:$0xff]
                %231 = vst [vmem:[%s187 + $0xa8] sm:$0xff] %v230
                %v232 = vld [vmem:[%s186 + $0x160] sm:$0xff]
                %233 = vst [vmem:[%s187 + $0xb0] sm:$0xff] %v232
                %v234 = vld [vmem:[%s186 + $0x168] sm:$0xff]
                %235 = vst [vmem:[%s187 + $0xb8] sm:$0xff] %v234
                %v236 = vld [vmem:[%s186 + $0x180] sm:$0xff]
                %237 = vst [vmem:[%s187 + $0xc0] sm:$0xff] %v236
                %v238 = vld [vmem:[%s186 + $0x188] sm:$0xff]
                %239 = vst [vmem:[%s187 + $0xc8] sm:$0xff] %v238
                %v240 = vld [vmem:[%s186 + $0x1a0] sm:$0xff]
                %241 = vst [vmem:[%s187 + $0xd0] sm:$0xff] %v240
                %v242 = vld [vmem:[%s186 + $0x1a8] sm:$0xff]
                %243 = vst [vmem:[%s187 + $0xd8] sm:$0xff] %v242
                %v244 = vld [vmem:[%s186 + $0x1c0] sm:$0xff]
                %245 = vst [vmem:[%s187 + $0xe0] sm:$0xff] %v244
                %v246 = vld [vmem:[%s186 + $0x1c8] sm:$0xff]
                %247 = vst [vmem:[%s187 + $0xe8] sm:$0xff] %v246
                %v248 = vld [vmem:[%s186 + $0x1e0] sm:$0xff]
                %249 = vst [vmem:[%s187 + $0xf0] sm:$0xff] %v248
                %v250 = vld [vmem:[%s186 + $0x1e8] sm:$0xff]
                %251 = vst [vmem:[%s187 + $0xf8] sm:$0xff] %v250
              $region37: #{discriminator_forward.6} parent=31 // loop_footer
                %s185 = sadd.s32 1, %s181
              $region38: #{discriminator_forward.6} parent=31 // loop_footer_branch
                %180 = sbr.rel target = $region34
              $region39: #{discriminator_forward.6} parent=31 // loop_exit
                _
            $region32: #{discriminator_forward.6} parent=27 // pred_fallthru
              _
            // Predicated region
            $region40: #{discriminator_forward.6} parent=27 // pred_check
              _
            $region41: #{discriminator_forward.6} parent=27 // pred_check_branch
              %253 = sbr.rel target = $region43
            $region42: #{discriminator_forward.6} parent=27 // pred_region
              _
            $region43: #{discriminator_forward.6} parent=27 // pred_fallthru
              _
          $region28: #{discriminator_forward.6} parent=23 // pred_fallthru
            _
          %254 = vnop
        $region24: #{discriminator_forward.6} parent=19 // pred_fallthru
          _
        // Predicated region
        $region44: #{discriminator_forward.6} parent=19 // pred_check
          %p255 = pneg %p78
        $region45: #{discriminator_forward.6} parent=19 // pred_check_branch
          %257 = sbr.rel (%p255) target = $region47
        $region46: #{discriminator_forward.6} parent=19 // pred_region
          %s258 = smul.u32 64, %s18
          %p259 = scmp.lt.s32.totalorder %s258, 127
          %s260 = scalar_select %p259, %s258, 127
          %p261 = scmp.lt.s32.totalorder %s17, 0
          %s262 = scalar_select %p261, %s17, 0
          %s263 = sadd.s32 %s262, %s260
          %s264 = smul.addr %s263, 4
          %s265 = scalar_lea.vmem %s1, %s264
          %s266 = smul.u32 64, %s18
        $region47: #{discriminator_forward.6} parent=19 // pred_fallthru
          _
      $region20: #{discriminator_forward.6} parent=5 // pred_fallthru
        _
      %p267 = scmp.le.s32.totalorder 1, %s9
      %p268 = scmp.lt.s32.totalorder %s9, 3
      %p269 = pnand %p267, %p268
      %p270 = pneg %p269
      // Predicated region
      $region48: #{discriminator_forward.6} parent=5 // pred_check
        _
      $region49: #{discriminator_forward.6} parent=5 // pred_check_branch
        %272 = sbr.rel (%p269) target = $region51
      $region50: #{discriminator_forward.6} parent=5 // pred_region
        %s273 = ssub.s32 %s9, 1
        %s274 = sand.u32 %s43, 1
        %s275 = sand.u32 %s43, 1
        %s276 = smul.addr %s275, 256
        %s277 = scalar_lea.vmem [#allocation3], %s276
        // Predicated region
        $region52: #{discriminator_forward.6} parent=50 // pred_check
          %p278 = pneg %p56
        $region53: #{discriminator_forward.6} parent=50 // pred_check_branch
          %280 = sbr.rel (%p278) target = $region55
        $region54: #{discriminator_forward.6} parent=50 // pred_region
          _
        $region55: #{discriminator_forward.6} parent=50 // pred_fallthru
          _
        %s281 = sand.u32 %s43, 1
        %s282 = sand.u32 %s43, 1
        %s283 = smul.addr %s282, 256
        %s284 = scalar_lea.vmem [#allocation3], %s283
        %p285 = pneg %p56
        %p286 = pneg %p53
        %s287 = smul.u32 64, %s21
        %p288 = scmp.lt.s32.totalorder %s287, 127
        %s289 = scalar_select %p288, %s287, 127
        %p290 = scmp.lt.s32.totalorder %s20, 0
        %s291 = scalar_select %p290, %s20, 0
        %s292 = sadd.s32 %s291, %s289
        %s293 = smul.addr %s292, 4
        %s294 = scalar_lea.vmem %s1, %s293
        %p295 = pneg %p84
        %p296 = pneg %p81
        %p297 = scmp.lt.s32.totalorder %s20, 0
        %s298 = scalar_select %p297, %s20, 0
        %s299 = scalar_lea.vmem %s2, %s298
        %p300 = pneg %p110
        %p301 = pneg %p107
        %p302 = pneg %p138
        %p303 = pneg %p135
        %s304 = smul.u32 16, %s19
        %p305 = scmp.lt.s32.totalorder %s304, 15
        %s306 = scalar_select %p305, %s304, 15
        %p307 = scmp.lt.s32.totalorder %s20, 0
        %s308 = scalar_select %p307, %s20, 0
        %s309 = sadd.s32 %s308, %s306
        %s310 = smul.addr %s309, 8
        %s311 = scalar_lea.vmem %s3, %s310
        %s312 = smul.u32 16, %s19
        %s313 = smul.u32 4, %s21
        %s314 = smul.u32 64, %s21
        %p315 = scmp.lt.s32.totalorder %s314, 127
        %s316 = scalar_select %p315, %s314, 127
        %p317 = scmp.lt.s32.totalorder %s20, 0
        %s318 = scalar_select %p317, %s20, 0
        %s319 = sadd.s32 %s318, %s316
        %s320 = smul.addr %s319, 4
        %s321 = scalar_lea.vmem %s1, %s320
        %s322 = smul.u32 64, %s21
        %p323 = scmp.lt.s32.totalorder %s20, 0
        %s324 = scalar_select %p323, %s20, 0
        %s325 = scalar_lea.vmem %s2, %s324
        %s326 = smul.u32 16, %s19
        %p327 = scmp.lt.s32.totalorder %s326, 15
        %s328 = scalar_select %p327, %s326, 15
        %p329 = scmp.lt.s32.totalorder %s20, 0
        %s330 = scalar_select %p329, %s20, 0
        %s331 = sadd.s32 %s330, %s328
        %s332 = smul.addr %s331, 8
        %s333 = scalar_lea.vmem %s3, %s332
        %s334 = smul.u32 16, %s19
        %p335 = scmp.eq.s32.totalorder %s21, 0
        // Predicated region
        $region56: #{discriminator_forward.6} parent=50 // pred_check
          %p336 = pneg %p335
        $region57: #{discriminator_forward.6} parent=50 // pred_check_branch
          %338 = sbr.rel (%p336) target = $region59
        $region58: #{discriminator_forward.6} parent=50 // pred_region
          %339 = vst [vmem:[#allocation2] sm:$0xff] 0.0
          %340 = vst [vmem:[#allocation2 + $0x8] sm:$0xff] 0.0
          %341 = vst [vmem:[#allocation2 + $0x10] sm:$0xff] 0.0
          %342 = vst [vmem:[#allocation2 + $0x18] sm:$0xff] 0.0
          %343 = vst [vmem:[#allocation2 + $0x20] sm:$0xff] 0.0
          %344 = vst [vmem:[#allocation2 + $0x28] sm:$0xff] 0.0
          %345 = vst [vmem:[#allocation2 + $0x30] sm:$0xff] 0.0
          %346 = vst [vmem:[#allocation2 + $0x38] sm:$0xff] 0.0
          %347 = vst [vmem:[#allocation2 + $0x40] sm:$0xff] 0.0
          %348 = vst [vmem:[#allocation2 + $0x48] sm:$0xff] 0.0
          %349 = vst [vmem:[#allocation2 + $0x50] sm:$0xff] 0.0
          %350 = vst [vmem:[#allocation2 + $0x58] sm:$0xff] 0.0
          %351 = vst [vmem:[#allocation2 + $0x60] sm:$0xff] 0.0
          %352 = vst [vmem:[#allocation2 + $0x68] sm:$0xff] 0.0
          %353 = vst [vmem:[#allocation2 + $0x70] sm:$0xff] 0.0
          %354 = vst [vmem:[#allocation2 + $0x78] sm:$0xff] 0.0
        $region59: #{discriminator_forward.6} parent=50 // pred_fallthru
          _
        %v355 = vld [vmem:[#allocation2] sm:$0xff]
        %v356 = vld [vmem:[#allocation2 + $0x8] sm:$0xff]
        %v357 = vld [vmem:[#allocation2 + $0x10] sm:$0xff]
        %v358 = vld [vmem:[#allocation2 + $0x18] sm:$0xff]
        %v359 = vld [vmem:[#allocation2 + $0x20] sm:$0xff]
        %v360 = vld [vmem:[#allocation2 + $0x28] sm:$0xff]
        %v361 = vld [vmem:[#allocation2 + $0x30] sm:$0xff]
        %v362 = vld [vmem:[#allocation2 + $0x38] sm:$0xff]
        %v363 = vld [vmem:[#allocation2 + $0x40] sm:$0xff]
        %v364 = vld [vmem:[#allocation2 + $0x48] sm:$0xff]
        %v365 = vld [vmem:[#allocation2 + $0x50] sm:$0xff]
        %v366 = vld [vmem:[#allocation2 + $0x58] sm:$0xff]
        %v367 = vld [vmem:[#allocation2 + $0x60] sm:$0xff]
        %v368 = vld [vmem:[#allocation2 + $0x68] sm:$0xff]
        %v369 = vld [vmem:[#allocation2 + $0x70] sm:$0xff]
        %v370 = vld [vmem:[#allocation2 + $0x78] sm:$0xff]
        %v371 = vld [vmem:[%s277] sm:$0xff]
        %v372 = vld [vmem:[%s277 + $0x8] sm:$0xff]
        %v373 = vld [vmem:[%s277 + $0x10] sm:$0xff]
        %v374 = vld [vmem:[%s277 + $0x18] sm:$0xff]
        %v375 = vld [vmem:[%s277 + $0x20] sm:$0xff]
        %v376 = vld [vmem:[%s277 + $0x28] sm:$0xff]
        %v377 = vld [vmem:[%s277 + $0x30] sm:$0xff]
        %v378 = vld [vmem:[%s277 + $0x38] sm:$0xff]
        %v379 = vld [vmem:[%s277 + $0x40] sm:$0xff]
        %v380 = vld [vmem:[%s277 + $0x48] sm:$0xff]
        %v381 = vld [vmem:[%s277 + $0x50] sm:$0xff]
        %v382 = vld [vmem:[%s277 + $0x58] sm:$0xff]
        %v383 = vld [vmem:[%s277 + $0x60] sm:$0xff]
        %v384 = vld [vmem:[%s277 + $0x68] sm:$0xff]
        %v385 = vld [vmem:[%s277 + $0x70] sm:$0xff]
        %v386 = vld [vmem:[%s277 + $0x78] sm:$0xff]
        %v387 = vld [vmem:[%s277 + $0x80] sm:$0xff]
        %v388 = vld [vmem:[%s277 + $0x88] sm:$0xff]
        %v389 = vld [vmem:[%s277 + $0x90] sm:$0xff]
        %v390 = vld [vmem:[%s277 + $0x98] sm:$0xff]
        %v391 = vld [vmem:[%s277 + $0xa0] sm:$0xff]
        %v392 = vld [vmem:[%s277 + $0xa8] sm:$0xff]
        %v393 = vld [vmem:[%s277 + $0xb0] sm:$0xff]
        %v394 = vld [vmem:[%s277 + $0xb8] sm:$0xff]
        %v395 = vld [vmem:[%s277 + $0xc0] sm:$0xff]
        %v396 = vld [vmem:[%s277 + $0xc8] sm:$0xff]
        %v397 = vld [vmem:[%s277 + $0xd0] sm:$0xff]
        %v398 = vld [vmem:[%s277 + $0xd8] sm:$0xff]
        %v399 = vld [vmem:[%s277 + $0xe0] sm:$0xff]
        %v400 = vld [vmem:[%s277 + $0xe8] sm:$0xff]
        %v401 = vld [vmem:[%s277 + $0xf0] sm:$0xff]
        %v402 = vld [vmem:[%s277 + $0xf8] sm:$0xff]
        %v403 = vld [vmem:[%s321] sm:$0xf]
        %v404 = vld [vmem:[%s321 + $0x4] sm:$0xf]
        %v405 = vld [vmem:[%s321 + $0x8] sm:$0xf]
        %v406 = vld [vmem:[%s321 + $0xc] sm:$0xf]
        %v407 = vld [vmem:[%s321 + $0x10] sm:$0xf]
        %v408 = vld [vmem:[%s321 + $0x14] sm:$0xf]
        %v409 = vld [vmem:[%s321 + $0x18] sm:$0xf]
        %v410 = vld [vmem:[%s321 + $0x1c] sm:$0xf]
        %v411 = vld [vmem:[%s321 + $0x20] sm:$0xf]
        %v412 = vld [vmem:[%s321 + $0x24] sm:$0xf]
        %v413 = vld [vmem:[%s321 + $0x28] sm:$0xf]
        %v414 = vld [vmem:[%s321 + $0x2c] sm:$0xf]
        %v415 = vld [vmem:[%s321 + $0x30] sm:$0xf]
        %v416 = vld [vmem:[%s321 + $0x34] sm:$0xf]
        %v417 = vld [vmem:[%s321 + $0x38] sm:$0xf]
        %v418 = vld [vmem:[%s321 + $0x3c] sm:$0xf]
        %v419 = vld [vmem:[%s321 + $0x40] sm:$0xf]
        %v420 = vld [vmem:[%s321 + $0x44] sm:$0xf]
        %v421 = vld [vmem:[%s321 + $0x48] sm:$0xf]
        %v422 = vld [vmem:[%s321 + $0x4c] sm:$0xf]
        %v423 = vld [vmem:[%s321 + $0x50] sm:$0xf]
        %v424 = vld [vmem:[%s321 + $0x54] sm:$0xf]
        %v425 = vld [vmem:[%s321 + $0x58] sm:$0xf]
        %v426 = vld [vmem:[%s321 + $0x5c] sm:$0xf]
        %v427 = vld [vmem:[%s321 + $0x60] sm:$0xf]
        %v428 = vld [vmem:[%s321 + $0x64] sm:$0xf]
        %v429 = vld [vmem:[%s321 + $0x68] sm:$0xf]
        %v430 = vld [vmem:[%s321 + $0x6c] sm:$0xf]
        %v431 = vld [vmem:[%s321 + $0x70] sm:$0xf]
        %v432 = vld [vmem:[%s321 + $0x74] sm:$0xf]
        %v433 = vld [vmem:[%s321 + $0x78] sm:$0xf]
        %v434 = vld [vmem:[%s321 + $0x7c] sm:$0xf]
        %v435 = vld [vmem:[%s321 + $0x80] sm:$0xf]
        %v436 = vld [vmem:[%s321 + $0x84] sm:$0xf]
        %v437 = vld [vmem:[%s321 + $0x88] sm:$0xf]
        %v438 = vld [vmem:[%s321 + $0x8c] sm:$0xf]
        %v439 = vld [vmem:[%s321 + $0x90] sm:$0xf]
        %v440 = vld [vmem:[%s321 + $0x94] sm:$0xf]
        %v441 = vld [vmem:[%s321 + $0x98] sm:$0xf]
        %v442 = vld [vmem:[%s321 + $0x9c] sm:$0xf]
        %v443 = vld [vmem:[%s321 + $0xa0] sm:$0xf]
        %v444 = vld [vmem:[%s321 + $0xa4] sm:$0xf]
        %v445 = vld [vmem:[%s321 + $0xa8] sm:$0xf]
        %v446 = vld [vmem:[%s321 + $0xac] sm:$0xf]
        %v447 = vld [vmem:[%s321 + $0xb0] sm:$0xf]
        %v448 = vld [vmem:[%s321 + $0xb4] sm:$0xf]
        %v449 = vld [vmem:[%s321 + $0xb8] sm:$0xf]
        %v450 = vld [vmem:[%s321 + $0xbc] sm:$0xf]
        %v451 = vld [vmem:[%s321 + $0xc0] sm:$0xf]
        %v452 = vld [vmem:[%s321 + $0xc4] sm:$0xf]
        %v453 = vld [vmem:[%s321 + $0xc8] sm:$0xf]
        %v454 = vld [vmem:[%s321 + $0xcc] sm:$0xf]
        %v455 = vld [vmem:[%s321 + $0xd0] sm:$0xf]
        %v456 = vld [vmem:[%s321 + $0xd4] sm:$0xf]
        %v457 = vld [vmem:[%s321 + $0xd8] sm:$0xf]
        %v458 = vld [vmem:[%s321 + $0xdc] sm:$0xf]
        %v459 = vld [vmem:[%s321 + $0xe0] sm:$0xf]
        %v460 = vld [vmem:[%s321 + $0xe4] sm:$0xf]
        %v461 = vld [vmem:[%s321 + $0xe8] sm:$0xf]
        %v462 = vld [vmem:[%s321 + $0xec] sm:$0xf]
        %v463 = vld [vmem:[%s321 + $0xf0] sm:$0xf]
        %v464 = vld [vmem:[%s321 + $0xf4] sm:$0xf]
        %v465 = vld [vmem:[%s321 + $0xf8] sm:$0xf]
        %v466 = vld [vmem:[%s321 + $0xfc] sm:$0xf]
        %v499 = vunpack.c.l.b16 %v371
        %v500 = vunpack.c.h.b16 %v371
        %v501 = vunpack.c.l.b16 %v372
        %v502 = vunpack.c.h.b16 %v372
        %v503 = vunpack.c.l.b16 %v373
        %v504 = vunpack.c.h.b16 %v373
        %v505 = vunpack.c.l.b16 %v374
        %v506 = vunpack.c.h.b16 %v374
        %v507 = vunpack.c.l.b16 %v375
        %v508 = vunpack.c.h.b16 %v375
        %v509 = vunpack.c.l.b16 %v376
        %v510 = vunpack.c.h.b16 %v376
        %v511 = vunpack.c.l.b16 %v377
        %v512 = vunpack.c.h.b16 %v377
        %v513 = vunpack.c.l.b16 %v378
        %v514 = vunpack.c.h.b16 %v378
        %v515 = vunpack.c.l.b16 %v379
        %v516 = vunpack.c.h.b16 %v379
        %v517 = vunpack.c.l.b16 %v380
        %v518 = vunpack.c.h.b16 %v380
        %v519 = vunpack.c.l.b16 %v381
        %v520 = vunpack.c.h.b16 %v381
        %v521 = vunpack.c.l.b16 %v382
        %v522 = vunpack.c.h.b16 %v382
        %v523 = vunpack.c.l.b16 %v383
        %v524 = vunpack.c.h.b16 %v383
        %v525 = vunpack.c.l.b16 %v384
        %v526 = vunpack.c.h.b16 %v384
        %v527 = vunpack.c.l.b16 %v385
        %v528 = vunpack.c.h.b16 %v385
        %v529 = vunpack.c.l.b16 %v386
        %v530 = vunpack.c.h.b16 %v386
        %v531 = vunpack.c.l.b16 %v387
        %v532 = vunpack.c.h.b16 %v387
        %v533 = vunpack.c.l.b16 %v388
        %v534 = vunpack.c.h.b16 %v388
        %v535 = vunpack.c.l.b16 %v389
        %v536 = vunpack.c.h.b16 %v389
        %v537 = vunpack.c.l.b16 %v390
        %v538 = vunpack.c.h.b16 %v390
        %v539 = vunpack.c.l.b16 %v391
        %v540 = vunpack.c.h.b16 %v391
        %v541 = vunpack.c.l.b16 %v392
        %v542 = vunpack.c.h.b16 %v392
        %v543 = vunpack.c.l.b16 %v393
        %v544 = vunpack.c.h.b16 %v393
        %v545 = vunpack.c.l.b16 %v394
        %v546 = vunpack.c.h.b16 %v394
        %v547 = vunpack.c.l.b16 %v395
        %v548 = vunpack.c.h.b16 %v395
        %v549 = vunpack.c.l.b16 %v396
        %v550 = vunpack.c.h.b16 %v396
        %v551 = vunpack.c.l.b16 %v397
        %v552 = vunpack.c.h.b16 %v397
        %v553 = vunpack.c.l.b16 %v398
        %v554 = vunpack.c.h.b16 %v398
        %v555 = vunpack.c.l.b16 %v399
        %v556 = vunpack.c.h.b16 %v399
        %v557 = vunpack.c.l.b16 %v400
        %v558 = vunpack.c.h.b16 %v400
        %v559 = vunpack.c.l.b16 %v401
        %v560 = vunpack.c.h.b16 %v401
        %v561 = vunpack.c.l.b16 %v402
        %v562 = vunpack.c.h.b16 %v402
        %v563 = vpack.c.b16 %v503, %v499
        %v564 = vpack.c.b16 %v504, %v500
        %v565 = vpack.c.b16 %v505, %v501
        %v566 = vpack.c.b16 %v506, %v502
        %v567 = vpack.c.b16 %v511, %v507
        %v568 = vpack.c.b16 %v512, %v508
        %v569 = vpack.c.b16 %v513, %v509
        %v570 = vpack.c.b16 %v514, %v510
        %v571 = vpack.c.b16 %v519, %v515
        %v572 = vpack.c.b16 %v520, %v516
        %v573 = vpack.c.b16 %v521, %v517
        %v574 = vpack.c.b16 %v522, %v518
        %v575 = vpack.c.b16 %v527, %v523
        %v576 = vpack.c.b16 %v528, %v524
        %v577 = vpack.c.b16 %v529, %v525
        %v578 = vpack.c.b16 %v530, %v526
        %v579 = vpack.c.b16 %v535, %v531
        %v580 = vpack.c.b16 %v536, %v532
        %v581 = vpack.c.b16 %v537, %v533
        %v582 = vpack.c.b16 %v538, %v534
        %v583 = vpack.c.b16 %v543, %v539
        %v584 = vpack.c.b16 %v544, %v540
        %v585 = vpack.c.b16 %v545, %v541
        %v586 = vpack.c.b16 %v546, %v542
        %v587 = vpack.c.b16 %v551, %v547
        %v588 = vpack.c.b16 %v552, %v548
        %v589 = vpack.c.b16 %v553, %v549
        %v590 = vpack.c.b16 %v554, %v550
        %v591 = vpack.c.b16 %v559, %v555
        %v592 = vpack.c.b16 %v560, %v556
        %v593 = vpack.c.b16 %v561, %v557
        %v594 = vpack.c.b16 %v562, %v558
        %v691 = vunpack.c.l.b16 %v403
        %v692 = vunpack.c.l.b16 %v404
        %v693 = vunpack.c.l.b16 %v405
        %v694 = vunpack.c.l.b16 %v406
        %v695 = vunpack.c.l.b16 %v407
        %v696 = vunpack.c.l.b16 %v408
        %v697 = vunpack.c.l.b16 %v409
        %v698 = vunpack.c.l.b16 %v410
        %v699 = vunpack.c.l.b16 %v411
        %v700 = vunpack.c.l.b16 %v412
        %v701 = vunpack.c.l.b16 %v413
        %v702 = vunpack.c.l.b16 %v414
        %v703 = vunpack.c.l.b16 %v415
        %v704 = vunpack.c.l.b16 %v416
        %v705 = vunpack.c.l.b16 %v417
        %v706 = vunpack.c.l.b16 %v418
        %v707 = vunpack.c.l.b16 %v419
        %v708 = vunpack.c.l.b16 %v420
        %v709 = vunpack.c.l.b16 %v421
        %v710 = vunpack.c.l.b16 %v422
        %v711 = vunpack.c.l.b16 %v423
        %v712 = vunpack.c.l.b16 %v424
        %v713 = vunpack.c.l.b16 %v425
        %v714 = vunpack.c.l.b16 %v426
        %v715 = vunpack.c.l.b16 %v427
        %v716 = vunpack.c.l.b16 %v428
        %v717 = vunpack.c.l.b16 %v429
        %v718 = vunpack.c.l.b16 %v430
        %v719 = vunpack.c.l.b16 %v431
        %v720 = vunpack.c.l.b16 %v432
        %v721 = vunpack.c.l.b16 %v433
        %v722 = vunpack.c.l.b16 %v434
        %v723 = vunpack.c.l.b16 %v435
        %v724 = vunpack.c.l.b16 %v436
        %v725 = vunpack.c.l.b16 %v437
        %v726 = vunpack.c.l.b16 %v438
        %v727 = vunpack.c.l.b16 %v439
        %v728 = vunpack.c.l.b16 %v440
        %v729 = vunpack.c.l.b16 %v441
        %v730 = vunpack.c.l.b16 %v442
        %v731 = vunpack.c.l.b16 %v443
        %v732 = vunpack.c.l.b16 %v444
        %v733 = vunpack.c.l.b16 %v445
        %v734 = vunpack.c.l.b16 %v446
        %v735 = vunpack.c.l.b16 %v447
        %v736 = vunpack.c.l.b16 %v448
        %v737 = vunpack.c.l.b16 %v449
        %v738 = vunpack.c.l.b16 %v450
        %v739 = vunpack.c.l.b16 %v451
        %v740 = vunpack.c.l.b16 %v452
        %v741 = vunpack.c.l.b16 %v453
        %v742 = vunpack.c.l.b16 %v454
        %v743 = vunpack.c.l.b16 %v455
        %v744 = vunpack.c.l.b16 %v456
        %v745 = vunpack.c.l.b16 %v457
        %v746 = vunpack.c.l.b16 %v458
        %v747 = vunpack.c.l.b16 %v459
        %v748 = vunpack.c.l.b16 %v460
        %v749 = vunpack.c.l.b16 %v461
        %v750 = vunpack.c.l.b16 %v462
        %v751 = vunpack.c.l.b16 %v463
        %v752 = vunpack.c.l.b16 %v464
        %v753 = vunpack.c.l.b16 %v465
        %v754 = vunpack.c.l.b16 %v466
        %v755 = vpack.c.b16 %v692, %v691
        %v756 = vpack.c.b16 %v694, %v693
        %v757 = vpack.c.b16 %v696, %v695
        %v758 = vpack.c.b16 %v698, %v697
        %v759 = vpack.c.b16 %v700, %v699
        %v760 = vpack.c.b16 %v702, %v701
        %v761 = vpack.c.b16 %v704, %v703
        %v762 = vpack.c.b16 %v706, %v705
        %v763 = vpack.c.b16 %v708, %v707
        %v764 = vpack.c.b16 %v710, %v709
        %v765 = vpack.c.b16 %v712, %v711
        %v766 = vpack.c.b16 %v714, %v713
        %v767 = vpack.c.b16 %v716, %v715
        %v768 = vpack.c.b16 %v718, %v717
        %v769 = vpack.c.b16 %v720, %v719
        %v770 = vpack.c.b16 %v722, %v721
        %v771 = vpack.c.b16 %v724, %v723
        %v772 = vpack.c.b16 %v726, %v725
        %v773 = vpack.c.b16 %v728, %v727
        %v774 = vpack.c.b16 %v730, %v729
        %v775 = vpack.c.b16 %v732, %v731
        %v776 = vpack.c.b16 %v734, %v733
        %v777 = vpack.c.b16 %v736, %v735
        %v778 = vpack.c.b16 %v738, %v737
        %v779 = vpack.c.b16 %v740, %v739
        %v780 = vpack.c.b16 %v742, %v741
        %v781 = vpack.c.b16 %v744, %v743
        %v782 = vpack.c.b16 %v746, %v745
        %v783 = vpack.c.b16 %v748, %v747
        %v784 = vpack.c.b16 %v750, %v749
        %v785 = vpack.c.b16 %v752, %v751
        %v786 = vpack.c.b16 %v754, %v753
        %819 = vmatpush.bf16.msra.mxu0 %v762
        %820 = vmatpush.bf16.msra.mxu0 %v761
        %821 = vmatpush.bf16.msra.mxu0 %v760
        %822 = vmatpush.bf16.msra.mxu0 %v759
        %823 = vmatpush.bf16.msra.mxu0 %v758
        %824 = vmatpush.bf16.msra.mxu0 %v757
        %825 = vmatpush.bf16.msra.mxu0 %v756
        %826 = vmatpush.bf16.msra.mxu0 %v755
        %827 = vmatmul.bf16.gmra.mxu0 %v563
        %v828 = vpop.f32.mrf.mxu0
        %v829 = vadd.f32 0.0, %v828
        %v830 = vpop.f32.mrf.mxu0
        %v831 = vadd.f32 0.0, %v830
        %832 = vmatmul.bf16.gmra.mxu0 %v567
        %v833 = vpop.f32.mrf.mxu0
        %v834 = vadd.f32 0.0, %v833
        %v835 = vpop.f32.mrf.mxu0
        %v836 = vadd.f32 0.0, %v835
        %837 = vmatmul.bf16.gmra.mxu0 %v571
        %v838 = vpop.f32.mrf.mxu0
        %v839 = vadd.f32 0.0, %v838
        %v840 = vpop.f32.mrf.mxu0
        %v841 = vadd.f32 0.0, %v840
        %842 = vmatmul.bf16.gmra.mxu0 %v575
        %v843 = vpop.f32.mrf.mxu0
        %v844 = vadd.f32 0.0, %v843
        %v845 = vpop.f32.mrf.mxu0
        %v846 = vadd.f32 0.0, %v845
        %847 = vmatmul.bf16.gmra.mxu0 %v579
        %v848 = vpop.f32.mrf.mxu0
        %v849 = vadd.f32 0.0, %v848
        %v850 = vpop.f32.mrf.mxu0
        %v851 = vadd.f32 0.0, %v850
        %852 = vmatmul.bf16.gmra.mxu0 %v583
        %v853 = vpop.f32.mrf.mxu0
        %v854 = vadd.f32 0.0, %v853
        %v855 = vpop.f32.mrf.mxu0
        %v856 = vadd.f32 0.0, %v855
        %857 = vmatmul.bf16.gmra.mxu0 %v587
        %v858 = vpop.f32.mrf.mxu0
        %v859 = vadd.f32 0.0, %v858
        %v860 = vpop.f32.mrf.mxu0
        %v861 = vadd.f32 0.0, %v860
        %862 = vmatmul.bf16.gmra.mxu0 %v591
        %v863 = vpop.f32.mrf.mxu0
        %v864 = vadd.f32 0.0, %v863
        %v865 = vpop.f32.mrf.mxu0
        %v866 = vadd.f32 0.0, %v865
        %867 = vdwg.mxu0
        %868 = vmatpush.bf16.msra.mxu0 %v770
        %869 = vmatpush.bf16.msra.mxu0 %v769
        %870 = vmatpush.bf16.msra.mxu0 %v768
        %871 = vmatpush.bf16.msra.mxu0 %v767
        %872 = vmatpush.bf16.msra.mxu0 %v766
        %873 = vmatpush.bf16.msra.mxu0 %v765
        %874 = vmatpush.bf16.msra.mxu0 %v764
        %875 = vmatpush.bf16.msra.mxu0 %v763
        %876 = vmatmul.bf16.gmra.mxu0 %v564
        %v877 = vpop.f32.mrf.mxu0
        %v878 = vadd.f32 %v829, %v877
        %v879 = vpop.f32.mrf.mxu0
        %v880 = vadd.f32 %v831, %v879
        %881 = vmatmul.bf16.gmra.mxu0 %v568
        %v882 = vpop.f32.mrf.mxu0
        %v883 = vadd.f32 %v834, %v882
        %v884 = vpop.f32.mrf.mxu0
        %v885 = vadd.f32 %v836, %v884
        %886 = vmatmul.bf16.gmra.mxu0 %v572
        %v887 = vpop.f32.mrf.mxu0
        %v888 = vadd.f32 %v839, %v887
        %v889 = vpop.f32.mrf.mxu0
        %v890 = vadd.f32 %v841, %v889
        %891 = vmatmul.bf16.gmra.mxu0 %v576
        %v892 = vpop.f32.mrf.mxu0
        %v893 = vadd.f32 %v844, %v892
        %v894 = vpop.f32.mrf.mxu0
        %v895 = vadd.f32 %v846, %v894
        %896 = vmatmul.bf16.gmra.mxu0 %v580
        %v897 = vpop.f32.mrf.mxu0
        %v898 = vadd.f32 %v849, %v897
        %v899 = vpop.f32.mrf.mxu0
        %v900 = vadd.f32 %v851, %v899
        %901 = vmatmul.bf16.gmra.mxu0 %v584
        %v902 = vpop.f32.mrf.mxu0
        %v903 = vadd.f32 %v854, %v902
        %v904 = vpop.f32.mrf.mxu0
        %v905 = vadd.f32 %v856, %v904
        %906 = vmatmul.bf16.gmra.mxu0 %v588
        %v907 = vpop.f32.mrf.mxu0
        %v908 = vadd.f32 %v859, %v907
        %v909 = vpop.f32.mrf.mxu0
        %v910 = vadd.f32 %v861, %v909
        %911 = vmatmul.bf16.gmra.mxu0 %v592
        %v912 = vpop.f32.mrf.mxu0
        %v913 = vadd.f32 %v864, %v912
        %v914 = vpop.f32.mrf.mxu0
        %v915 = vadd.f32 %v866, %v914
        %916 = vdwg.mxu0
        %917 = vmatpush.bf16.msra.mxu0 %v778
        %918 = vmatpush.bf16.msra.mxu0 %v777
        %919 = vmatpush.bf16.msra.mxu0 %v776
        %920 = vmatpush.bf16.msra.mxu0 %v775
        %921 = vmatpush.bf16.msra.mxu0 %v774
        %922 = vmatpush.bf16.msra.mxu0 %v773
        %923 = vmatpush.bf16.msra.mxu0 %v772
        %924 = vmatpush.bf16.msra.mxu0 %v771
        %925 = vmatmul.bf16.gmra.mxu0 %v565
        %v926 = vpop.f32.mrf.mxu0
        %v927 = vadd.f32 %v878, %v926
        %v928 = vpop.f32.mrf.mxu0
        %v929 = vadd.f32 %v880, %v928
        %930 = vmatmul.bf16.gmra.mxu0 %v569
        %v931 = vpop.f32.mrf.mxu0
        %v932 = vadd.f32 %v883, %v931
        %v933 = vpop.f32.mrf.mxu0
        %v934 = vadd.f32 %v885, %v933
        %935 = vmatmul.bf16.gmra.mxu0 %v573
        %v936 = vpop.f32.mrf.mxu0
        %v937 = vadd.f32 %v888, %v936
        %v938 = vpop.f32.mrf.mxu0
        %v939 = vadd.f32 %v890, %v938
        %940 = vmatmul.bf16.gmra.mxu0 %v577
        %v941 = vpop.f32.mrf.mxu0
        %v942 = vadd.f32 %v893, %v941
        %v943 = vpop.f32.mrf.mxu0
        %v944 = vadd.f32 %v895, %v943
        %945 = vmatmul.bf16.gmra.mxu0 %v581
        %v946 = vpop.f32.mrf.mxu0
        %v947 = vadd.f32 %v898, %v946
        %v948 = vpop.f32.mrf.mxu0
        %v949 = vadd.f32 %v900, %v948
        %950 = vmatmul.bf16.gmra.mxu0 %v585
        %v951 = vpop.f32.mrf.mxu0
        %v952 = vadd.f32 %v903, %v951
        %v953 = vpop.f32.mrf.mxu0
        %v954 = vadd.f32 %v905, %v953
        %955 = vmatmul.bf16.gmra.mxu0 %v589
        %v956 = vpop.f32.mrf.mxu0
        %v957 = vadd.f32 %v908, %v956
        %v958 = vpop.f32.mrf.mxu0
        %v959 = vadd.f32 %v910, %v958
        %960 = vmatmul.bf16.gmra.mxu0 %v593
        %v961 = vpop.f32.mrf.mxu0
        %v962 = vadd.f32 %v913, %v961
        %v963 = vpop.f32.mrf.mxu0
        %v964 = vadd.f32 %v915, %v963
        %965 = vdwg.mxu0
        %966 = vmatpush.bf16.msra.mxu0 %v786
        %967 = vmatpush.bf16.msra.mxu0 %v785
        %968 = vmatpush.bf16.msra.mxu0 %v784
        %969 = vmatpush.bf16.msra.mxu0 %v783
        %970 = vmatpush.bf16.msra.mxu0 %v782
        %971 = vmatpush.bf16.msra.mxu0 %v781
        %972 = vmatpush.bf16.msra.mxu0 %v780
        %973 = vmatpush.bf16.msra.mxu0 %v779
        %974 = vmatmul.bf16.gmra.mxu0 %v566
        %v975 = vpop.f32.mrf.mxu0
        %v976 = vadd.f32 %v927, %v975
        %v977 = vpop.f32.mrf.mxu0
        %v978 = vadd.f32 %v929, %v977
        %979 = vmatmul.bf16.gmra.mxu0 %v570
        %v980 = vpop.f32.mrf.mxu0
        %v981 = vadd.f32 %v932, %v980
        %v982 = vpop.f32.mrf.mxu0
        %v983 = vadd.f32 %v934, %v982
        %984 = vmatmul.bf16.gmra.mxu0 %v574
        %v985 = vpop.f32.mrf.mxu0
        %v986 = vadd.f32 %v937, %v985
        %v987 = vpop.f32.mrf.mxu0
        %v988 = vadd.f32 %v939, %v987
        %989 = vmatmul.bf16.gmra.mxu0 %v578
        %v990 = vpop.f32.mrf.mxu0
        %v991 = vadd.f32 %v942, %v990
        %v992 = vpop.f32.mrf.mxu0
        %v993 = vadd.f32 %v944, %v992
        %994 = vmatmul.bf16.gmra.mxu0 %v582
        %v995 = vpop.f32.mrf.mxu0
        %v996 = vadd.f32 %v947, %v995
        %v997 = vpop.f32.mrf.mxu0
        %v998 = vadd.f32 %v949, %v997
        %999 = vmatmul.bf16.gmra.mxu0 %v586
        %v1000 = vpop.f32.mrf.mxu0
        %v1001 = vadd.f32 %v952, %v1000
        %v1002 = vpop.f32.mrf.mxu0
        %v1003 = vadd.f32 %v954, %v1002
        %1004 = vmatmul.bf16.gmra.mxu0 %v590
        %v1005 = vpop.f32.mrf.mxu0
        %v1006 = vadd.f32 %v957, %v1005
        %v1007 = vpop.f32.mrf.mxu0
        %v1008 = vadd.f32 %v959, %v1007
        %1009 = vmatmul.bf16.gmra.mxu0 %v594
        %v1010 = vpop.f32.mrf.mxu0
        %v1011 = vadd.f32 %v962, %v1010
        %v1012 = vpop.f32.mrf.mxu0
        %v1013 = vadd.f32 %v964, %v1012
        %1014 = vdwg.mxu0
        %v1015 = vadd.f32 %v355, %v976
        %v1016 = vadd.f32 %v356, %v978
        %v1017 = vadd.f32 %v357, %v981
        %v1018 = vadd.f32 %v358, %v983
        %v1019 = vadd.f32 %v359, %v986
        %v1020 = vadd.f32 %v360, %v988
        %v1021 = vadd.f32 %v361, %v991
        %v1022 = vadd.f32 %v362, %v993
        %v1023 = vadd.f32 %v363, %v996
        %v1024 = vadd.f32 %v364, %v998
        %v1025 = vadd.f32 %v365, %v1001
        %v1026 = vadd.f32 %v366, %v1003
        %v1027 = vadd.f32 %v367, %v1006
        %v1028 = vadd.f32 %v368, %v1008
        %v1029 = vadd.f32 %v369, %v1011
        %v1030 = vadd.f32 %v370, %v1013
        %1031 = vst [vmem:[#allocation2] sm:$0xff] %v1015
        %1032 = vst [vmem:[#allocation2 + $0x8] sm:$0xff] %v1016
        %1033 = vst [vmem:[#allocation2 + $0x10] sm:$0xff] %v1017
        %1034 = vst [vmem:[#allocation2 + $0x18] sm:$0xff] %v1018
        %1035 = vst [vmem:[#allocation2 + $0x20] sm:$0xff] %v1019
        %1036 = vst [vmem:[#allocation2 + $0x28] sm:$0xff] %v1020
        %1037 = vst [vmem:[#allocation2 + $0x30] sm:$0xff] %v1021
        %1038 = vst [vmem:[#allocation2 + $0x38] sm:$0xff] %v1022
        %1039 = vst [vmem:[#allocation2 + $0x40] sm:$0xff] %v1023
        %1040 = vst [vmem:[#allocation2 + $0x48] sm:$0xff] %v1024
        %1041 = vst [vmem:[#allocation2 + $0x50] sm:$0xff] %v1025
        %1042 = vst [vmem:[#allocation2 + $0x58] sm:$0xff] %v1026
        %1043 = vst [vmem:[#allocation2 + $0x60] sm:$0xff] %v1027
        %1044 = vst [vmem:[#allocation2 + $0x68] sm:$0xff] %v1028
        %1045 = vst [vmem:[#allocation2 + $0x70] sm:$0xff] %v1029
        %1046 = vst [vmem:[#allocation2 + $0x78] sm:$0xff] %v1030
        %p1047 = scmp.eq.s32.totalorder %s21, 1
        // Predicated region
        $region60: #{discriminator_forward.6} parent=50 // pred_check
          %p1048 = pneg %p1047
        $region61: #{discriminator_forward.6} parent=50 // pred_check_branch
          %1050 = sbr.rel (%p1048) target = $region63
        $region62: #{discriminator_forward.6} parent=50 // pred_region
          %v1051 = vld [vmem:[#allocation2] sm:$0xff]
          %v1052 = vld [vmem:[#allocation2 + $0x8] sm:$0xff]
          %v1053 = vld [vmem:[#allocation2 + $0x10] sm:$0xff]
          %v1054 = vld [vmem:[#allocation2 + $0x18] sm:$0xff]
          %v1055 = vld [vmem:[#allocation2 + $0x20] sm:$0xff]
          %v1056 = vld [vmem:[#allocation2 + $0x28] sm:$0xff]
          %v1057 = vld [vmem:[#allocation2 + $0x30] sm:$0xff]
          %v1058 = vld [vmem:[#allocation2 + $0x38] sm:$0xff]
          %v1059 = vld [vmem:[#allocation2 + $0x40] sm:$0xff]
          %v1060 = vld [vmem:[#allocation2 + $0x48] sm:$0xff]
          %v1061 = vld [vmem:[#allocation2 + $0x50] sm:$0xff]
          %v1062 = vld [vmem:[#allocation2 + $0x58] sm:$0xff]
          %v1063 = vld [vmem:[#allocation2 + $0x60] sm:$0xff]
          %v1064 = vld [vmem:[#allocation2 + $0x68] sm:$0xff]
          %v1065 = vld [vmem:[#allocation2 + $0x70] sm:$0xff]
          %v1066 = vld [vmem:[#allocation2 + $0x78] sm:$0xff]
          %v1067 = vld [vmem:[%s325] sm:$0x1]
          %v1069 = vperm.slane %v1067, 0
          %v1071 = vadd.f32 %v1051, %v1069
          %v1072 = vadd.f32 %v1052, %v1069
          %v1073 = vadd.f32 %v1053, %v1069
          %v1074 = vadd.f32 %v1054, %v1069
          %v1075 = vadd.f32 %v1055, %v1069
          %v1076 = vadd.f32 %v1056, %v1069
          %v1077 = vadd.f32 %v1057, %v1069
          %v1078 = vadd.f32 %v1058, %v1069
          %v1079 = vadd.f32 %v1059, %v1069
          %v1080 = vadd.f32 %v1060, %v1069
          %v1081 = vadd.f32 %v1061, %v1069
          %v1082 = vadd.f32 %v1062, %v1069
          %v1083 = vadd.f32 %v1063, %v1069
          %v1084 = vadd.f32 %v1064, %v1069
          %v1085 = vadd.f32 %v1065, %v1069
          %v1086 = vadd.f32 %v1066, %v1069
          %v1087 = vlaneseq
          %v1088 = vshrl.u32 %v1087, 7
          %v1089 = vadd.s32 %v1088, 8
          %v1090 = vadd.s32 %v1088, 16
          %v1091 = vadd.s32 %v1088, 24
          %v1092 = vadd.s32 %v1088, 32
          %v1093 = vadd.s32 %v1088, 40
          %v1094 = vadd.s32 %v1088, 48
          %v1095 = vadd.s32 %v1088, 56
          %v1096 = vadd.s32 %v1088, 64
          %v1097 = vadd.s32 %v1088, 72
          %v1098 = vadd.s32 %v1088, 80
          %v1099 = vadd.s32 %v1088, 88
          %v1100 = vadd.s32 %v1088, 96
          %v1101 = vadd.s32 %v1088, 104
          %v1102 = vadd.s32 %v1088, 112
          %v1103 = vadd.s32 %v1088, 120
          %vm1104 = vcmp.ge.s32.totalorder %v1088, 0
          %vm1105 = vcmp.ge.s32.totalorder %v1089, 0
          %vm1106 = vcmp.ge.s32.totalorder %v1090, 0
          %vm1107 = vcmp.ge.s32.totalorder %v1091, 0
          %vm1108 = vcmp.ge.s32.totalorder %v1092, 0
          %vm1109 = vcmp.ge.s32.totalorder %v1093, 0
          %vm1110 = vcmp.ge.s32.totalorder %v1094, 0
          %vm1111 = vcmp.ge.s32.totalorder %v1095, 0
          %vm1112 = vcmp.ge.s32.totalorder %v1096, 0
          %vm1113 = vcmp.ge.s32.totalorder %v1097, 0
          %vm1114 = vcmp.ge.s32.totalorder %v1098, 0
          %vm1115 = vcmp.ge.s32.totalorder %v1099, 0
          %vm1116 = vcmp.ge.s32.totalorder %v1100, 0
          %vm1117 = vcmp.ge.s32.totalorder %v1101, 0
          %vm1118 = vcmp.ge.s32.totalorder %v1102, 0
          %vm1119 = vcmp.ge.s32.totalorder %v1103, 0
          %vm1120 = vcmp.lt.s32.totalorder %v1088, 64
          %vm1121 = vcmp.lt.s32.totalorder %v1089, 64
          %vm1122 = vcmp.lt.s32.totalorder %v1090, 64
          %vm1123 = vcmp.lt.s32.totalorder %v1091, 64
          %vm1124 = vcmp.lt.s32.totalorder %v1092, 64
          %vm1125 = vcmp.lt.s32.totalorder %v1093, 64
          %vm1126 = vcmp.lt.s32.totalorder %v1094, 64
          %vm1127 = vcmp.lt.s32.totalorder %v1095, 64
          %vm1128 = vcmp.lt.s32.totalorder %v1096, 64
          %vm1129 = vcmp.lt.s32.totalorder %v1097, 64
          %vm1130 = vcmp.lt.s32.totalorder %v1098, 64
          %vm1131 = vcmp.lt.s32.totalorder %v1099, 64
          %vm1132 = vcmp.lt.s32.totalorder %v1100, 64
          %vm1133 = vcmp.lt.s32.totalorder %v1101, 64
          %vm1134 = vcmp.lt.s32.totalorder %v1102, 64
          %vm1135 = vcmp.lt.s32.totalorder %v1103, 64
          %vm1136 = vmand %vm1104, %vm1120
          %vm1137 = vmand %vm1105, %vm1121
          %vm1138 = vmand %vm1106, %vm1122
          %vm1139 = vmand %vm1107, %vm1123
          %vm1140 = vmand %vm1108, %vm1124
          %vm1141 = vmand %vm1109, %vm1125
          %vm1142 = vmand %vm1110, %vm1126
          %vm1143 = vmand %vm1111, %vm1127
          %vm1144 = vmand %vm1112, %vm1128
          %vm1145 = vmand %vm1113, %vm1129
          %vm1146 = vmand %vm1114, %vm1130
          %vm1147 = vmand %vm1115, %vm1131
          %vm1148 = vmand %vm1116, %vm1132
          %vm1149 = vmand %vm1117, %vm1133
          %vm1150 = vmand %vm1118, %vm1134
          %vm1151 = vmand %vm1119, %vm1135
          %v1152 = vsel %vm1136, %v1071, 0.0
          %v1153 = vsel %vm1137, %v1072, 0.0
          %v1154 = vsel %vm1138, %v1073, 0.0
          %v1155 = vsel %vm1139, %v1074, 0.0
          %v1156 = vsel %vm1140, %v1075, 0.0
          %v1157 = vsel %vm1141, %v1076, 0.0
          %v1158 = vsel %vm1142, %v1077, 0.0
          %v1159 = vsel %vm1143, %v1078, 0.0
          %v1160 = vsel %vm1144, %v1079, 0.0
          %v1161 = vsel %vm1145, %v1080, 0.0
          %v1162 = vsel %vm1146, %v1081, 0.0
          %v1163 = vsel %vm1147, %v1082, 0.0
          %v1164 = vsel %vm1148, %v1083, 0.0
          %v1165 = vsel %vm1149, %v1084, 0.0
          %v1166 = vsel %vm1150, %v1085, 0.0
          %v1167 = vsel %vm1151, %v1086, 0.0
          %v1168 = vadd.f32 %v1152, %v1153
          %v1169 = vadd.f32 %v1168, %v1154
          %v1170 = vadd.f32 %v1169, %v1155
          %v1171 = vadd.f32 %v1170, %v1156
          %v1172 = vadd.f32 %v1171, %v1157
          %v1173 = vadd.f32 %v1172, %v1158
          %v1174 = vadd.f32 %v1173, %v1159
          %v1175 = vadd.f32 %v1174, %v1160
          %v1176 = vadd.f32 %v1175, %v1161
          %v1177 = vadd.f32 %v1176, %v1162
          %v1178 = vadd.f32 %v1177, %v1163
          %v1179 = vadd.f32 %v1178, %v1164
          %v1180 = vadd.f32 %v1179, %v1165
          %v1181 = vadd.f32 %v1180, %v1166
          %v1182 = vadd.f32 %v1181, %v1167
          %v1183 = vrot.slane %v1182, 4
          %v1184 = vadd.f32 %v1182, %v1183
          %v1185 = vrot.slane %v1184, 2
          %v1186 = vadd.f32 %v1184, %v1185
          %v1187 = vrot.slane %v1186, 1
          %v1188 = vadd.f32 %v1186, %v1187
          %v1189 = vmul.f32 %v1188, 0.015625
          %v1190 = vsub.f32 %v1071, %v1189
          %v1191 = vsub.f32 %v1072, %v1189
          %v1192 = vsub.f32 %v1073, %v1189
          %v1193 = vsub.f32 %v1074, %v1189
          %v1194 = vsub.f32 %v1075, %v1189
          %v1195 = vsub.f32 %v1076, %v1189
          %v1196 = vsub.f32 %v1077, %v1189
          %v1197 = vsub.f32 %v1078, %v1189
          %v1198 = vsub.f32 %v1079, %v1189
          %v1199 = vsub.f32 %v1080, %v1189
          %v1200 = vsub.f32 %v1081, %v1189
          %v1201 = vsub.f32 %v1082, %v1189
          %v1202 = vsub.f32 %v1083, %v1189
          %v1203 = vsub.f32 %v1084, %v1189
          %v1204 = vsub.f32 %v1085, %v1189
          %v1205 = vsub.f32 %v1086, %v1189
          %v1206 = vsel %vm1136, %v1190, 0.0
          %v1207 = vsel %vm1137, %v1191, 0.0
          %v1208 = vsel %vm1138, %v1192, 0.0
          %v1209 = vsel %vm1139, %v1193, 0.0
          %v1210 = vsel %vm1140, %v1194, 0.0
          %v1211 = vsel %vm1141, %v1195, 0.0
          %v1212 = vsel %vm1142, %v1196, 0.0
          %v1213 = vsel %vm1143, %v1197, 0.0
          %v1214 = vsel %vm1144, %v1198, 0.0
          %v1215 = vsel %vm1145, %v1199, 0.0
          %v1216 = vsel %vm1146, %v1200, 0.0
          %v1217 = vsel %vm1147, %v1201, 0.0
          %v1218 = vsel %vm1148, %v1202, 0.0
          %v1219 = vsel %vm1149, %v1203, 0.0
          %v1220 = vsel %vm1150, %v1204, 0.0
          %v1221 = vsel %vm1151, %v1205, 0.0
          %v1222 = vmul.f32 %v1206, %v1206
          %v1223 = vmul.f32 %v1207, %v1207
          %v1224 = vmul.f32 %v1208, %v1208
          %v1225 = vmul.f32 %v1209, %v1209
          %v1226 = vmul.f32 %v1210, %v1210
          %v1227 = vmul.f32 %v1211, %v1211
          %v1228 = vmul.f32 %v1212, %v1212
          %v1229 = vmul.f32 %v1213, %v1213
          %v1230 = vmul.f32 %v1214, %v1214
          %v1231 = vmul.f32 %v1215, %v1215
          %v1232 = vmul.f32 %v1216, %v1216
          %v1233 = vmul.f32 %v1217, %v1217
          %v1234 = vmul.f32 %v1218, %v1218
          %v1235 = vmul.f32 %v1219, %v1219
          %v1236 = vmul.f32 %v1220, %v1220
          %v1237 = vmul.f32 %v1221, %v1221
          %v1238 = vadd.f32 %v1222, %v1223
          %v1239 = vadd.f32 %v1238, %v1224
          %v1240 = vadd.f32 %v1239, %v1225
          %v1241 = vadd.f32 %v1240, %v1226
          %v1242 = vadd.f32 %v1241, %v1227
          %v1243 = vadd.f32 %v1242, %v1228
          %v1244 = vadd.f32 %v1243, %v1229
          %v1245 = vadd.f32 %v1244, %v1230
          %v1246 = vadd.f32 %v1245, %v1231
          %v1247 = vadd.f32 %v1246, %v1232
          %v1248 = vadd.f32 %v1247, %v1233
          %v1249 = vadd.f32 %v1248, %v1234
          %v1250 = vadd.f32 %v1249, %v1235
          %v1251 = vadd.f32 %v1250, %v1236
          %v1252 = vadd.f32 %v1251, %v1237
          %v1253 = vrot.slane %v1252, 4
          %v1254 = vadd.f32 %v1252, %v1253
          %v1255 = vrot.slane %v1254, 2
          %v1256 = vadd.f32 %v1254, %v1255
          %v1257 = vrot.slane %v1256, 1
          %v1258 = vadd.f32 %v1256, %v1257
          %v1259 = vmul.f32 %v1258, 0.015625
          %v1260 = vadd.f32 %v1259, 1e-05
          %v1261 = vrsqrt.pop %v1260
          %v1262 = vmul.f32 %v1261, %v1260
          %v1263 = vmul.f32 %v1262, %v1261
          %v1264 = vmul.f32 0.5, %v1263
          %v1265 = vsub.f32 1.5, %v1264
          %v1266 = vmul.f32 %v1261, %v1265
          %vm1267 = vweird.f32 %v1260
          %vm1268 = vweird.f32 %v1261
          %vm1269 = vmor %vm1267, %vm1268
          %v1270 = vsel %vm1269, %v1261, %v1266
          %v1271 = vmul.f32 %v1190, %v1270
          %v1272 = vmul.f32 %v1191, %v1270
          %v1273 = vmul.f32 %v1192, %v1270
          %v1274 = vmul.f32 %v1193, %v1270
          %v1275 = vmul.f32 %v1194, %v1270
          %v1276 = vmul.f32 %v1195, %v1270
          %v1277 = vmul.f32 %v1196, %v1270
          %v1278 = vmul.f32 %v1197, %v1270
          %v1279 = vmul.f32 %v1198, %v1270
          %v1280 = vmul.f32 %v1199, %v1270
          %v1281 = vmul.f32 %v1200, %v1270
          %v1282 = vmul.f32 %v1201, %v1270
          %v1283 = vmul.f32 %v1202, %v1270
          %v1284 = vmul.f32 %v1203, %v1270
          %v1285 = vmul.f32 %v1204, %v1270
          %v1286 = vmul.f32 %v1205, %v1270
          %vm1287 = vcmp.gt.f32.partialorder %v1271, 0.0
          %vm1288 = vcmp.gt.f32.partialorder %v1272, 0.0
          %vm1289 = vcmp.gt.f32.partialorder %v1273, 0.0
          %vm1290 = vcmp.gt.f32.partialorder %v1274, 0.0
          %vm1291 = vcmp.gt.f32.partialorder %v1275, 0.0
          %vm1292 = vcmp.gt.f32.partialorder %v1276, 0.0
          %vm1293 = vcmp.gt.f32.partialorder %v1277, 0.0
          %vm1294 = vcmp.gt.f32.partialorder %v1278, 0.0
          %vm1295 = vcmp.gt.f32.partialorder %v1279, 0.0
          %vm1296 = vcmp.gt.f32.partialorder %v1280, 0.0
          %vm1297 = vcmp.gt.f32.partialorder %v1281, 0.0
          %vm1298 = vcmp.gt.f32.partialorder %v1282, 0.0
          %vm1299 = vcmp.gt.f32.partialorder %v1283, 0.0
          %vm1300 = vcmp.gt.f32.partialorder %v1284, 0.0
          %vm1301 = vcmp.gt.f32.partialorder %v1285, 0.0
          %vm1302 = vcmp.gt.f32.partialorder %v1286, 0.0
          %v1303 = vmul.f32 %v1271, 0.2
          %v1304 = vmul.f32 %v1272, 0.2
          %v1305 = vmul.f32 %v1273, 0.2
          %v1306 = vmul.f32 %v1274, 0.2
          %v1307 = vmul.f32 %v1275, 0.2
          %v1308 = vmul.f32 %v1276, 0.2
          %v1309 = vmul.f32 %v1277, 0.2
          %v1310 = vmul.f32 %v1278, 0.2
          %v1311 = vmul.f32 %v1279, 0.2
          %v1312 = vmul.f32 %v1280, 0.2
          %v1313 = vmul.f32 %v1281, 0.2
          %v1314 = vmul.f32 %v1282, 0.2
          %v1315 = vmul.f32 %v1283, 0.2
          %v1316 = vmul.f32 %v1284, 0.2
          %v1317 = vmul.f32 %v1285, 0.2
          %v1318 = vmul.f32 %v1286, 0.2
          %v1319 = vsel %vm1287, %v1271, %v1303
          %v1320 = vsel %vm1288, %v1272, %v1304
          %v1321 = vsel %vm1289, %v1273, %v1305
          %v1322 = vsel %vm1290, %v1274, %v1306
          %v1323 = vsel %vm1291, %v1275, %v1307
          %v1324 = vsel %vm1292, %v1276, %v1308
          %v1325 = vsel %vm1293, %v1277, %v1309
          %v1326 = vsel %vm1294, %v1278, %v1310
          %v1327 = vsel %vm1295, %v1279, %v1311
          %v1328 = vsel %vm1296, %v1280, %v1312
          %v1329 = vsel %vm1297, %v1281, %v1313
          %v1330 = vsel %vm1298, %v1282, %v1314
          %v1331 = vsel %vm1299, %v1283, %v1315
          %v1332 = vsel %vm1300, %v1284, %v1316
          %v1333 = vsel %vm1301, %v1285, %v1317
          %v1334 = vsel %vm1302, %v1286, %v1318
          %v1335 = vsel %vm1136, %v1319, %v1071
          %v1336 = vsel %vm1137, %v1320, %v1072
          %v1337 = vsel %vm1138, %v1321, %v1073
          %v1338 = vsel %vm1139, %v1322, %v1074
          %v1339 = vsel %vm1140, %v1323, %v1075
          %v1340 = vsel %vm1141, %v1324, %v1076
          %v1341 = vsel %vm1142, %v1325, %v1077
          %v1342 = vsel %vm1143, %v1326, %v1078
          %v1343 = vsel %vm1144, %v1327, %v1079
          %v1344 = vsel %vm1145, %v1328, %v1080
          %v1345 = vsel %vm1146, %v1329, %v1081
          %v1346 = vsel %vm1147, %v1330, %v1082
          %v1347 = vsel %vm1148, %v1331, %v1083
          %v1348 = vsel %vm1149, %v1332, %v1084
          %v1349 = vsel %vm1150, %v1333, %v1085
          %v1350 = vsel %vm1151, %v1334, %v1086
          %vm1351 = vcmp.ge.s32.totalorder %v1088, 64
          %vm1352 = vcmp.ge.s32.totalorder %v1089, 64
          %vm1353 = vcmp.ge.s32.totalorder %v1090, 64
          %vm1354 = vcmp.ge.s32.totalorder %v1091, 64
          %vm1355 = vcmp.ge.s32.totalorder %v1092, 64
          %vm1356 = vcmp.ge.s32.totalorder %v1093, 64
          %vm1357 = vcmp.ge.s32.totalorder %v1094, 64
          %vm1358 = vcmp.ge.s32.totalorder %v1095, 64
          %vm1359 = vcmp.ge.s32.totalorder %v1096, 64
          %vm1360 = vcmp.ge.s32.totalorder %v1097, 64
          %vm1361 = vcmp.ge.s32.totalorder %v1098, 64
          %vm1362 = vcmp.ge.s32.totalorder %v1099, 64
          %vm1363 = vcmp.ge.s32.totalorder %v1100, 64
          %vm1364 = vcmp.ge.s32.totalorder %v1101, 64
          %vm1365 = vcmp.ge.s32.totalorder %v1102, 64
          %vm1366 = vcmp.ge.s32.totalorder %v1103, 64
          %vm1367 = vcmp.lt.s32.totalorder %v1088, 128
          %vm1368 = vcmp.lt.s32.totalorder %v1089, 128
          %vm1369 = vcmp.lt.s32.totalorder %v1090, 128
          %vm1370 = vcmp.lt.s32.totalorder %v1091, 128
          %vm1371 = vcmp.lt.s32.totalorder %v1092, 128
          %vm1372 = vcmp.lt.s32.totalorder %v1093, 128
          %vm1373 = vcmp.lt.s32.totalorder %v1094, 128
          %vm1374 = vcmp.lt.s32.totalorder %v1095, 128
          %vm1375 = vcmp.lt.s32.totalorder %v1096, 128
          %vm1376 = vcmp.lt.s32.totalorder %v1097, 128
          %vm1377 = vcmp.lt.s32.totalorder %v1098, 128
          %vm1378 = vcmp.lt.s32.totalorder %v1099, 128
          %vm1379 = vcmp.lt.s32.totalorder %v1100, 128
          %vm1380 = vcmp.lt.s32.totalorder %v1101, 128
          %vm1381 = vcmp.lt.s32.totalorder %v1102, 128
          %vm1382 = vcmp.lt.s32.totalorder %v1103, 128
          %vm1383 = vmand %vm1351, %vm1367
          %vm1384 = vmand %vm1352, %vm1368
          %vm1385 = vmand %vm1353, %vm1369
          %vm1386 = vmand %vm1354, %vm1370
          %vm1387 = vmand %vm1355, %vm1371
          %vm1388 = vmand %vm1356, %vm1372
          %vm1389 = vmand %vm1357, %vm1373
          %vm1390 = vmand %vm1358, %vm1374
          %vm1391 = vmand %vm1359, %vm1375
          %vm1392 = vmand %vm1360, %vm1376
          %vm1393 = vmand %vm1361, %vm1377
          %vm1394 = vmand %vm1362, %vm1378
          %vm1395 = vmand %vm1363, %vm1379
          %vm1396 = vmand %vm1364, %vm1380
          %vm1397 = vmand %vm1365, %vm1381
          %vm1398 = vmand %vm1366, %vm1382
          %v1399 = vsel %vm1383, %v1071, 0.0
          %v1400 = vsel %vm1384, %v1072, 0.0
          %v1401 = vsel %vm1385, %v1073, 0.0
          %v1402 = vsel %vm1386, %v1074, 0.0
          %v1403 = vsel %vm1387, %v1075, 0.0
          %v1404 = vsel %vm1388, %v1076, 0.0
          %v1405 = vsel %vm1389, %v1077, 0.0
          %v1406 = vsel %vm1390, %v1078, 0.0
          %v1407 = vsel %vm1391, %v1079, 0.0
          %v1408 = vsel %vm1392, %v1080, 0.0
          %v1409 = vsel %vm1393, %v1081, 0.0
          %v1410 = vsel %vm1394, %v1082, 0.0
          %v1411 = vsel %vm1395, %v1083, 0.0
          %v1412 = vsel %vm1396, %v1084, 0.0
          %v1413 = vsel %vm1397, %v1085, 0.0
          %v1414 = vsel %vm1398, %v1086, 0.0
          %v1415 = vadd.f32 %v1399, %v1400
          %v1416 = vadd.f32 %v1415, %v1401
          %v1417 = vadd.f32 %v1416, %v1402
          %v1418 = vadd.f32 %v1417, %v1403
          %v1419 = vadd.f32 %v1418, %v1404
          %v1420 = vadd.f32 %v1419, %v1405
          %v1421 = vadd.f32 %v1420, %v1406
          %v1422 = vadd.f32 %v1421, %v1407
          %v1423 = vadd.f32 %v1422, %v1408
          %v1424 = vadd.f32 %v1423, %v1409
          %v1425 = vadd.f32 %v1424, %v1410
          %v1426 = vadd.f32 %v1425, %v1411
          %v1427 = vadd.f32 %v1426, %v1412
          %v1428 = vadd.f32 %v1427, %v1413
          %v1429 = vadd.f32 %v1428, %v1414
          %v1430 = vrot.slane %v1429, 4
          %v1431 = vadd.f32 %v1429, %v1430
          %v1432 = vrot.slane %v1431, 2
          %v1433 = vadd.f32 %v1431, %v1432
          %v1434 = vrot.slane %v1433, 1
          %v1435 = vadd.f32 %v1433, %v1434
          %v1436 = vmul.f32 %v1435, 0.015625
          %v1437 = vsub.f32 %v1071, %v1436
          %v1438 = vsub.f32 %v1072, %v1436
          %v1439 = vsub.f32 %v1073, %v1436
          %v1440 = vsub.f32 %v1074, %v1436
          %v1441 = vsub.f32 %v1075, %v1436
          %v1442 = vsub.f32 %v1076, %v1436
          %v1443 = vsub.f32 %v1077, %v1436
          %v1444 = vsub.f32 %v1078, %v1436
          %v1445 = vsub.f32 %v1079, %v1436
          %v1446 = vsub.f32 %v1080, %v1436
          %v1447 = vsub.f32 %v1081, %v1436
          %v1448 = vsub.f32 %v1082, %v1436
          %v1449 = vsub.f32 %v1083, %v1436
          %v1450 = vsub.f32 %v1084, %v1436
          %v1451 = vsub.f32 %v1085, %v1436
          %v1452 = vsub.f32 %v1086, %v1436
          %v1453 = vsel %vm1383, %v1437, 0.0
          %v1454 = vsel %vm1384, %v1438, 0.0
          %v1455 = vsel %vm1385, %v1439, 0.0
          %v1456 = vsel %vm1386, %v1440, 0.0
          %v1457 = vsel %vm1387, %v1441, 0.0
          %v1458 = vsel %vm1388, %v1442, 0.0
          %v1459 = vsel %vm1389, %v1443, 0.0
          %v1460 = vsel %vm1390, %v1444, 0.0
          %v1461 = vsel %vm1391, %v1445, 0.0
          %v1462 = vsel %vm1392, %v1446, 0.0
          %v1463 = vsel %vm1393, %v1447, 0.0
          %v1464 = vsel %vm1394, %v1448, 0.0
          %v1465 = vsel %vm1395, %v1449, 0.0
          %v1466 = vsel %vm1396, %v1450, 0.0
          %v1467 = vsel %vm1397, %v1451, 0.0
          %v1468 = vsel %vm1398, %v1452, 0.0
          %v1469 = vmul.f32 %v1453, %v1453
          %v1470 = vmul.f32 %v1454, %v1454
          %v1471 = vmul.f32 %v1455, %v1455
          %v1472 = vmul.f32 %v1456, %v1456
          %v1473 = vmul.f32 %v1457, %v1457
          %v1474 = vmul.f32 %v1458, %v1458
          %v1475 = vmul.f32 %v1459, %v1459
          %v1476 = vmul.f32 %v1460, %v1460
          %v1477 = vmul.f32 %v1461, %v1461
          %v1478 = vmul.f32 %v1462, %v1462
          %v1479 = vmul.f32 %v1463, %v1463
          %v1480 = vmul.f32 %v1464, %v1464
          %v1481 = vmul.f32 %v1465, %v1465
          %v1482 = vmul.f32 %v1466, %v1466
          %v1483 = vmul.f32 %v1467, %v1467
          %v1484 = vmul.f32 %v1468, %v1468
          %v1485 = vadd.f32 %v1469, %v1470
          %v1486 = vadd.f32 %v1485, %v1471
          %v1487 = vadd.f32 %v1486, %v1472
          %v1488 = vadd.f32 %v1487, %v1473
          %v1489 = vadd.f32 %v1488, %v1474
          %v1490 = vadd.f32 %v1489, %v1475
          %v1491 = vadd.f32 %v1490, %v1476
          %v1492 = vadd.f32 %v1491, %v1477
          %v1493 = vadd.f32 %v1492, %v1478
          %v1494 = vadd.f32 %v1493, %v1479
          %v1495 = vadd.f32 %v1494, %v1480
          %v1496 = vadd.f32 %v1495, %v1481
          %v1497 = vadd.f32 %v1496, %v1482
          %v1498 = vadd.f32 %v1497, %v1483
          %v1499 = vadd.f32 %v1498, %v1484
          %v1500 = vrot.slane %v1499, 4
          %v1501 = vadd.f32 %v1499, %v1500
          %v1502 = vrot.slane %v1501, 2
          %v1503 = vadd.f32 %v1501, %v1502
          %v1504 = vrot.slane %v1503, 1
          %v1505 = vadd.f32 %v1503, %v1504
          %v1506 = vmul.f32 %v1505, 0.015625
          %v1507 = vadd.f32 %v1506, 1e-05
          %v1508 = vrsqrt.pop %v1507
          %v1509 = vmul.f32 %v1508, %v1507
          %v1510 = vmul.f32 %v1509, %v1508
          %v1511 = vmul.f32 0.5, %v1510
          %v1512 = vsub.f32 1.5, %v1511
          %v1513 = vmul.f32 %v1508, %v1512
          %vm1514 = vweird.f32 %v1507
          %vm1515 = vweird.f32 %v1508
          %vm1516 = vmor %vm1514, %vm1515
          %v1517 = vsel %vm1516, %v1508, %v1513
          %v1518 = vmul.f32 %v1437, %v1517
          %v1519 = vmul.f32 %v1438, %v1517
          %v1520 = vmul.f32 %v1439, %v1517
          %v1521 = vmul.f32 %v1440, %v1517
          %v1522 = vmul.f32 %v1441, %v1517
          %v1523 = vmul.f32 %v1442, %v1517
          %v1524 = vmul.f32 %v1443, %v1517
          %v1525 = vmul.f32 %v1444, %v1517
          %v1526 = vmul.f32 %v1445, %v1517
          %v1527 = vmul.f32 %v1446, %v1517
          %v1528 = vmul.f32 %v1447, %v1517
          %v1529 = vmul.f32 %v1448, %v1517
          %v1530 = vmul.f32 %v1449, %v1517
          %v1531 = vmul.f32 %v1450, %v1517
          %v1532 = vmul.f32 %v1451, %v1517
          %v1533 = vmul.f32 %v1452, %v1517
          %vm1534 = vcmp.gt.f32.partialorder %v1518, 0.0
          %vm1535 = vcmp.gt.f32.partialorder %v1519, 0.0
          %vm1536 = vcmp.gt.f32.partialorder %v1520, 0.0
          %vm1537 = vcmp.gt.f32.partialorder %v1521, 0.0
          %vm1538 = vcmp.gt.f32.partialorder %v1522, 0.0
          %vm1539 = vcmp.gt.f32.partialorder %v1523, 0.0
          %vm1540 = vcmp.gt.f32.partialorder %v1524, 0.0
          %vm1541 = vcmp.gt.f32.partialorder %v1525, 0.0
          %vm1542 = vcmp.gt.f32.partialorder %v1526, 0.0
          %vm1543 = vcmp.gt.f32.partialorder %v1527, 0.0
          %vm1544 = vcmp.gt.f32.partialorder %v1528, 0.0
          %vm1545 = vcmp.gt.f32.partialorder %v1529, 0.0
          %vm1546 = vcmp.gt.f32.partialorder %v1530, 0.0
          %vm1547 = vcmp.gt.f32.partialorder %v1531, 0.0
          %vm1548 = vcmp.gt.f32.partialorder %v1532, 0.0
          %vm1549 = vcmp.gt.f32.partialorder %v1533, 0.0
          %v1550 = vmul.f32 %v1518, 0.2
          %v1551 = vmul.f32 %v1519, 0.2
          %v1552 = vmul.f32 %v1520, 0.2
          %v1553 = vmul.f32 %v1521, 0.2
          %v1554 = vmul.f32 %v1522, 0.2
          %v1555 = vmul.f32 %v1523, 0.2
          %v1556 = vmul.f32 %v1524, 0.2
          %v1557 = vmul.f32 %v1525, 0.2
          %v1558 = vmul.f32 %v1526, 0.2
          %v1559 = vmul.f32 %v1527, 0.2
          %v1560 = vmul.f32 %v1528, 0.2
          %v1561 = vmul.f32 %v1529, 0.2
          %v1562 = vmul.f32 %v1530, 0.2
          %v1563 = vmul.f32 %v1531, 0.2
          %v1564 = vmul.f32 %v1532, 0.2
          %v1565 = vmul.f32 %v1533, 0.2
          %v1566 = vsel %vm1534, %v1518, %v1550
          %v1567 = vsel %vm1535, %v1519, %v1551
          %v1568 = vsel %vm1536, %v1520, %v1552
          %v1569 = vsel %vm1537, %v1521, %v1553
          %v1570 = vsel %vm1538, %v1522, %v1554
          %v1571 = vsel %vm1539, %v1523, %v1555
          %v1572 = vsel %vm1540, %v1524, %v1556
          %v1573 = vsel %vm1541, %v1525, %v1557
          %v1574 = vsel %vm1542, %v1526, %v1558
          %v1575 = vsel %vm1543, %v1527, %v1559
          %v1576 = vsel %vm1544, %v1528, %v1560
          %v1577 = vsel %vm1545, %v1529, %v1561
          %v1578 = vsel %vm1546, %v1530, %v1562
          %v1579 = vsel %vm1547, %v1531, %v1563
          %v1580 = vsel %vm1548, %v1532, %v1564
          %v1581 = vsel %vm1549, %v1533, %v1565
          %v1582 = vsel %vm1383, %v1566, %v1335
          %v1583 = vsel %vm1384, %v1567, %v1336
          %v1584 = vsel %vm1385, %v1568, %v1337
          %v1585 = vsel %vm1386, %v1569, %v1338
          %v1586 = vsel %vm1387, %v1570, %v1339
          %v1587 = vsel %vm1388, %v1571, %v1340
          %v1588 = vsel %vm1389, %v1572, %v1341
          %v1589 = vsel %vm1390, %v1573, %v1342
          %v1590 = vsel %vm1391, %v1574, %v1343
          %v1591 = vsel %vm1392, %v1575, %v1344
          %v1592 = vsel %vm1393, %v1576, %v1345
          %v1593 = vsel %vm1394, %v1577, %v1346
          %v1594 = vsel %vm1395, %v1578, %v1347
          %v1595 = vsel %vm1396, %v1579, %v1348
          %v1596 = vsel %vm1397, %v1580, %v1349
          %v1597 = vsel %vm1398, %v1581, %v1350
          %1598 = vst [vmem:[%s333] sm:$0xff] %v1582
          %1599 = vst [vmem:[%s333 + $0x8] sm:$0xff] %v1583
          %1600 = vst [vmem:[%s333 + $0x10] sm:$0xff] %v1584
          %1601 = vst [vmem:[%s333 + $0x18] sm:$0xff] %v1585
          %1602 = vst [vmem:[%s333 + $0x20] sm:$0xff] %v1586
          %1603 = vst [vmem:[%s333 + $0x28] sm:$0xff] %v1587
          %1604 = vst [vmem:[%s333 + $0x30] sm:$0xff] %v1588
          %1605 = vst [vmem:[%s333 + $0x38] sm:$0xff] %v1589
          %1606 = vst [vmem:[%s333 + $0x40] sm:$0xff] %v1590
          %1607 = vst [vmem:[%s333 + $0x48] sm:$0xff] %v1591
          %1608 = vst [vmem:[%s333 + $0x50] sm:$0xff] %v1592
          %1609 = vst [vmem:[%s333 + $0x58] sm:$0xff] %v1593
          %1610 = vst [vmem:[%s333 + $0x60] sm:$0xff] %v1594
          %1611 = vst [vmem:[%s333 + $0x68] sm:$0xff] %v1595
          %1612 = vst [vmem:[%s333 + $0x70] sm:$0xff] %v1596
          %1613 = vst [vmem:[%s333 + $0x78] sm:$0xff] %v1597
        $region63: #{discriminator_forward.6} parent=50 // pred_fallthru
          _
        %s1614 = smul.u32 16, %s19
        %p1615 = scmp.lt.s32.totalorder %s1614, 15
        %s1616 = scalar_select %p1615, %s1614, 15
        %p1617 = scmp.lt.s32.totalorder %s20, 0
        %s1618 = scalar_select %p1617, %s20, 0
        %s1619 = sadd.s32 %s1618, %s1616
        %s1620 = smul.addr %s1619, 8
        %s1621 = scalar_lea.vmem %s3, %s1620
        // Predicated region
        $region64: #{discriminator_forward.6} parent=50 // pred_check
          %p1622 = pneg %p135
        $region65: #{discriminator_forward.6} parent=50 // pred_check_branch
          %1624 = sbr.rel (%p1622) target = $region67
        $region66: #{discriminator_forward.6} parent=50 // pred_region
          %s1625 = smul.u32 16, %s19
        $region67: #{discriminator_forward.6} parent=50 // pred_fallthru
          _
        // Predicated region
        $region68: #{discriminator_forward.6} parent=50 // pred_check
          %p1626 = pneg %p135
        $region69: #{discriminator_forward.6} parent=50 // pred_check_branch
          %1628 = sbr.rel (%p1626) target = $region71
        $region70: #{discriminator_forward.6} parent=50 // pred_region
          %s1629 = smul.u32 16, %s19
          %p1630 = scmp.lt.s32.totalorder %s1629, 15
          %s1631 = scalar_select %p1630, %s1629, 15
          %p1632 = scmp.lt.s32.totalorder %s20, 0
          %s1633 = scalar_select %p1632, %s20, 0
          %s1634 = sadd.s32 %s1633, %s1631
          %s1635 = smul.addr %s1634, 8
          %s1636 = scalar_lea.vmem %s3, %s1635
        $region71: #{discriminator_forward.6} parent=50 // pred_fallthru
          _
      $region51: #{discriminator_forward.6} parent=5 // pred_fallthru
        _
      %p1637 = scmp.le.s32.totalorder 2, %s9
      // Predicated region
      $region72: #{discriminator_forward.6} parent=5 // pred_check
        %p1638 = pneg %p1637
      $region73: #{discriminator_forward.6} parent=5 // pred_check_branch
        %1640 = sbr.rel (%p1638) target = $region75
      $region74: #{discriminator_forward.6} parent=5 // pred_region
        %s1641 = ssub.s32 %s9, 2
      $region75: #{discriminator_forward.6} parent=5 // pred_fallthru
        _
    $region6: #{discriminator_forward.6} parent=1 // loop_footer
      %s13 = sadd.s32 1, %s9
    $region7: #{discriminator_forward.6} parent=1 // loop_footer_branch
      %8 = sbr.rel target = $region3
    $region8: #{discriminator_forward.6} parent=1 // loop_exit
      _

// kernel: discriminator_forward.7
$region0: #{discriminator_forward.7}
  #allocation0 [shape = 'u32[]', space=smem, size = 0x4, offset = 0x4, fixed_abs, tag = 'smem constant byte address 0x4 - core index']
  #allocation1 [shape = 'u32[72,128]{1,0:T(1,128)}', space=vmem, size = 0x9000, scoped, tag = 'internal scratch']
  #allocation2 [shape = 'f32[32,256]{1,0:T(8,128)}', space=vmem, size = 0x8000, scoped, tag = 'scratch operand']
  %s0 = inlined_call_operand.vmem [shape: bf16[32,2048], index: 0, kind: input, shape index: {}]
  %s1 = inlined_call_operand.vmem [shape: bf16[2048,256], index: 1, kind: input, shape index: {}]
  %s2 = inlined_call_operand.vmem [shape: f32[1,256], index: 2, kind: input, shape index: {}]
  %s3 = inlined_call_operand.vmem [shape: f32[32,256], index: 3, kind: output, shape index: {}]
  %s4 = sld [smem:[#allocation0]]
  $region76: #{discriminator_forward.7} parent=0
    _
  %s6 = ssub.s32 1, %s4
  %s7 = scalar_select 0, %s6, %s4
  $region1: #{discriminator_forward.7} parent=0
    #allocation3 [shape = 'u8[65536]{0}', space=vmem, size = 0x10000, scoped, tag = 'input window, operand 0']
    loop: start=0, step=1, limit=6
    $region2: #{discriminator_forward.7} parent=1 // loop_pre_header
      _
    $region3: #{discriminator_forward.7} parent=1 // loop_header
      %s9 = sphi 0, %s13
      %p10 = scmp.ge.s32.totalorder %s9, 6
      %s16 = sphi 0, %s35
      %s17 = sphi 0, %s31
      %s18 = sphi 0, %s27
      %s19 = sphi 0, %s16
      %s20 = sphi 0, %s17
      %s21 = sphi 0, %s18
      %s22 = sphi 0, %s19
      %s23 = sphi 0, %s20
      %s24 = sphi 0, %s21
      %s40 = sphi 0, %s42
      %s43 = sphi 0, %s40
      %s44 = sphi 0, %s43
      %s60 = sphi 0, %s44
      %s68 = sphi 0, %s70
      %s71 = sphi 0, %s68
      %s72 = sphi 0, %s71
      %s88 = sphi 0, %s72
      %s94 = sphi 0, %s96
      %s97 = sphi 0, %s94
      %s98 = sphi 0, %s97
      %s114 = sphi 0, %s98
      %s122 = sphi 0, %s124
      %s125 = sphi 0, %s122
      %s126 = sphi 0, %s125
      %s142 = sphi 0, %s126
    $region4: #{discriminator_forward.7} parent=1 // loop_header_branch
      %12 = sbr.rel (%p10) target = $region8
    $region5: #{discriminator_forward.7} parent=1 // loop_body
      %s14 = ssub.s32 %s9, 1
      %s15 = ssub.s32 %s9, 2
      %s25 = sadd.s32 1, %s18
      %p26 = scmp.ge.s32.totalorder %s25, 4
      %s27 = scalar_select %p26, 0, %s25
      %s28 = sadd.s32 1, %s17
      %s29 = scalar_select %p26, %s28, %s17
      %p30 = scmp.ge.s32.totalorder %s29, 1
      %s31 = scalar_select %p30, 0, %s29
      %s32 = sadd.s32 1, %s16
      %s33 = scalar_select %p30, %s32, %s16
      %p34 = scmp.ge.s32.totalorder %s33, 1
      %s35 = scalar_select %p34, 0, %s33
      %s36 = ssub.s32 %s16, %s35
      %s37 = ssub.s32 %s18, %s27
      %s38 = sor.u32 %s36, %s37
      %p39 = scmp.eq.s32.totalorder %s38, 0
      %s41 = sadd.s32 %s40, 1
      %s42 = scalar_select %p39, %s40, %s41
      %p45 = pneg %p39
      %p46 = scmp.eq.s32.totalorder %s9, 3
      %p47 = por %p45, %p46
      %p48 = scmp.ne.s32.totalorder %s40, %s43
      %p49 = scmp.eq.s32.totalorder %s9, 0
      %p50 = por %p48, %p49
      %p51 = scmp.ne.s32.totalorder %s40, %s43
      %p52 = scmp.eq.s32.totalorder %s14, 3
      %p53 = por %p51, %p52
      %p54 = scmp.ne.s32.totalorder %s43, %s44
      %p55 = scmp.eq.s32.totalorder %s14, 0
      %p56 = por %p54, %p55
      %p57 = scmp.ne.s32.totalorder %s43, %s44
      %p58 = scmp.eq.s32.totalorder %s15, 3
      %p59 = por %p57, %p58
      %p61 = scmp.ne.s32.totalorder %s44, %s60
      %p62 = scmp.eq.s32.totalorder %s15, 0
      %p63 = por %p61, %p62
      %s64 = ssub.s32 %s18, %s27
      %s65 = ssub.s32 %s17, %s31
      %s66 = sor.u32 %s64, %s65
      %p67 = scmp.eq.s32.totalorder %s66, 0
      %s69 = sadd.s32 %s68, 1
      %s70 = scalar_select %p67, %s68, %s69
      %p73 = pneg %p67
      %p74 = scmp.eq.s32.totalorder %s9, 3
      %p75 = por %p73, %p74
      %p76 = scmp.ne.s32.totalorder %s68, %s71
      %p77 = scmp.eq.s32.totalorder %s9, 0
      %p78 = por %p76, %p77
      %p79 = scmp.ne.s32.totalorder %s68, %s71
      %p80 = scmp.eq.s32.totalorder %s14, 3
      %p81 = por %p79, %p80
      %p82 = scmp.ne.s32.totalorder %s71, %s72
      %p83 = scmp.eq.s32.totalorder %s14, 0
      %p84 = por %p82, %p83
      %p85 = scmp.ne.s32.totalorder %s71, %s72
      %p86 = scmp.eq.s32.totalorder %s15, 3
      %p87 = por %p85, %p86
      %p89 = scmp.ne.s32.totalorder %s72, %s88
      %p90 = scmp.eq.s32.totalorder %s15, 0
      %p91 = por %p89, %p90
      %s92 = ssub.s32 %s17, %s31
      %p93 = scmp.eq.s32.totalorder %s92, 0
      %s95 = sadd.s32 %s94, 1
      %s96 = scalar_select %p93, %s94, %s95
      %p99 = pneg %p93
      %p100 = scmp.eq.s32.totalorder %s9, 3
      %p101 = por %p99, %p100
      %p102 = scmp.ne.s32.totalorder %s94, %s97
      %p103 = scmp.eq.s32.totalorder %s9, 0
      %p104 = por %p102, %p103
      %p105 = scmp.ne.s32.totalorder %s94, %s97
      %p106 = scmp.eq.s32.totalorder %s14, 3
      %p107 = por %p105, %p106
      %p108 = scmp.ne.s32.totalorder %s97, %s98
      %p109 = scmp.eq.s32.totalorder %s14, 0
      %p110 = por %p108, %p109
      %p111 = scmp.ne.s32.totalorder %s97, %s98
      %p112 = scmp.eq.s32.totalorder %s15, 3
      %p113 = por %p111, %p112
      %p115 = scmp.ne.s32.totalorder %s98, %s114
      %p116 = scmp.eq.s32.totalorder %s15, 0
      %p117 = por %p115, %p116
      %s118 = ssub.s32 %s16, %s35
      %s119 = ssub.s32 %s17, %s31
      %s120 = sor.u32 %s118, %s119
      %p121 = scmp.eq.s32.totalorder %s120, 0
      %s123 = sadd.s32 %s122, 1
      %s124 = scalar_select %p121, %s122, %s123
      %p127 = pneg %p121
      %p128 = scmp.eq.s32.totalorder %s9, 3
      %p129 = por %p127, %p128
      %p130 = scmp.ne.s32.totalorder %s122, %s125
      %p131 = scmp.eq.s32.totalorder %s9, 0
      %p132 = por %p130, %p131
      %p133 = scmp.ne.s32.totalorder %s122, %s125
      %p134 = scmp.eq.s32.totalorder %s14, 3
      %p135 = por %p133, %p134
      %p136 = scmp.ne.s32.totalorder %s125, %s126
      %p137 = scmp.eq.s32.totalorder %s14, 0
      %p138 = por %p136, %p137
      %p139 = scmp.ne.s32.totalorder %s125, %s126
      %p140 = scmp.eq.s32.totalorder %s15, 3
      %p141 = por %p139, %p140
      %p143 = scmp.ne.s32.totalorder %s126, %s142
      %p144 = scmp.eq.s32.totalorder %s15, 0
      %p145 = por %p143, %p144
      %p146 = scmp.le.s32.totalorder 1, %s9
      %p147 = scmp.lt.s32.totalorder %s9, 5
      %p148 = pnand %p146, %p147
      %p149 = pneg %p148
      // Predicated region
      $region9: #{discriminator_forward.7} parent=5 // pred_check
        _
      $region10: #{discriminator_forward.7} parent=5 // pred_check_branch
        %151 = sbr.rel (%p148) target = $region12
      $region11: #{discriminator_forward.7} parent=5 // pred_region
        %s152 = ssub.s32 %s9, 1
        // Predicated region
        $region13: #{discriminator_forward.7} parent=11 // pred_check
          %p153 = pneg %p110
        $region14: #{discriminator_forward.7} parent=11 // pred_check_branch
          %155 = sbr.rel (%p153) target = $region16
        $region15: #{discriminator_forward.7} parent=11 // pred_region
          %s156 = smul.u32 2, %s20
          %p157 = scmp.lt.s32.totalorder %s156, 1
          %s158 = scalar_select %p157, %s156, 1
          %s159 = scalar_lea.vmem %s2, %s158
          %s160 = smul.u32 2, %s20
        $region16: #{discriminator_forward.7} parent=11 // pred_fallthru
          _
      $region12: #{discriminator_forward.7} parent=5 // pred_fallthru
        _
      %p161 = scmp.lt.s32.totalorder %s9, 4
      // Predicated region
      $region17: #{discriminator_forward.7} parent=5 // pred_check
        %p162 = pneg %p161
      $region18: #{discriminator_forward.7} parent=5 // pred_check_branch
        %164 = sbr.rel (%p162) target = $region20
      $region19: #{discriminator_forward.7} parent=5 // pred_region
        // Predicated region
        $region21: #{discriminator_forward.7} parent=19 // pred_check
          %p165 = pneg %p50
        $region22: #{discriminator_forward.7} parent=19 // pred_check_branch
          %167 = sbr.rel (%p165) target = $region24
        $region23: #{discriminator_forward.7} parent=19 // pred_region
          %s168 = sand.u32 %s40, 1
          %s169 = sand.u32 %s40, 1
          %s170 = smul.addr %s169, 64
          %s171 = scalar_lea.vmem [#allocation3], %s170
          %s172 = smul.u32 4, %s16
          %s173 = smul.u32 4, %s18
          %s174 = smul.addr %s172, 16
          %s175 = sadd.s32 %s173, %s174
          %s176 = smul.addr %s175, 4
          %s177 = scalar_lea.vmem %s0, %s176
          // Predicated region
          $region25: #{discriminator_forward.7} parent=23 // pred_check
            _
          $region26: #{discriminator_forward.7} parent=23 // pred_check_branch
            %179 = sbr.rel (0) target = $region28
          $region27: #{discriminator_forward.7} parent=23 // pred_region
            // Predicated region
            $region29: #{discriminator_forward.7} parent=27 // pred_check
              _
            $region30: #{discriminator_forward.7} parent=27 // pred_check_branch
              %181 = sbr.rel (0) target = $region32
            $region31: #{discriminator_forward.7} parent=27 // pred_region
              loop: start=0, step=1, limit=1
              $region33: #{discriminator_forward.7} parent=31 // loop_pre_header
                _
              $region34: #{discriminator_forward.7} parent=31 // loop_header
                %s183 = sphi 0, %s187
                %p184 = scmp.ge.s32.totalorder %s183, 1
                %s188 = sphi %s177, %s177
                %s189 = sphi %s171, %s171
              $region35: #{discriminator_forward.7} parent=31 // loop_header_branch
                %186 = sbr.rel (%p184) target = $region39
              $region36: #{discriminator_forward.7} parent=31 // loop_body
                %v190 = vld [vmem:[%s188] sm:$0xff]
                %191 = vst [vmem:[%s189] sm:$0xff] %v190
                %v192 = vld [vmem:[%s188 + $0x8] sm:$0xff]
                %193 = vst [vmem:[%s189 + $0x8] sm:$0xff] %v192
                %v194 = vld [vmem:[%s188 + $0x40] sm:$0xff]
                %195 = vst [vmem:[%s189 + $0x10] sm:$0xff] %v194
                %v196 = vld [vmem:[%s188 + $0x48] sm:$0xff]
                %197 = vst [vmem:[%s189 + $0x18] sm:$0xff] %v196
                %v198 = vld [vmem:[%s188 + $0x80] sm:$0xff]
                %199 = vst [vmem:[%s189 + $0x20] sm:$0xff] %v198
                %v200 = vld [vmem:[%s188 + $0x88] sm:$0xff]
                %201 = vst [vmem:[%s189 + $0x28] sm:$0xff] %v200
                %v202 = vld [vmem:[%s188 + $0xc0] sm:$0xff]
                %203 = vst [vmem:[%s189 + $0x30] sm:$0xff] %v202
                %v204 = vld [vmem:[%s188 + $0xc8] sm:$0xff]
                %205 = vst [vmem:[%s189 + $0x38] sm:$0xff] %v204
              $region37: #{discriminator_forward.7} parent=31 // loop_footer
                %s187 = sadd.s32 1, %s183
              $region38: #{discriminator_forward.7} parent=31 // loop_footer_branch
                %182 = sbr.rel target = $region34
              $region39: #{discriminator_forward.7} parent=31 // loop_exit
                _
            $region32: #{discriminator_forward.7} parent=27 // pred_fallthru
              _
            // Predicated region
            $region40: #{discriminator_forward.7} parent=27 // pred_check
              _
            $region41: #{discriminator_forward.7} parent=27 // pred_check_branch
              %207 = sbr.rel target = $region43
            $region42: #{discriminator_forward.7} parent=27 // pred_region
              _
            $region43: #{discriminator_forward.7} parent=27 // pred_fallthru
              _
          $region28: #{discriminator_forward.7} parent=23 // pred_fallthru
            _
          %208 = vnop
        $region24: #{discriminator_forward.7} parent=19 // pred_fallthru
          _
        // Predicated region
        $region44: #{discriminator_forward.7} parent=19 // pred_check
          %p209 = pneg %p78
        $region45: #{discriminator_forward.7} parent=19 // pred_check_branch
          %211 = sbr.rel (%p209) target = $region47
        $region46: #{discriminator_forward.7} parent=19 // pred_region
          %s212 = smul.u32 64, %s18
          %s213 = smul.u32 2, %s17
          %p214 = scmp.lt.s32.totalorder %s212, 255
          %s215 = scalar_select %p214, %s212, 255
          %p216 = scmp.lt.s32.totalorder %s213, 1
          %s217 = scalar_select %p216, %s213, 1
          %s218 = smul.addr %s215, 2
          %s219 = sadd.s32 %s217, %s218
          %s220 = smul.addr %s219, 4
          %s221 = scalar_lea.vmem %s1, %s220
          %s222 = smul.u32 64, %s18
          %s223 = smul.u32 2, %s17
        $region47: #{discriminator_forward.7} parent=19 // pred_fallthru
          _
      $region20: #{discriminator_forward.7} parent=5 // pred_fallthru
        _
      %p224 = scmp.le.s32.totalorder 1, %s9
      %p225 = scmp.lt.s32.totalorder %s9, 5
      %p226 = pnand %p224, %p225
      %p227 = pneg %p226
      // Predicated region
      $region48: #{discriminator_forward.7} parent=5 // pred_check
        _
      $region49: #{discriminator_forward.7} parent=5 // pred_check_branch
        %229 = sbr.rel (%p226) target = $region51
      $region50: #{discriminator_forward.7} parent=5 // pred_region
        %s230 = ssub.s32 %s9, 1
        %s231 = sand.u32 %s43, 1
        %s232 = sand.u32 %s43, 1
        %s233 = smul.addr %s232, 64
        %s234 = scalar_lea.vmem [#allocation3], %s233
        // Predicated region
        $region52: #{discriminator_forward.7} parent=50 // pred_check
          %p235 = pneg %p56
        $region53: #{discriminator_forward.7} parent=50 // pred_check_branch
          %237 = sbr.rel (%p235) target = $region55
        $region54: #{discriminator_forward.7} parent=50 // pred_region
          _
        $region55: #{discriminator_forward.7} parent=50 // pred_fallthru
          _
        %s238 = sand.u32 %s43, 1
        %s239 = sand.u32 %s43, 1
        %s240 = smul.addr %s239, 64
        %s241 = scalar_lea.vmem [#allocation3], %s240
        %p242 = pneg %p56
        %p243 = pneg %p53
        %s244 = smul.u32 64, %s21
        %s245 = smul.u32 2, %s20
        %p246 = scmp.lt.s32.totalorder %s244, 255
        %s247 = scalar_select %p246, %s244, 255
        %p248 = scmp.lt.s32.totalorder %s245, 1
        %s249 = scalar_select %p248, %s245, 1
        %s250 = smul.addr %s247, 2
        %s251 = sadd.s32 %s249, %s250
        %s252 = smul.addr %s251, 4
        %s253 = scalar_lea.vmem %s1, %s252
        %p254 = pneg %p84
        %p255 = pneg %p81
        %s256 = smul.u32 2, %s20
        %p257 = scmp.lt.s32.totalorder %s256, 1
        %s258 = scalar_select %p257, %s256, 1
        %s259 = scalar_lea.vmem %s2, %s258
        %p260 = pneg %p110
        %p261 = pneg %p107
        %p262 = pneg %p138
        %p263 = pneg %p135
        %s264 = smul.u32 4, %s19
        %s265 = smul.u32 2, %s20
        %p266 = scmp.lt.s32.totalorder %s264, 3
        %s267 = scalar_select %p266, %s264, 3
        %p268 = scmp.lt.s32.totalorder %s265, 1
        %s269 = scalar_select %p268, %s265, 1
        %s270 = smul.addr %s267, 2
        %s271 = sadd.s32 %s269, %s270
        %s272 = smul.addr %s271, 8
        %s273 = scalar_lea.vmem %s3, %s272
        %s274 = smul.u32 4, %s19
        %s275 = smul.u32 4, %s21
        %s276 = smul.u32 64, %s21
        %s277 = smul.u32 2, %s20
        %p278 = scmp.lt.s32.totalorder %s276, 255
        %s279 = scalar_select %p278, %s276, 255
        %p280 = scmp.lt.s32.totalorder %s277, 1
        %s281 = scalar_select %p280, %s277, 1
        %s282 = smul.addr %s279, 2
        %s283 = sadd.s32 %s281, %s282
        %s284 = smul.addr %s283, 4
        %s285 = scalar_lea.vmem %s1, %s284
        %s286 = smul.u32 64, %s21
        %s287 = smul.u32 2, %s20
        %s288 = smul.u32 2, %s20
        %p289 = scmp.lt.s32.totalorder %s288, 1
        %s290 = scalar_select %p289, %s288, 1
        %s291 = scalar_lea.vmem %s2, %s290
        %s292 = smul.u32 2, %s20
        %s293 = smul.u32 4, %s19
        %s294 = smul.u32 2, %s20
        %p295 = scmp.lt.s32.totalorder %s293, 3
        %s296 = scalar_select %p295, %s293, 3
        %p297 = scmp.lt.s32.totalorder %s294, 1
        %s298 = scalar_select %p297, %s294, 1
        %s299 = smul.addr %s296, 2
        %s300 = sadd.s32 %s298, %s299
        %s301 = smul.addr %s300, 8
        %s302 = scalar_lea.vmem %s3, %s301
        %s303 = smul.u32 4, %s19
        %s304 = smul.u32 2, %s20
        %p305 = scmp.eq.s32.totalorder %s21, 0
        // Predicated region
        $region56: #{discriminator_forward.7} parent=50 // pred_check
          %p306 = pneg %p305
        $region57: #{discriminator_forward.7} parent=50 // pred_check_branch
          %308 = sbr.rel (%p306) target = $region59
        $region58: #{discriminator_forward.7} parent=50 // pred_region
          %309 = vst [vmem:[#allocation2] sm:$0xff] 0.0
          %310 = vst [vmem:[#allocation2 + $0x8] sm:$0xff] 0.0
          %311 = vst [vmem:[#allocation2 + $0x10] sm:$0xff] 0.0
          %312 = vst [vmem:[#allocation2 + $0x18] sm:$0xff] 0.0
          %313 = vst [vmem:[#allocation2 + $0x20] sm:$0xff] 0.0
          %314 = vst [vmem:[#allocation2 + $0x28] sm:$0xff] 0.0
          %315 = vst [vmem:[#allocation2 + $0x30] sm:$0xff] 0.0
          %316 = vst [vmem:[#allocation2 + $0x38] sm:$0xff] 0.0
        $region59: #{discriminator_forward.7} parent=50 // pred_fallthru
          _
        %v317 = vld [vmem:[#allocation2] sm:$0xff]
        %v318 = vld [vmem:[#allocation2 + $0x8] sm:$0xff]
        %v319 = vld [vmem:[#allocation2 + $0x10] sm:$0xff]
        %v320 = vld [vmem:[#allocation2 + $0x18] sm:$0xff]
        %v321 = vld [vmem:[#allocation2 + $0x20] sm:$0xff]
        %v322 = vld [vmem:[#allocation2 + $0x28] sm:$0xff]
        %v323 = vld [vmem:[#allocation2 + $0x30] sm:$0xff]
        %v324 = vld [vmem:[#allocation2 + $0x38] sm:$0xff]
        %v325 = vld [vmem:[%s234] sm:$0xff]
        %v326 = vld [vmem:[%s234 + $0x8] sm:$0xff]
        %v327 = vld [vmem:[%s234 + $0x10] sm:$0xff]
        %v328 = vld [vmem:[%s234 + $0x18] sm:$0xff]
        %v329 = vld [vmem:[%s234 + $0x20] sm:$0xff]
        %v330 = vld [vmem:[%s234 + $0x28] sm:$0xff]
        %v331 = vld [vmem:[%s234 + $0x30] sm:$0xff]
        %v332 = vld [vmem:[%s234 + $0x38] sm:$0xff]
        %v333 = vld [vmem:[%s285] sm:$0xff]
        %v334 = vld [vmem:[%s285 + $0x8] sm:$0xff]
        %v335 = vld [vmem:[%s285 + $0x10] sm:$0xff]
        %v336 = vld [vmem:[%s285 + $0x18] sm:$0xff]
        %v337 = vld [vmem:[%s285 + $0x20] sm:$0xff]
        %v338 = vld [vmem:[%s285 + $0x28] sm:$0xff]
        %v339 = vld [vmem:[%s285 + $0x30] sm:$0xff]
        %v340 = vld [vmem:[%s285 + $0x38] sm:$0xff]
        %v341 = vld [vmem:[%s285 + $0x40] sm:$0xff]
        %v342 = vld [vmem:[%s285 + $0x48] sm:$0xff]
        %v343 = vld [vmem:[%s285 + $0x50] sm:$0xff]
        %v344 = vld [vmem:[%s285 + $0x58] sm:$0xff]
        %v345 = vld [vmem:[%s285 + $0x60] sm:$0xff]
        %v346 = vld [vmem:[%s285 + $0x68] sm:$0xff]
        %v347 = vld [vmem:[%s285 + $0x70] sm:$0xff]
        %v348 = vld [vmem:[%s285 + $0x78] sm:$0xff]
        %v349 = vld [vmem:[%s285 + $0x80] sm:$0xff]
        %v350 = vld [vmem:[%s285 + $0x88] sm:$0xff]
        %v351 = vld [vmem:[%s285 + $0x90] sm:$0xff]
        %v352 = vld [vmem:[%s285 + $0x98] sm:$0xff]
        %v353 = vld [vmem:[%s285 + $0xa0] sm:$0xff]
        %v354 = vld [vmem:[%s285 + $0xa8] sm:$0xff]
        %v355 = vld [vmem:[%s285 + $0xb0] sm:$0xff]
        %v356 = vld [vmem:[%s285 + $0xb8] sm:$0xff]
        %v357 = vld [vmem:[%s285 + $0xc0] sm:$0xff]
        %v358 = vld [vmem:[%s285 + $0xc8] sm:$0xff]
        %v359 = vld [vmem:[%s285 + $0xd0] sm:$0xff]
        %v360 = vld [vmem:[%s285 + $0xd8] sm:$0xff]
        %v361 = vld [vmem:[%s285 + $0xe0] sm:$0xff]
        %v362 = vld [vmem:[%s285 + $0xe8] sm:$0xff]
        %v363 = vld [vmem:[%s285 + $0xf0] sm:$0xff]
        %v364 = vld [vmem:[%s285 + $0xf8] sm:$0xff]
        %v365 = vld [vmem:[%s285 + $0x100] sm:$0xff]
        %v366 = vld [vmem:[%s285 + $0x108] sm:$0xff]
        %v367 = vld [vmem:[%s285 + $0x110] sm:$0xff]
        %v368 = vld [vmem:[%s285 + $0x118] sm:$0xff]
        %v369 = vld [vmem:[%s285 + $0x120] sm:$0xff]
        %v370 = vld [vmem:[%s285 + $0x128] sm:$0xff]
        %v371 = vld [vmem:[%s285 + $0x130] sm:$0xff]
        %v372 = vld [vmem:[%s285 + $0x138] sm:$0xff]
        %v373 = vld [vmem:[%s285 + $0x140] sm:$0xff]
        %v374 = vld [vmem:[%s285 + $0x148] sm:$0xff]
        %v375 = vld [vmem:[%s285 + $0x150] sm:$0xff]
        %v376 = vld [vmem:[%s285 + $0x158] sm:$0xff]
        %v377 = vld [vmem:[%s285 + $0x160] sm:$0xff]
        %v378 = vld [vmem:[%s285 + $0x168] sm:$0xff]
        %v379 = vld [vmem:[%s285 + $0x170] sm:$0xff]
        %v380 = vld [vmem:[%s285 + $0x178] sm:$0xff]
        %v381 = vld [vmem:[%s285 + $0x180] sm:$0xff]
        %v382 = vld [vmem:[%s285 + $0x188] sm:$0xff]
        %v383 = vld [vmem:[%s285 + $0x190] sm:$0xff]
        %v384 = vld [vmem:[%s285 + $0x198] sm:$0xff]
        %v385 = vld [vmem:[%s285 + $0x1a0] sm:$0xff]
        %v386 = vld [vmem:[%s285 + $0x1a8] sm:$0xff]
        %v387 = vld [vmem:[%s285 + $0x1b0] sm:$0xff]
        %v388 = vld [vmem:[%s285 + $0x1b8] sm:$0xff]
        %v389 = vld [vmem:[%s285 + $0x1c0] sm:$0xff]
        %v390 = vld [vmem:[%s285 + $0x1c8] sm:$0xff]
        %v391 = vld [vmem:[%s285 + $0x1d0] sm:$0xff]
        %v392 = vld [vmem:[%s285 + $0x1d8] sm:$0xff]
        %v393 = vld [vmem:[%s285 + $0x1e0] sm:$0xff]
        %v394 = vld [vmem:[%s285 + $0x1e8] sm:$0xff]
        %v395 = vld [vmem:[%s285 + $0x1f0] sm:$0xff]
        %v396 = vld [vmem:[%s285 + $0x1f8] sm:$0xff]
        %v405 = vunpack.c.l.b16 %v325
        %v406 = vunpack.c.h.b16 %v325
        %v407 = vunpack.c.l.b16 %v326
        %v408 = vunpack.c.h.b16 %v326
        %v409 = vunpack.c.l.b16 %v327
        %v410 = vunpack.c.h.b16 %v327
        %v411 = vunpack.c.l.b16 %v328
        %v412 = vunpack.c.h.b16 %v328
        %v413 = vunpack.c.l.b16 %v329
        %v414 = vunpack.c.h.b16 %v329
        %v415 = vunpack.c.l.b16 %v330
        %v416 = vunpack.c.h.b16 %v330
        %v417 = vunpack.c.l.b16 %v331
        %v418 = vunpack.c.h.b16 %v331
        %v419 = vunpack.c.l.b16 %v332
        %v420 = vunpack.c.h.b16 %v332
        %v421 = vpack.c.b16 %v409, %v405
        %v422 = vpack.c.b16 %v410, %v406
        %v423 = vpack.c.b16 %v411, %v407
        %v424 = vpack.c.b16 %v412, %v408
        %v425 = vpack.c.b16 %v417, %v413
        %v426 = vpack.c.b16 %v418, %v414
        %v427 = vpack.c.b16 %v419, %v415
        %v428 = vpack.c.b16 %v420, %v416
        %v501 = vunpack.c.l.b16 %v333
        %v502 = vunpack.c.h.b16 %v333
        %v503 = vunpack.c.l.b16 %v334
        %v504 = vunpack.c.h.b16 %v334
        %v505 = vunpack.c.l.b16 %v335
        %v506 = vunpack.c.h.b16 %v335
        %v507 = vunpack.c.l.b16 %v336
        %v508 = vunpack.c.h.b16 %v336
        %v509 = vunpack.c.l.b16 %v337
        %v510 = vunpack.c.h.b16 %v337
        %v511 = vunpack.c.l.b16 %v338
        %v512 = vunpack.c.h.b16 %v338
        %v513 = vunpack.c.l.b16 %v339
        %v514 = vunpack.c.h.b16 %v339
        %v515 = vunpack.c.l.b16 %v340
        %v516 = vunpack.c.h.b16 %v340
        %v517 = vunpack.c.l.b16 %v341
        %v518 = vunpack.c.h.b16 %v341
        %v519 = vunpack.c.l.b16 %v342
        %v520 = vunpack.c.h.b16 %v342
        %v521 = vunpack.c.l.b16 %v343
        %v522 = vunpack.c.h.b16 %v343
        %v523 = vunpack.c.l.b16 %v344
        %v524 = vunpack.c.h.b16 %v344
        %v525 = vunpack.c.l.b16 %v345
        %v526 = vunpack.c.h.b16 %v345
        %v527 = vunpack.c.l.b16 %v346
        %v528 = vunpack.c.h.b16 %v346
        %v529 = vunpack.c.l.b16 %v347
        %v530 = vunpack.c.h.b16 %v347
        %v531 = vunpack.c.l.b16 %v348
        %v532 = vunpack.c.h.b16 %v348
        %v533 = vunpack.c.l.b16 %v349
        %v534 = vunpack.c.h.b16 %v349
        %v535 = vunpack.c.l.b16 %v350
        %v536 = vunpack.c.h.b16 %v350
        %v537 = vunpack.c.l.b16 %v351
        %v538 = vunpack.c.h.b16 %v351
        %v539 = vunpack.c.l.b16 %v352
        %v540 = vunpack.c.h.b16 %v352
        %v541 = vunpack.c.l.b16 %v353
        %v542 = vunpack.c.h.b16 %v353
        %v543 = vunpack.c.l.b16 %v354
        %v544 = vunpack.c.h.b16 %v354
        %v545 = vunpack.c.l.b16 %v355
        %v546 = vunpack.c.h.b16 %v355
        %v547 = vunpack.c.l.b16 %v356
        %v548 = vunpack.c.h.b16 %v356
        %v549 = vunpack.c.l.b16 %v357
        %v550 = vunpack.c.h.b16 %v357
        %v551 = vunpack.c.l.b16 %v358
        %v552 = vunpack.c.h.b16 %v358
        %v553 = vunpack.c.l.b16 %v359
        %v554 = vunpack.c.h.b16 %v359
        %v555 = vunpack.c.l.b16 %v360
        %v556 = vunpack.c.h.b16 %v360
        %v557 = vunpack.c.l.b16 %v361
        %v558 = vunpack.c.h.b16 %v361
        %v559 = vunpack.c.l.b16 %v362
        %v560 = vunpack.c.h.b16 %v362
        %v561 = vunpack.c.l.b16 %v363
        %v562 = vunpack.c.h.b16 %v363
        %v563 = vunpack.c.l.b16 %v364
        %v564 = vunpack.c.h.b16 %v364
        %v565 = vunpack.c.l.b16 %v365
        %v566 = vunpack.c.h.b16 %v365
        %v567 = vunpack.c.l.b16 %v366
        %v568 = vunpack.c.h.b16 %v366
        %v569 = vunpack.c.l.b16 %v367
        %v570 = vunpack.c.h.b16 %v367
        %v571 = vunpack.c.l.b16 %v368
        %v572 = vunpack.c.h.b16 %v368
        %v573 = vunpack.c.l.b16 %v369
        %v574 = vunpack.c.h.b16 %v369
        %v575 = vunpack.c.l.b16 %v370
        %v576 = vunpack.c.h.b16 %v370
        %v577 = vunpack.c.l.b16 %v371
        %v578 = vunpack.c.h.b16 %v371
        %v579 = vunpack.c.l.b16 %v372
        %v580 = vunpack.c.h.b16 %v372
        %v581 = vunpack.c.l.b16 %v373
        %v582 = vunpack.c.h.b16 %v373
        %v583 = vunpack.c.l.b16 %v374
        %v584 = vunpack.c.h.b16 %v374
        %v585 = vunpack.c.l.b16 %v375
        %v586 = vunpack.c.h.b16 %v375
        %v587 = vunpack.c.l.b16 %v376
        %v588 = vunpack.c.h.b16 %v376
        %v589 = vunpack.c.l.b16 %v377
        %v590 = vunpack.c.h.b16 %v377
        %v591 = vunpack.c.l.b16 %v378
        %v592 = vunpack.c.h.b16 %v378
        %v593 = vunpack.c.l.b16 %v379
        %v594 = vunpack.c.h.b16 %v379
        %v595 = vunpack.c.l.b16 %v380
        %v596 = vunpack.c.h.b16 %v380
        %v597 = vunpack.c.l.b16 %v381
        %v598 = vunpack.c.h.b16 %v381
        %v599 = vunpack.c.l.b16 %v382
        %v600 = vunpack.c.h.b16 %v382
        %v601 = vunpack.c.l.b16 %v383
        %v602 = vunpack.c.h.b16 %v383
        %v603 = vunpack.c.l.b16 %v384
        %v604 = vunpack.c.h.b16 %v384
        %v605 = vunpack.c.l.b16 %v385
        %v606 = vunpack.c.h.b16 %v385
        %v607 = vunpack.c.l.b16 %v386
        %v608 = vunpack.c.h.b16 %v386
        %v609 = vunpack.c.l.b16 %v387
        %v610 = vunpack.c.h.b16 %v387
        %v611 = vunpack.c.l.b16 %v388
        %v612 = vunpack.c.h.b16 %v388
        %v613 = vunpack.c.l.b16 %v389
        %v614 = vunpack.c.h.b16 %v389
        %v615 = vunpack.c.l.b16 %v390
        %v616 = vunpack.c.h.b16 %v390
        %v617 = vunpack.c.l.b16 %v391
        %v618 = vunpack.c.h.b16 %v391
        %v619 = vunpack.c.l.b16 %v392
        %v620 = vunpack.c.h.b16 %v392
        %v621 = vunpack.c.l.b16 %v393
        %v622 = vunpack.c.h.b16 %v393
        %v623 = vunpack.c.l.b16 %v394
        %v624 = vunpack.c.h.b16 %v394
        %v625 = vunpack.c.l.b16 %v395
        %v626 = vunpack.c.h.b16 %v395
        %v627 = vunpack.c.l.b16 %v396
        %v628 = vunpack.c.h.b16 %v396
        %v629 = vpack.c.b16 %v503, %v501
        %v630 = vpack.c.b16 %v504, %v502
        %v631 = vpack.c.b16 %v507, %v505
        %v632 = vpack.c.b16 %v508, %v506
        %v633 = vpack.c.b16 %v511, %v509
        %v634 = vpack.c.b16 %v512, %v510
        %v635 = vpack.c.b16 %v515, %v513
        %v636 = vpack.c.b16 %v516, %v514
        %v637 = vpack.c.b16 %v519, %v517
        %v638 = vpack.c.b16 %v520, %v518
        %v639 = vpack.c.b16 %v523, %v521
        %v640 = vpack.c.b16 %v524, %v522
        %v641 = vpack.c.b16 %v527, %v525
        %v642 = vpack.c.b16 %v528, %v526
        %v643 = vpack.c.b16 %v531, %v529
        %v644 = vpack.c.b16 %v532, %v530
        %v645 = vpack.c.b16 %v535, %v533
        %v646 = vpack.c.b16 %v536, %v534
        %v647 = vpack.c.b16 %v539, %v537
        %v648 = vpack.c.b16 %v540, %v538
        %v649 = vpack.c.b16 %v543, %v541
        %v650 = vpack.c.b16 %v544, %v542
        %v651 = vpack.c.b16 %v547, %v545
        %v652 = vpack.c.b16 %v548, %v546
        %v653 = vpack.c.b16 %v551, %v549
        %v654 = vpack.c.b16 %v552, %v550
        %v655 = vpack.c.b16 %v555, %v553
        %v656 = vpack.c.b16 %v556, %v554
        %v657 = vpack.c.b16 %v559, %v557
        %v658 = vpack.c.b16 %v560, %v558
        %v659 = vpack.c.b16 %v563, %v561
        %v660 = vpack.c.b16 %v564, %v562
        %v661 = vpack.c.b16 %v567, %v565
        %v662 = vpack.c.b16 %v568, %v566
        %v663 = vpack.c.b16 %v571, %v569
        %v664 = vpack.c.b16 %v572, %v570
        %v665 = vpack.c.b16 %v575, %v573
        %v666 = vpack.c.b16 %v576, %v574
        %v667 = vpack.c.b16 %v579, %v577
        %v668 = vpack.c.b16 %v580, %v578
        %v669 = vpack.c.b16 %v583, %v581
        %v670 = vpack.c.b16 %v584, %v582
        %v671 = vpack.c.b16 %v587, %v585
        %v672 = vpack.c.b16 %v588, %v586
        %v673 = vpack.c.b16 %v591, %v589
        %v674 = vpack.c.b16 %v592, %v590
        %v675 = vpack.c.b16 %v595, %v593
        %v676 = vpack.c.b16 %v596, %v594
        %v677 = vpack.c.b16 %v599, %v597
        %v678 = vpack.c.b16 %v600, %v598
        %v679 = vpack.c.b16 %v603, %v601
        %v680 = vpack.c.b16 %v604, %v602
        %v681 = vpack.c.b16 %v607, %v605
        %v682 = vpack.c.b16 %v608, %v606
        %v683 = vpack.c.b16 %v611, %v609
        %v684 = vpack.c.b16 %v612, %v610
        %v685 = vpack.c.b16 %v615, %v613
        %v686 = vpack.c.b16 %v616, %v614
        %v687 = vpack.c.b16 %v619, %v617
        %v688 = vpack.c.b16 %v620, %v618
        %v689 = vpack.c.b16 %v623, %v621
        %v690 = vpack.c.b16 %v624, %v622
        %v691 = vpack.c.b16 %v627, %v625
        %v692 = vpack.c.b16 %v628, %v626
        %757 = vmatpush.bf16.msra.mxu0 %v643
        %758 = vmatpush.bf16.msra.mxu0 %v641
        %759 = vmatpush.bf16.msra.mxu0 %v639
        %760 = vmatpush.bf16.msra.mxu0 %v637
        %761 = vmatpush.bf16.msra.mxu0 %v635
        %762 = vmatpush.bf16.msra.mxu0 %v633
        %763 = vmatpush.bf16.msra.mxu0 %v631
        %764 = vmatpush.bf16.msra.mxu0 %v629
        %765 = vmatmul.bf16.gmra.mxu0 %v421
        %v766 = vpop.f32.mrf.mxu0
        %v767 = vadd.f32 0.0, %v766
        %v768 = vpop.f32.mrf.mxu0
        %v769 = vadd.f32 0.0, %v768
        %770 = vmatmul.bf16.gmra.mxu0 %v425
        %v771 = vpop.f32.mrf.mxu0
        %v772 = vadd.f32 0.0, %v771
        %v773 = vpop.f32.mrf.mxu0
        %v774 = vadd.f32 0.0, %v773
        %775 = vdwg.mxu0
        %776 = vmatpush.bf16.msra.mxu0 %v659
        %777 = vmatpush.bf16.msra.mxu0 %v657
        %778 = vmatpush.bf16.msra.mxu0 %v655
        %779 = vmatpush.bf16.msra.mxu0 %v653
        %780 = vmatpush.bf16.msra.mxu0 %v651
        %781 = vmatpush.bf16.msra.mxu0 %v649
        %782 = vmatpush.bf16.msra.mxu0 %v647
        %783 = vmatpush.bf16.msra.mxu0 %v645
        %784 = vmatmul.bf16.gmra.mxu0 %v422
        %v785 = vpop.f32.mrf.mxu0
        %v786 = vadd.f32 %v767, %v785
        %v787 = vpop.f32.mrf.mxu0
        %v788 = vadd.f32 %v769, %v787
        %789 = vmatmul.bf16.gmra.mxu0 %v426
        %v790 = vpop.f32.mrf.mxu0
        %v791 = vadd.f32 %v772, %v790
        %v792 = vpop.f32.mrf.mxu0
        %v793 = vadd.f32 %v774, %v792
        %794 = vdwg.mxu0
        %795 = vmatpush.bf16.msra.mxu0 %v675
        %796 = vmatpush.bf16.msra.mxu0 %v673
        %797 = vmatpush.bf16.msra.mxu0 %v671
        %798 = vmatpush.bf16.msra.mxu0 %v669
        %799 = vmatpush.bf16.msra.mxu0 %v667
        %800 = vmatpush.bf16.msra.mxu0 %v665
        %801 = vmatpush.bf16.msra.mxu0 %v663
        %802 = vmatpush.bf16.msra.mxu0 %v661
        %803 = vmatmul.bf16.gmra.mxu0 %v423
        %v804 = vpop.f32.mrf.mxu0
        %v805 = vadd.f32 %v786, %v804
        %v806 = vpop.f32.mrf.mxu0
        %v807 = vadd.f32 %v788, %v806
        %808 = vmatmul.bf16.gmra.mxu0 %v427
        %v809 = vpop.f32.mrf.mxu0
        %v810 = vadd.f32 %v791, %v809
        %v811 = vpop.f32.mrf.mxu0
        %v812 = vadd.f32 %v793, %v811
        %813 = vdwg.mxu0
        %814 = vmatpush.bf16.msra.mxu0 %v691
        %815 = vmatpush.bf16.msra.mxu0 %v689
        %816 = vmatpush.bf16.msra.mxu0 %v687
        %817 = vmatpush.bf16.msra.mxu0 %v685
        %818 = vmatpush.bf16.msra.mxu0 %v683
        %819 = vmatpush.bf16.msra.mxu0 %v681
        %820 = vmatpush.bf16.msra.mxu0 %v679
        %821 = vmatpush.bf16.msra.mxu0 %v677
        %822 = vmatmul.bf16.gmra.mxu0 %v424
        %v823 = vpop.f32.mrf.mxu0
        %v824 = vadd.f32 %v805, %v823
        %v825 = vpop.f32.mrf.mxu0
        %v826 = vadd.f32 %v807, %v825
        %827 = vmatmul.bf16.gmra.mxu0 %v428
        %v828 = vpop.f32.mrf.mxu0
        %v829 = vadd.f32 %v810, %v828
        %v830 = vpop.f32.mrf.mxu0
        %v831 = vadd.f32 %v812, %v830
        %832 = vdwg.mxu0
        %833 = vmatpush.bf16.msra.mxu0 %v644
        %834 = vmatpush.bf16.msra.mxu0 %v642
        %835 = vmatpush.bf16.msra.mxu0 %v640
        %836 = vmatpush.bf16.msra.mxu0 %v638
        %837 = vmatpush.bf16.msra.mxu0 %v636
        %838 = vmatpush.bf16.msra.mxu0 %v634
        %839 = vmatpush.bf16.msra.mxu0 %v632
        %840 = vmatpush.bf16.msra.mxu0 %v630
        %841 = vmatmul.bf16.gmra.mxu0 %v421
        %v842 = vpop.f32.mrf.mxu0
        %v843 = vadd.f32 0.0, %v842
        %v844 = vpop.f32.mrf.mxu0
        %v845 = vadd.f32 0.0, %v844
        %846 = vmatmul.bf16.gmra.mxu0 %v425
        %v847 = vpop.f32.mrf.mxu0
        %v848 = vadd.f32 0.0, %v847
        %v849 = vpop.f32.mrf.mxu0
        %v850 = vadd.f32 0.0, %v849
        %851 = vdwg.mxu0
        %852 = vmatpush.bf16.msra.mxu0 %v660
        %853 = vmatpush.bf16.msra.mxu0 %v658
        %854 = vmatpush.bf16.msra.mxu0 %v656
        %855 = vmatpush.bf16.msra.mxu0 %v654
        %856 = vmatpush.bf16.msra.mxu0 %v652
        %857 = vmatpush.bf16.msra.mxu0 %v650
        %858 = vmatpush.bf16.msra.mxu0 %v648
        %859 = vmatpush.bf16.msra.mxu0 %v646
        %860 = vmatmul.bf16.gmra.mxu0 %v422
        %v861 = vpop.f32.mrf.mxu0
        %v862 = vadd.f32 %v843, %v861
        %v863 = vpop.f32.mrf.mxu0
        %v864 = vadd.f32 %v845, %v863
        %865 = vmatmul.bf16.gmra.mxu0 %v426
        %v866 = vpop.f32.mrf.mxu0
        %v867 = vadd.f32 %v848, %v866
        %v868 = vpop.f32.mrf.mxu0
        %v869 = vadd.f32 %v850, %v868
        %870 = vdwg.mxu0
        %871 = vmatpush.bf16.msra.mxu0 %v676
        %872 = vmatpush.bf16.msra.mxu0 %v674
        %873 = vmatpush.bf16.msra.mxu0 %v672
        %874 = vmatpush.bf16.msra.mxu0 %v670
        %875 = vmatpush.bf16.msra.mxu0 %v668
        %876 = vmatpush.bf16.msra.mxu0 %v666
        %877 = vmatpush.bf16.msra.mxu0 %v664
        %878 = vmatpush.bf16.msra.mxu0 %v662
        %879 = vmatmul.bf16.gmra.mxu0 %v423
        %v880 = vpop.f32.mrf.mxu0
        %v881 = vadd.f32 %v862, %v880
        %v882 = vpop.f32.mrf.mxu0
        %v883 = vadd.f32 %v864, %v882
        %884 = vmatmul.bf16.gmra.mxu0 %v427
        %v885 = vpop.f32.mrf.mxu0
        %v886 = vadd.f32 %v867, %v885
        %v887 = vpop.f32.mrf.mxu0
        %v888 = vadd.f32 %v869, %v887
        %889 = vdwg.mxu0
        %890 = vmatpush.bf16.msra.mxu0 %v692
        %891 = vmatpush.bf16.msra.mxu0 %v690
        %892 = vmatpush.bf16.msra.mxu0 %v688
        %893 = vmatpush.bf16.msra.mxu0 %v686
        %894 = vmatpush.bf16.msra.mxu0 %v684
        %895 = vmatpush.bf16.msra.mxu0 %v682
        %896 = vmatpush.bf16.msra.mxu0 %v680
        %897 = vmatpush.bf16.msra.mxu0 %v678
        %898 = vmatmul.bf16.gmra.mxu0 %v424
        %v899 = vpop.f32.mrf.mxu0
        %v900 = vadd.f32 %v881, %v899
        %v901 = vpop.f32.mrf.mxu0
        %v902 = vadd.f32 %v883, %v901
        %903 = vmatmul.bf16.gmra.mxu0 %v428
        %v904 = vpop.f32.mrf.mxu0
        %v905 = vadd.f32 %v886, %v904
        %v906 = vpop.f32.mrf.mxu0
        %v907 = vadd.f32 %v888, %v906
        %908 = vdwg.mxu0
        %v909 = vadd.f32 %v317, %v824
        %v910 = vadd.f32 %v318, %v900
        %v911 = vadd.f32 %v319, %v826
        %v912 = vadd.f32 %v320, %v902
        %v913 = vadd.f32 %v321, %v829
        %v914 = vadd.f32 %v322, %v905
        %v915 = vadd.f32 %v323, %v831
        %v916 = vadd.f32 %v324, %v907
        %917 = vst [vmem:[#allocation2] sm:$0xff] %v909
        %918 = vst [vmem:[#allocation2 + $0x8] sm:$0xff] %v910
        %919 = vst [vmem:[#allocation2 + $0x10] sm:$0xff] %v911
        %920 = vst [vmem:[#allocation2 + $0x18] sm:$0xff] %v912
        %921 = vst [vmem:[#allocation2 + $0x20] sm:$0xff] %v913
        %922 = vst [vmem:[#allocation2 + $0x28] sm:$0xff] %v914
        %923 = vst [vmem:[#allocation2 + $0x30] sm:$0xff] %v915
        %924 = vst [vmem:[#allocation2 + $0x38] sm:$0xff] %v916
        %p925 = scmp.eq.s32.totalorder %s21, 3
        // Predicated region
        $region60: #{discriminator_forward.7} parent=50 // pred_check
          %p926 = pneg %p925
        $region61: #{discriminator_forward.7} parent=50 // pred_check_branch
          %928 = sbr.rel (%p926) target = $region63
        $region62: #{discriminator_forward.7} parent=50 // pred_region
          %v929 = vld [vmem:[#allocation2] sm:$0xff]
          %v930 = vld [vmem:[#allocation2 + $0x8] sm:$0xff]
          %v931 = vld [vmem:[#allocation2 + $0x10] sm:$0xff]
          %v932 = vld [vmem:[#allocation2 + $0x18] sm:$0xff]
          %v933 = vld [vmem:[#allocation2 + $0x20] sm:$0xff]
          %v934 = vld [vmem:[#allocation2 + $0x28] sm:$0xff]
          %v935 = vld [vmem:[#allocation2 + $0x30] sm:$0xff]
          %v936 = vld [vmem:[#allocation2 + $0x38] sm:$0xff]
          %v937 = vld [vmem:[%s291] sm:$0x3]
          %v939 = vperm.slane %v937, 0
          %v940 = vperm.slane %v937, 1
          %v943 = vadd.f32 %v929, %v939
          %v944 = vadd.f32 %v930, %v940
          %v945 = vadd.f32 %v931, %v939
          %v946 = vadd.f32 %v932, %v940
          %v947 = vadd.f32 %v933, %v939
          %v948 = vadd.f32 %v934, %v940
          %v949 = vadd.f32 %v935, %v939
          %v950 = vadd.f32 %v936, %v940
          %v951 = vlaneseq
          %v952 = vshrl.u32 %v951, 7
          %v953 = vadd.s32 %v952, 8
          %v954 = vadd.s32 %v952, 16
          %v955 = vadd.s32 %v952, 24
          %vm956 = vcmp.ge.s32.totalorder %v952, 0
          %vm957 = vcmp.ge.s32.totalorder %v953, 0
          %vm958 = vcmp.ge.s32.totalorder %v954, 0
          %vm959 = vcmp.ge.s32.totalorder %v955, 0
          %vm960 = vcmp.lt.s32.totalorder %v952, 16
          %vm961 = vcmp.lt.s32.totalorder %v953, 16
          %vm962 = vcmp.lt.s32.totalorder %v954, 16
          %vm963 = vcmp.lt.s32.totalorder %v955, 16
          %vm964 = vmand %vm956, %vm960
          %vm965 = vmand %vm957, %vm961
          %vm966 = vmand %vm958, %vm962
          %vm967 = vmand %vm959, %vm963
          %v968 = vsel %vm964, %v943, 0.0
          %v969 = vsel %vm964, %v944, 0.0
          %v970 = vsel %vm965, %v945, 0.0
          %v971 = vsel %vm965, %v946, 0.0
          %v972 = vsel %vm966, %v947, 0.0
          %v973 = vsel %vm966, %v948, 0.0
          %v974 = vsel %vm967, %v949, 0.0
          %v975 = vsel %vm967, %v950, 0.0
          %v976 = vadd.f32 %v968, %v970
          %v977 = vadd.f32 %v976, %v972
          %v978 = vadd.f32 %v977, %v974
          %v979 = vrot.slane %v978, 4
          %v980 = vadd.f32 %v978, %v979
          %v981 = vrot.slane %v980, 2
          %v982 = vadd.f32 %v980, %v981
          %v983 = vrot.slane %v982, 1
          %v984 = vadd.f32 %v982, %v983
          %v985 = vadd.f32 %v969, %v971
          %v986 = vadd.f32 %v985, %v973
          %v987 = vadd.f32 %v986, %v975
          %v988 = vrot.slane %v987, 4
          %v989 = vadd.f32 %v987, %v988
          %v990 = vrot.slane %v989, 2
          %v991 = vadd.f32 %v989, %v990
          %v992 = vrot.slane %v991, 1
          %v993 = vadd.f32 %v991, %v992
          %v994 = vmul.f32 %v984, 0.0625
          %v995 = vmul.f32 %v993, 0.0625
          %v996 = vsub.f32 %v943, %v994
          %v997 = vsub.f32 %v944, %v995
          %v998 = vsub.f32 %v945, %v994
          %v999 = vsub.f32 %v946, %v995
          %v1000 = vsub.f32 %v947, %v994
          %v1001 = vsub.f32 %v948, %v995
          %v1002 = vsub.f32 %v949, %v994
          %v1003 = vsub.f32 %v950, %v995
          %v1004 = vsel %vm964, %v996, 0.0
          %v1005 = vsel %vm964, %v997, 0.0
          %v1006 = vsel %vm965, %v998, 0.0
          %v1007 = vsel %vm965, %v999, 0.0
          %v1008 = vsel %vm966, %v1000, 0.0
          %v1009 = vsel %vm966, %v1001, 0.0
          %v1010 = vsel %vm967, %v1002, 0.0
          %v1011 = vsel %vm967, %v1003, 0.0
          %v1012 = vmul.f32 %v1004, %v1004
          %v1013 = vmul.f32 %v1005, %v1005
          %v1014 = vmul.f32 %v1006, %v1006
          %v1015 = vmul.f32 %v1007, %v1007
          %v1016 = vmul.f32 %v1008, %v1008
          %v1017 = vmul.f32 %v1009, %v1009
          %v1018 = vmul.f32 %v1010, %v1010
          %v1019 = vmul.f32 %v1011, %v1011
          %v1020 = vadd.f32 %v1012, %v1014
          %v1021 = vadd.f32 %v1020, %v1016
          %v1022 = vadd.f32 %v1021, %v1018
          %v1023 = vrot.slane %v1022, 4
          %v1024 = vadd.f32 %v1022, %v1023
          %v1025 = vrot.slane %v1024, 2
          %v1026 = vadd.f32 %v1024, %v1025
          %v1027 = vrot.slane %v1026, 1
          %v1028 = vadd.f32 %v1026, %v1027
          %v1029 = vadd.f32 %v1013, %v1015
          %v1030 = vadd.f32 %v1029, %v1017
          %v1031 = vadd.f32 %v1030, %v1019
          %v1032 = vrot.slane %v1031, 4
          %v1033 = vadd.f32 %v1031, %v1032
          %v1034 = vrot.slane %v1033, 2
          %v1035 = vadd.f32 %v1033, %v1034
          %v1036 = vrot.slane %v1035, 1
          %v1037 = vadd.f32 %v1035, %v1036
          %v1038 = vmul.f32 %v1028, 0.0625
          %v1039 = vmul.f32 %v1037, 0.0625
          %v1040 = vadd.f32 %v1038, 1e-05
          %v1041 = vadd.f32 %v1039, 1e-05
          %v1042 = vrsqrt.pop %v1040
          %v1043 = vmul.f32 %v1042, %v1040
          %v1044 = vmul.f32 %v1043, %v1042
          %v1045 = vmul.f32 0.5, %v1044
          %v1046 = vsub.f32 1.5, %v1045
          %v1047 = vmul.f32 %v1042, %v1046
          %vm1048 = vweird.f32 %v1040
          %vm1049 = vweird.f32 %v1042
          %vm1050 = vmor %vm1048, %vm1049
          %v1051 = vsel %vm1050, %v1042, %v1047
          %v1052 = vrsqrt.pop %v1041
          %v1053 = vmul.f32 %v1052, %v1041
          %v1054 = vmul.f32 %v1053, %v1052
          %v1055 = vmul.f32 0.5, %v1054
          %v1056 = vsub.f32 1.5, %v1055
          %v1057 = vmul.f32 %v1052, %v1056
          %vm1058 = vweird.f32 %v1041
          %vm1059 = vweird.f32 %v1052
          %vm1060 = vmor %vm1058, %vm1059
          %v1061 = vsel %vm1060, %v1052, %v1057
          %v1062 = vmul.f32 %v996, %v1051
          %v1063 = vmul.f32 %v997, %v1061
          %v1064 = vmul.f32 %v998, %v1051
          %v1065 = vmul.f32 %v999, %v1061
          %v1066 = vmul.f32 %v1000, %v1051
          %v1067 = vmul.f32 %v1001, %v1061
          %v1068 = vmul.f32 %v1002, %v1051
          %v1069 = vmul.f32 %v1003, %v1061
          %vm1070 = vcmp.gt.f32.partialorder %v1062, 0.0
          %vm1071 = vcmp.gt.f32.partialorder %v1063, 0.0
          %vm1072 = vcmp.gt.f32.partialorder %v1064, 0.0
          %vm1073 = vcmp.gt.f32.partialorder %v1065, 0.0
          %vm1074 = vcmp.gt.f32.partialorder %v1066, 0.0
          %vm1075 = vcmp.gt.f32.partialorder %v1067, 0.0
          %vm1076 = vcmp.gt.f32.partialorder %v1068, 0.0
          %vm1077 = vcmp.gt.f32.partialorder %v1069, 0.0
          %v1078 = vmul.f32 %v1062, 0.2
          %v1079 = vmul.f32 %v1063, 0.2
          %v1080 = vmul.f32 %v1064, 0.2
          %v1081 = vmul.f32 %v1065, 0.2
          %v1082 = vmul.f32 %v1066, 0.2
          %v1083 = vmul.f32 %v1067, 0.2
          %v1084 = vmul.f32 %v1068, 0.2
          %v1085 = vmul.f32 %v1069, 0.2
          %v1086 = vsel %vm1070, %v1062, %v1078
          %v1087 = vsel %vm1071, %v1063, %v1079
          %v1088 = vsel %vm1072, %v1064, %v1080
          %v1089 = vsel %vm1073, %v1065, %v1081
          %v1090 = vsel %vm1074, %v1066, %v1082
          %v1091 = vsel %vm1075, %v1067, %v1083
          %v1092 = vsel %vm1076, %v1068, %v1084
          %v1093 = vsel %vm1077, %v1069, %v1085
          %v1094 = vsel %vm964, %v1086, %v943
          %v1095 = vsel %vm964, %v1087, %v944
          %v1096 = vsel %vm965, %v1088, %v945
          %v1097 = vsel %vm965, %v1089, %v946
          %v1098 = vsel %vm966, %v1090, %v947
          %v1099 = vsel %vm966, %v1091, %v948
          %v1100 = vsel %vm967, %v1092, %v949
          %v1101 = vsel %vm967, %v1093, %v950
          %vm1102 = vcmp.ge.s32.totalorder %v952, 16
          %vm1103 = vcmp.ge.s32.totalorder %v953, 16
          %vm1104 = vcmp.ge.s32.totalorder %v954, 16
          %vm1105 = vcmp.ge.s32.totalorder %v955, 16
          %vm1106 = vcmp.lt.s32.totalorder %v952, 32
          %vm1107 = vcmp.lt.s32.totalorder %v953, 32
          %vm1108 = vcmp.lt.s32.totalorder %v954, 32
          %vm1109 = vcmp.lt.s32.totalorder %v955, 32
          %vm1110 = vmand %vm1102, %vm1106
          %vm1111 = vmand %vm1103, %vm1107
          %vm1112 = vmand %vm1104, %vm1108
          %vm1113 = vmand %vm1105, %vm1109
          %v1114 = vsel %vm1110, %v943, 0.0
          %v1115 = vsel %vm1110, %v944, 0.0
          %v1116 = vsel %vm1111, %v945, 0.0
          %v1117 = vsel %vm1111, %v946, 0.0
          %v1118 = vsel %vm1112, %v947, 0.0
          %v1119 = vsel %vm1112, %v948, 0.0
          %v1120 = vsel %vm1113, %v949, 0.0
          %v1121 = vsel %vm1113, %v950, 0.0
          %v1122 = vadd.f32 %v1114, %v1116
          %v1123 = vadd.f32 %v1122, %v1118
          %v1124 = vadd.f32 %v1123, %v1120
          %v1125 = vrot.slane %v1124, 4
          %v1126 = vadd.f32 %v1124, %v1125
          %v1127 = vrot.slane %v1126, 2
          %v1128 = vadd.f32 %v1126, %v1127
          %v1129 = vrot.slane %v1128, 1
          %v1130 = vadd.f32 %v1128, %v1129
          %v1131 = vadd.f32 %v1115, %v1117
          %v1132 = vadd.f32 %v1131, %v1119
          %v1133 = vadd.f32 %v1132, %v1121
          %v1134 = vrot.slane %v1133, 4
          %v1135 = vadd.f32 %v1133, %v1134
          %v1136 = vrot.slane %v1135, 2
          %v1137 = vadd.f32 %v1135, %v1136
          %v1138 = vrot.slane %v1137, 1
          %v1139 = vadd.f32 %v1137, %v1138
          %v1140 = vmul.f32 %v1130, 0.0625
          %v1141 = vmul.f32 %v1139, 0.0625
          %v1142 = vsub.f32 %v943, %v1140
          %v1143 = vsub.f32 %v944, %v1141
          %v1144 = vsub.f32 %v945, %v1140
          %v1145 = vsub.f32 %v946, %v1141
          %v1146 = vsub.f32 %v947, %v1140
          %v1147 = vsub.f32 %v948, %v1141
          %v1148 = vsub.f32 %v949, %v1140
          %v1149 = vsub.f32 %v950, %v1141
          %v1150 = vsel %vm1110, %v1142, 0.0
          %v1151 = vsel %vm1110, %v1143, 0.0
          %v1152 = vsel %vm1111, %v1144, 0.0
          %v1153 = vsel %vm1111, %v1145, 0.0
          %v1154 = vsel %vm1112, %v1146, 0.0
          %v1155 = vsel %vm1112, %v1147, 0.0
          %v1156 = vsel %vm1113, %v1148, 0.0
          %v1157 = vsel %vm1113, %v1149, 0.0
          %v1158 = vmul.f32 %v1150, %v1150
          %v1159 = vmul.f32 %v1151, %v1151
          %v1160 = vmul.f32 %v1152, %v1152
          %v1161 = vmul.f32 %v1153, %v1153
          %v1162 = vmul.f32 %v1154, %v1154
          %v1163 = vmul.f32 %v1155, %v1155
          %v1164 = vmul.f32 %v1156, %v1156
          %v1165 = vmul.f32 %v1157, %v1157
          %v1166 = vadd.f32 %v1158, %v1160
          %v1167 = vadd.f32 %v1166, %v1162
          %v1168 = vadd.f32 %v1167, %v1164
          %v1169 = vrot.slane %v1168, 4
          %v1170 = vadd.f32 %v1168, %v1169
          %v1171 = vrot.slane %v1170, 2
          %v1172 = vadd.f32 %v1170, %v1171
          %v1173 = vrot.slane %v1172, 1
          %v1174 = vadd.f32 %v1172, %v1173
          %v1175 = vadd.f32 %v1159, %v1161
          %v1176 = vadd.f32 %v1175, %v1163
          %v1177 = vadd.f32 %v1176, %v1165
          %v1178 = vrot.slane %v1177, 4
          %v1179 = vadd.f32 %v1177, %v1178
          %v1180 = vrot.slane %v1179, 2
          %v1181 = vadd.f32 %v1179, %v1180
          %v1182 = vrot.slane %v1181, 1
          %v1183 = vadd.f32 %v1181, %v1182
          %v1184 = vmul.f32 %v1174, 0.0625
          %v1185 = vmul.f32 %v1183, 0.0625
          %v1186 = vadd.f32 %v1184, 1e-05
          %v1187 = vadd.f32 %v1185, 1e-05
          %v1188 = vrsqrt.pop %v1186
          %v1189 = vmul.f32 %v1188, %v1186
          %v1190 = vmul.f32 %v1189, %v1188
          %v1191 = vmul.f32 0.5, %v1190
          %v1192 = vsub.f32 1.5, %v1191
          %v1193 = vmul.f32 %v1188, %v1192
          %vm1194 = vweird.f32 %v1186
          %vm1195 = vweird.f32 %v1188
          %vm1196 = vmor %vm1194, %vm1195
          %v1197 = vsel %vm1196, %v1188, %v1193
          %v1198 = vrsqrt.pop %v1187
          %v1199 = vmul.f32 %v1198, %v1187
          %v1200 = vmul.f32 %v1199, %v1198
          %v1201 = vmul.f32 0.5, %v1200
          %v1202 = vsub.f32 1.5, %v1201
          %v1203 = vmul.f32 %v1198, %v1202
          %vm1204 = vweird.f32 %v1187
          %vm1205 = vweird.f32 %v1198
          %vm1206 = vmor %vm1204, %vm1205
          %v1207 = vsel %vm1206, %v1198, %v1203
          %v1208 = vmul.f32 %v1142, %v1197
          %v1209 = vmul.f32 %v1143, %v1207
          %v1210 = vmul.f32 %v1144, %v1197
          %v1211 = vmul.f32 %v1145, %v1207
          %v1212 = vmul.f32 %v1146, %v1197
          %v1213 = vmul.f32 %v1147, %v1207
          %v1214 = vmul.f32 %v1148, %v1197
          %v1215 = vmul.f32 %v1149, %v1207
          %vm1216 = vcmp.gt.f32.partialorder %v1208, 0.0
          %vm1217 = vcmp.gt.f32.partialorder %v1209, 0.0
          %vm1218 = vcmp.gt.f32.partialorder %v1210, 0.0
          %vm1219 = vcmp.gt.f32.partialorder %v1211, 0.0
          %vm1220 = vcmp.gt.f32.partialorder %v1212, 0.0
          %vm1221 = vcmp.gt.f32.partialorder %v1213, 0.0
          %vm1222 = vcmp.gt.f32.partialorder %v1214, 0.0
          %vm1223 = vcmp.gt.f32.partialorder %v1215, 0.0
          %v1224 = vmul.f32 %v1208, 0.2
          %v1225 = vmul.f32 %v1209, 0.2
          %v1226 = vmul.f32 %v1210, 0.2
          %v1227 = vmul.f32 %v1211, 0.2
          %v1228 = vmul.f32 %v1212, 0.2
          %v1229 = vmul.f32 %v1213, 0.2
          %v1230 = vmul.f32 %v1214, 0.2
          %v1231 = vmul.f32 %v1215, 0.2
          %v1232 = vsel %vm1216, %v1208, %v1224
          %v1233 = vsel %vm1217, %v1209, %v1225
          %v1234 = vsel %vm1218, %v1210, %v1226
          %v1235 = vsel %vm1219, %v1211, %v1227
          %v1236 = vsel %vm1220, %v1212, %v1228
          %v1237 = vsel %vm1221, %v1213, %v1229
          %v1238 = vsel %vm1222, %v1214, %v1230
          %v1239 = vsel %vm1223, %v1215, %v1231
          %v1240 = vsel %vm1110, %v1232, %v1094
          %v1241 = vsel %vm1110, %v1233, %v1095
          %v1242 = vsel %vm1111, %v1234, %v1096
          %v1243 = vsel %vm1111, %v1235, %v1097
          %v1244 = vsel %vm1112, %v1236, %v1098
          %v1245 = vsel %vm1112, %v1237, %v1099
          %v1246 = vsel %vm1113, %v1238, %v1100
          %v1247 = vsel %vm1113, %v1239, %v1101
          %1248 = vst [vmem:[%s302] sm:$0xff] %v1240
          %1249 = vst [vmem:[%s302 + $0x8] sm:$0xff] %v1241
          %1250 = vst [vmem:[%s302 + $0x10] sm:$0xff] %v1242
          %1251 = vst [vmem:[%s302 + $0x18] sm:$0xff] %v1243
          %1252 = vst [vmem:[%s302 + $0x20] sm:$0xff] %v1244
          %1253 = vst [vmem:[%s302 + $0x28] sm:$0xff] %v1245
          %1254 = vst [vmem:[%s302 + $0x30] sm:$0xff] %v1246
          %1255 = vst [vmem:[%s302 + $0x38] sm:$0xff] %v1247
        $region63: #{discriminator_forward.7} parent=50 // pred_fallthru
          _
        %s1256 = smul.u32 4, %s19
        %s1257 = smul.u32 2, %s20
        %p1258 = scmp.lt.s32.totalorder %s1256, 3
        %s1259 = scalar_select %p1258, %s1256, 3
        %p1260 = scmp.lt.s32.totalorder %s1257, 1
        %s1261 = scalar_select %p1260, %s1257, 1
        %s1262 = smul.addr %s1259, 2
        %s1263 = sadd.s32 %s1261, %s1262
        %s1264 = smul.addr %s1263, 8
        %s1265 = scalar_lea.vmem %s3, %s1264
        // Predicated region
        $region64: #{discriminator_forward.7} parent=50 // pred_check
          %p1266 = pneg %p135
        $region65: #{discriminator_forward.7} parent=50 // pred_check_branch
          %1268 = sbr.rel (%p1266) target = $region67
        $region66: #{discriminator_forward.7} parent=50 // pred_region
          %s1269 = smul.u32 4, %s19
          %s1270 = smul.u32 2, %s20
        $region67: #{discriminator_forward.7} parent=50 // pred_fallthru
          _
        // Predicated region
        $region68: #{discriminator_forward.7} parent=50 // pred_check
          %p1271 = pneg %p135
        $region69: #{discriminator_forward.7} parent=50 // pred_check_branch
          %1273 = sbr.rel (%p1271) target = $region71
        $region70: #{discriminator_forward.7} parent=50 // pred_region
          %s1274 = smul.u32 4, %s19
          %s1275 = smul.u32 2, %s20
          %p1276 = scmp.lt.s32.totalorder %s1274, 3
          %s1277 = scalar_select %p1276, %s1274, 3
          %p1278 = scmp.lt.s32.totalorder %s1275, 1
          %s1279 = scalar_select %p1278, %s1275, 1
          %s1280 = smul.addr %s1277, 2
          %s1281 = sadd.s32 %s1279, %s1280
          %s1282 = smul.addr %s1281, 8
          %s1283 = scalar_lea.vmem %s3, %s1282
        $region71: #{discriminator_forward.7} parent=50 // pred_fallthru
          _
      $region51: #{discriminator_forward.7} parent=5 // pred_fallthru
        _
      %p1284 = scmp.le.s32.totalorder 2, %s9
      // Predicated region
      $region72: #{discriminator_forward.7} parent=5 // pred_check
        %p1285 = pneg %p1284
      $region73: #{discriminator_forward.7} parent=5 // pred_check_branch
        %1287 = sbr.rel (%p1285) target = $region75
      $region74: #{discriminator_forward.7} parent=5 // pred_region
        %s1288 = ssub.s32 %s9, 2
      $region75: #{discriminator_forward.7} parent=5 // pred_fallthru
        _
    $region6: #{discriminator_forward.7} parent=1 // loop_footer
      %s13 = sadd.s32 1, %s9
    $region7: #{discriminator_forward.7} parent=1 // loop_footer_branch
      %8 = sbr.rel target = $region3
    $region8: #{discriminator_forward.7} parent=1 // loop_exit
      _

// kernel: discriminator_forward.8
$region0: #{discriminator_forward.8}
  #allocation0 [shape = 'u32[]', space=smem, size = 0x4, offset = 0x4, fixed_abs, tag = 'smem constant byte address 0x4 - core index']
  #allocation1 [shape = 'u32[72,128]{1,0:T(1,128)}', space=vmem, size = 0x9000, scoped, tag = 'internal scratch']
  #allocation2 [shape = 'f32[32,256]{1,0:T(8,128)}', space=vmem, size = 0x8000, scoped, tag = 'scratch operand']
  %s0 = inlined_call_operand.vmem [shape: bf16[32,4096], index: 0, kind: input, shape index: {}]
  %s1 = inlined_call_operand.vmem [shape: bf16[4096,512], index: 1, kind: input, shape index: {}]
  %s2 = inlined_call_operand.vmem [shape: f32[1,512], index: 2, kind: input, shape index: {}]
  %s3 = inlined_call_operand.vmem [shape: f32[32,512], index: 3, kind: output, shape index: {}]
  %s4 = sld [smem:[#allocation0]]
  $region133: #{discriminator_forward.8} parent=0
    _
  %s6 = ssub.s32 1, %s4
  %s7 = scalar_select 0, %s6, %s4
  $region1: #{discriminator_forward.8} parent=0
    #allocation3 [shape = 'u8[65536]{0}', space=vmem, size = 0x10000, scoped, tag = 'input window, operand 0']
    #allocation4 [shape = 'u8[524288]{0}', space=vmem, size = 0x80000, scoped, tag = 'input window, operand 1']
    #allocation5 [shape = 'u8[65536]{0}', space=vmem, size = 0x10000, scoped, tag = 'output window, operand 0']
    loop: start=0, step=1, limit=18
    $region2: #{discriminator_forward.8} parent=1 // loop_pre_header
      _
    $region3: #{discriminator_forward.8} parent=1 // loop_header
      %s9 = sphi 0, %s13
      %p10 = scmp.ge.s32.totalorder %s9, 18
      %s16 = sphi 0, %s35
      %s17 = sphi 0, %s31
      %s18 = sphi 0, %s27
      %s19 = sphi 0, %s16
      %s20 = sphi 0, %s17
      %s21 = sphi 0, %s18
      %s22 = sphi 0, %s19
      %s23 = sphi 0, %s20
      %s24 = sphi 0, %s21
      %s40 = sphi 0, %s42
      %s43 = sphi 0, %s40
      %s44 = sphi 0, %s43
      %s60 = sphi 0, %s44
      %s68 = sphi 0, %s70
      %s71 = sphi 0, %s68
      %s72 = sphi 0, %s71
      %s88 = sphi 0, %s72
      %s94 = sphi 0, %s96
      %s97 = sphi 0, %s94
      %s98 = sphi 0, %s97
      %s114 = sphi 0, %s98
      %s122 = sphi 0, %s124
      %s125 = sphi 0, %s122
      %s126 = sphi 0, %s125
      %s142 = sphi 0, %s126
    $region4: #{discriminator_forward.8} parent=1 // loop_header_branch
      %12 = sbr.rel (%p10) target = $region8
    $region5: #{discriminator_forward.8} parent=1 // loop_body
      %s14 = ssub.s32 %s9, 1
      %s15 = ssub.s32 %s9, 2
      %s25 = sadd.s32 1, %s18
      %p26 = scmp.ge.s32.totalorder %s25, 8
      %s27 = scalar_select %p26, 0, %s25
      %s28 = sadd.s32 1, %s17
      %s29 = scalar_select %p26, %s28, %s17
      %p30 = scmp.ge.s32.totalorder %s29, 2
      %s31 = scalar_select %p30, 0, %s29
      %s32 = sadd.s32 1, %s16
      %s33 = scalar_select %p30, %s32, %s16
      %p34 = scmp.ge.s32.totalorder %s33, 1
      %s35 = scalar_select %p34, 0, %s33
      %s36 = ssub.s32 %s16, %s35
      %s37 = ssub.s32 %s18, %s27
      %s38 = sor.u32 %s36, %s37
      %p39 = scmp.eq.s32.totalorder %s38, 0
      %s41 = sadd.s32 %s40, 1
      %s42 = scalar_select %p39, %s40, %s41
      %p45 = pneg %p39
      %p46 = scmp.eq.s32.totalorder %s9, 15
      %p47 = por %p45, %p46
      %p48 = scmp.ne.s32.totalorder %s40, %s43
      %p49 = scmp.eq.s32.totalorder %s9, 0
      %p50 = por %p48, %p49
      %p51 = scmp.ne.s32.totalorder %s40, %s43
      %p52 = scmp.eq.s32.totalorder %s14, 15
      %p53 = por %p51, %p52
      %p54 = scmp.ne.s32.totalorder %s43, %s44
      %p55 = scmp.eq.s32.totalorder %s14, 0
      %p56 = por %p54, %p55
      %p57 = scmp.ne.s32.totalorder %s43, %s44
      %p58 = scmp.eq.s32.totalorder %s15, 15
      %p59 = por %p57, %p58
      %p61 = scmp.ne.s32.totalorder %s44, %s60
      %p62 = scmp.eq.s32.totalorder %s15, 0
      %p63 = por %p61, %p62
      %s64 = ssub.s32 %s18, %s27
      %s65 = ssub.s32 %s17, %s31
      %s66 = sor.u32 %s64, %s65
      %p67 = scmp.eq.s32.totalorder %s66, 0
      %s69 = sadd.s32 %s68, 1
      %s70 = scalar_select %p67, %s68, %s69
      %p73 = pneg %p67
      %p74 = scmp.eq.s32.totalorder %s9, 15
      %p75 = por %p73, %p74
      %p76 = scmp.ne.s32.totalorder %s68, %s71
      %p77 = scmp.eq.s32.totalorder %s9, 0
      %p78 = por %p76, %p77
      %p79 = scmp.ne.s32.totalorder %s68, %s71
      %p80 = scmp.eq.s32.totalorder %s14, 15
      %p81 = por %p79, %p80
      %p82 = scmp.ne.s32.totalorder %s71, %s72
      %p83 = scmp.eq.s32.totalorder %s14, 0
      %p84 = por %p82, %p83
      %p85 = scmp.ne.s32.totalorder %s71, %s72
      %p86 = scmp.eq.s32.totalorder %s15, 15
      %p87 = por %p85, %p86
      %p89 = scmp.ne.s32.totalorder %s72, %s88
      %p90 = scmp.eq.s32.totalorder %s15, 0
      %p91 = por %p89, %p90
      %s92 = ssub.s32 %s17, %s31
      %p93 = scmp.eq.s32.totalorder %s92, 0
      %s95 = sadd.s32 %s94, 1
      %s96 = scalar_select %p93, %s94, %s95
      %p99 = pneg %p93
      %p100 = scmp.eq.s32.totalorder %s9, 15
      %p101 = por %p99, %p100
      %p102 = scmp.ne.s32.totalorder %s94, %s97
      %p103 = scmp.eq.s32.totalorder %s9, 0
      %p104 = por %p102, %p103
      %p105 = scmp.ne.s32.totalorder %s94, %s97
      %p106 = scmp.eq.s32.totalorder %s14, 15
      %p107 = por %p105, %p106
      %p108 = scmp.ne.s32.totalorder %s97, %s98
      %p109 = scmp.eq.s32.totalorder %s14, 0
      %p110 = por %p108, %p109
      %p111 = scmp.ne.s32.totalorder %s97, %s98
      %p112 = scmp.eq.s32.totalorder %s15, 15
      %p113 = por %p111, %p112
      %p115 = scmp.ne.s32.totalorder %s98, %s114
      %p116 = scmp.eq.s32.totalorder %s15, 0
      %p117 = por %p115, %p116
      %s118 = ssub.s32 %s16, %s35
      %s119 = ssub.s32 %s17, %s31
      %s120 = sor.u32 %s118, %s119
      %p121 = scmp.eq.s32.totalorder %s120, 0
      %s123 = sadd.s32 %s122, 1
      %s124 = scalar_select %p121, %s122, %s123
      %p127 = pneg %p121
      %p128 = scmp.eq.s32.totalorder %s9, 15
      %p129 = por %p127, %p128
      %p130 = scmp.ne.s32.totalorder %s122, %s125
      %p131 = scmp.eq.s32.totalorder %s9, 0
      %p132 = por %p130, %p131
      %p133 = scmp.ne.s32.totalorder %s122, %s125
      %p134 = scmp.eq.s32.totalorder %s14, 15
      %p135 = por %p133, %p134
      %p136 = scmp.ne.s32.totalorder %s125, %s126
      %p137 = scmp.eq.s32.totalorder %s14, 0
      %p138 = por %p136, %p137
      %p139 = scmp.ne.s32.totalorder %s125, %s126
      %p140 = scmp.eq.s32.totalorder %s15, 15
      %p141 = por %p139, %p140
      %p143 = scmp.ne.s32.totalorder %s126, %s142
      %p144 = scmp.eq.s32.totalorder %s15, 0
      %p145 = por %p143, %p144
      %p146 = scmp.le.s32.totalorder 1, %s9
      %p147 = scmp.lt.s32.totalorder %s9, 17
      %p148 = pnand %p146, %p147
      %p149 = pneg %p148
      // Predicated region
      $region9: #{discriminator_forward.8} parent=5 // pred_check
        _
      $region10: #{discriminator_forward.8} parent=5 // pred_check_branch
        %151 = sbr.rel (%p148) target = $region12
      $region11: #{discriminator_forward.8} parent=5 // pred_region
        %s152 = ssub.s32 %s9, 1
      $region12: #{discriminator_forward.8} parent=5 // pred_fallthru
        _
      %p153 = scmp.lt.s32.totalorder %s9, 16
      // Predicated region
      $region13: #{discriminator_forward.8} parent=5 // pred_check
        %p154 = pneg %p153
      $region14: #{discriminator_forward.8} parent=5 // pred_check_branch
        %156 = sbr.rel (%p154) target = $region16
      $region15: #{discriminator_forward.8} parent=5 // pred_region
        // Predicated region
        $region17: #{discriminator_forward.8} parent=15 // pred_check
          %p157 = pneg %p50
        $region18: #{discriminator_forward.8} parent=15 // pred_check_branch
          %159 = sbr.rel (%p157) target = $region20
        $region19: #{discriminator_forward.8} parent=15 // pred_region
          %s160 = sand.u32 %s40, 1
          %s161 = sand.u32 %s40, 1
          %s162 = smul.addr %s161, 64
          %s163 = scalar_lea.vmem [#allocation3], %s162
          %s164 = smul.u32 4, %s16
          %s165 = smul.u32 4, %s18
          %s166 = smul.addr %s164, 32
          %s167 = sadd.s32 %s165, %s166
          %s168 = smul.addr %s167, 4
          %s169 = scalar_lea.vmem %s0, %s168
          // Predicated region
          $region21: #{discriminator_forward.8} parent=19 // pred_check
            _
          $region22: #{discriminator_forward.8} parent=19 // pred_check_branch
            %171 = sbr.rel (0) target = $region24
          $region23: #{discriminator_forward.8} parent=19 // pred_region
            // Predicated region
            $region25: #{discriminator_forward.8} parent=23 // pred_check
              _
            $region26: #{discriminator_forward.8} parent=23 // pred_check_branch
              %173 = sbr.rel (0) target = $region28
            $region27: #{discriminator_forward.8} parent=23 // pred_region
              loop: start=0, step=1, limit=1
              $region29: #{discriminator_forward.8} parent=27 // loop_pre_header
                _
              $region30: #{discriminator_forward.8} parent=27 // loop_header
                %s175 = sphi 0, %s179
                %p176 = scmp.ge.s32.totalorder %s175, 1
                %s180 = sphi %s169, %s169
                %s181 = sphi %s163, %s163
              $region31: #{discriminator_forward.8} parent=27 // loop_header_branch
                %178 = sbr.rel (%p176) target = $region35
              $region32: #{discriminator_forward.8} parent=27 // loop_body
                %v182 = vld [vmem:[%s180] sm:$0xff]
                %183 = vst [vmem:[%s181] sm:$0xff] %v182
                %v184 = vld [vmem:[%s180 + $0x8] sm:$0xff]
                %185 = vst [vmem:[%s181 + $0x8] sm:$0xff] %v184
                %v186 = vld [vmem:[%s180 + $0x80] sm:$0xff]
                %187 = vst [vmem:[%s181 + $0x10] sm:$0xff] %v186
                %v188 = vld [vmem:[%s180 + $0x88] sm:$0xff]
                %189 = vst [vmem:[%s181 + $0x18] sm:$0xff] %v188
                %v190 = vld [vmem:[%s180 + $0x100] sm:$0xff]
                %191 = vst [vmem:[%s181 + $0x20] sm:$0xff] %v190
                %v192 = vld [vmem:[%s180 + $0x108] sm:$0xff]
                %193 = vst [vmem:[%s181 + $0x28] sm:$0xff] %v192
                %v194 = vld [vmem:[%s180 + $0x180] sm:$0xff]
                %195 = vst [vmem:[%s181 + $0x30] sm:$0xff] %v194
                %v196 = vld [vmem:[%s180 + $0x188] sm:$0xff]
                %197 = vst [vmem:[%s181 + $0x38] sm:$0xff] %v196
              $region33: #{discriminator_forward.8} parent=27 // loop_footer
                %s179 = sadd.s32 1, %s175
              $region34: #{discriminator_forward.8} parent=27 // loop_footer_branch
                %174 = sbr.rel target = $region30
              $region35: #{discriminator_forward.8} parent=27 // loop_exit
                _
            $region28: #{discriminator_forward.8} parent=23 // pred_fallthru
              _
            // Predicated region
            $region36: #{discriminator_forward.8} parent=23 // pred_check
              _
            $region37: #{discriminator_forward.8} parent=23 // pred_check_branch
              %199 = sbr.rel target = $region39
            $region38: #{discriminator_forward.8} parent=23 // pred_region
              _
            $region39: #{discriminator_forward.8} parent=23 // pred_fallthru
              _
          $region24: #{discriminator_forward.8} parent=19 // pred_fallthru
            _
          %200 = vnop
        $region20: #{discriminator_forward.8} parent=15 // pred_fallthru
          _
        // Predicated region
        $region40: #{discriminator_forward.8} parent=15 // pred_check
          %p201 = pneg %p78
        $region41: #{discriminator_forward.8} parent=15 // pred_check_branch
          %203 = sbr.rel (%p201) target = $region43
        $region42: #{discriminator_forward.8} parent=15 // pred_region
          %s204 = sand.u32 %s68, 1
          %s205 = sand.u32 %s68, 1
          %s206 = smul.addr %s205, 512
          %s207 = scalar_lea.vmem [#allocation4], %s206
          %s208 = smul.u32 64, %s18
          %s209 = smul.u32 2, %s17
          %s210 = smul.addr %s208, 4
          %s211 = sadd.s32 %s209, %s210
          %s212 = smul.addr %s211, 4
          %s213 = scalar_lea.vmem %s1, %s212
          // Predicated region
          $region44: #{discriminator_forward.8} parent=42 // pred_check
            _
          $region45: #{discriminator_forward.8} parent=42 // pred_check_branch
            %215 = sbr.rel (0) target = $region47
          $region46: #{discriminator_forward.8} parent=42 // pred_region
            // Predicated region
            $region48: #{discriminator_forward.8} parent=46 // pred_check
              _
            $region49: #{discriminator_forward.8} parent=46 // pred_check_branch
              %217 = sbr.rel (0) target = $region51
            $region50: #{discriminator_forward.8} parent=46 // pred_region
              // Predicated region
              $region63: #{discriminator_forward.8} parent=50 // pred_check
                _
              $region64: #{discriminator_forward.8} parent=50 // pred_check_branch
                %359 = sbr.rel (0) target = $region66
              $region65: #{discriminator_forward.8} parent=50 // pred_region
                loop: start=0, step=1, limit=1
                $region67: #{discriminator_forward.8} parent=65 // loop_pre_header
                  _
                $region68: #{discriminator_forward.8} parent=65 // loop_header
                  %s361 = sphi 0, %s365
                  %p362 = scmp.ge.s32.totalorder %s361, 1
                  %s366 = sphi %s213, %s213
                  %s367 = sphi %s207, %s207
                $region69: #{discriminator_forward.8} parent=65 // loop_header_branch
                  %364 = sbr.rel (%p362) target = $region73
                $region70: #{discriminator_forward.8} parent=65 // loop_body
                  %v368 = vld [vmem:[%s366] sm:$0xff]
                  %369 = vst [vmem:[%s367] sm:$0xff] %v368
                  %v370 = vld [vmem:[%s366 + $0x10] sm:$0xff]
                  %371 = vst [vmem:[%s367 + $0x8] sm:$0xff] %v370
                  %v372 = vld [vmem:[%s366 + $0x20] sm:$0xff]
                  %373 = vst [vmem:[%s367 + $0x10] sm:$0xff] %v372
                  %v374 = vld [vmem:[%s366 + $0x30] sm:$0xff]
                  %375 = vst [vmem:[%s367 + $0x18] sm:$0xff] %v374
                  %v376 = vld [vmem:[%s366 + $0x40] sm:$0xff]
                  %377 = vst [vmem:[%s367 + $0x20] sm:$0xff] %v376
                  %v378 = vld [vmem:[%s366 + $0x50] sm:$0xff]
                  %379 = vst [vmem:[%s367 + $0x28] sm:$0xff] %v378
                  %v380 = vld [vmem:[%s366 + $0x60] sm:$0xff]
                  %381 = vst [vmem:[%s367 + $0x30] sm:$0xff] %v380
                  %v382 = vld [vmem:[%s366 + $0x70] sm:$0xff]
                  %383 = vst [vmem:[%s367 + $0x38] sm:$0xff] %v382
                  %v384 = vld [vmem:[%s366 + $0x80] sm:$0xff]
                  %385 = vst [vmem:[%s367 + $0x40] sm:$0xff] %v384
                  %v386 = vld [vmem:[%s366 + $0x90] sm:$0xff]
                  %387 = vst [vmem:[%s367 + $0x48] sm:$0xff] %v386
                  %v388 = vld [vmem:[%s366 + $0xa0] sm:$0xff]
                  %389 = vst [vmem:[%s367 + $0x50] sm:$0xff] %v388
                  %v390 = vld [vmem:[%s366 + $0xb0] sm:$0xff]
                  %391 = vst [vmem:[%s367 + $0x58] sm:$0xff] %v390
                  %v392 = vld [vmem:[%s366 + $0xc0] sm:$0xff]
                  %393 = vst [vmem:[%s367 + $0x60] sm:$0xff] %v392
                  %v394 = vld [vmem:[%s366 + $0xd0] sm:$0xff]
                  %395 = vst [vmem:[%s367 + $0x68] sm:$0xff] %v394
                  %v396 = vld [vmem:[%s366 + $0xe0] sm:$0xff]
                  %397 = vst [vmem:[%s367 + $0x70] sm:$0xff] %v396
                  %v398 = vld [vmem:[%s366 + $0xf0] sm:$0xff]
                  %399 = vst [vmem:[%s367 + $0x78] sm:$0xff] %v398
                  %v400 = vld [vmem:[%s366 + $0x100] sm:$0xff]
                  %401 = vst [vmem:[%s367 + $0x80] sm:$0xff] %v400
                  %v402 = vld [vmem:[%s366 + $0x110] sm:$0xff]
                  %403 = vst [vmem:[%s367 + $0x88] sm:$0xff] %v402
                  %v404 = vld [vmem:[%s366 + $0x120] sm:$0xff]
                  %405 = vst [vmem:[%s367 + $0x90] sm:$0xff] %v404
                  %v406 = vld [vmem:[%s366 + $0x130] sm:$0xff]
                  %407 = vst [vmem:[%s367 + $0x98] sm:$0xff] %v406
                  %v408 = vld [vmem:[%s366 + $0x140] sm:$0xff]
                  %409 = vst [vmem:[%s367 + $0xa0] sm:$0xff] %v408
                  %v410 = vld [vmem:[%s366 + $0x150] sm:$0xff]
                  %411 = vst [vmem:[%s367 + $0xa8] sm:$0xff] %v410
                  %v412 = vld [vmem:[%s366 + $0x160] sm:$0xff]
                  %413 = vst [vmem:[%s367 + $0xb0] sm:$0xff] %v412
                  %v414 = vld [vmem:[%s366 + $0x170] sm:$0xff]
                  %415 = vst [vmem:[%s367 + $0xb8] sm:$0xff] %v414
                  %v416 = vld [vmem:[%s366 + $0x180] sm:$0xff]
                  %417 = vst [vmem:[%s367 + $0xc0] sm:$0xff] %v416
                  %v418 = vld [vmem:[%s366 + $0x190] sm:$0xff]
                  %419 = vst [vmem:[%s367 + $0xc8] sm:$0xff] %v418
                  %v420 = vld [vmem:[%s366 + $0x1a0] sm:$0xff]
                  %421 = vst [vmem:[%s367 + $0xd0] sm:$0xff] %v420
                  %v422 = vld [vmem:[%s366 + $0x1b0] sm:$0xff]
                  %423 = vst [vmem:[%s367 + $0xd8] sm:$0xff] %v422
                  %v424 = vld [vmem:[%s366 + $0x1c0] sm:$0xff]
                  %425 = vst [vmem:[%s367 + $0xe0] sm:$0xff] %v424
                  %v426 = vld [vmem:[%s366 + $0x1d0] sm:$0xff]
                  %427 = vst [vmem:[%s367 + $0xe8] sm:$0xff] %v426
                  %v428 = vld [vmem:[%s366 + $0x1e0] sm:$0xff]
                  %429 = vst [vmem:[%s367 + $0xf0] sm:$0xff] %v428
                  %v430 = vld [vmem:[%s366 + $0x1f0] sm:$0xff]
                  %431 = vst [vmem:[%s367 + $0xf8] sm:$0xff] %v430
                  %v432 = vld [vmem:[%s366 + $0x200] sm:$0xff]
                  %433 = vst [vmem:[%s367 + $0x100] sm:$0xff] %v432
                  %v434 = vld [vmem:[%s366 + $0x210] sm:$0xff]
                  %435 = vst [vmem:[%s367 + $0x108] sm:$0xff] %v434
                  %v436 = vld [vmem:[%s366 + $0x220] sm:$0xff]
                  %437 = vst [vmem:[%s367 + $0x110] sm:$0xff] %v436
                  %v438 = vld [vmem:[%s366 + $0x230] sm:$0xff]
                  %439 = vst [vmem:[%s367 + $0x118] sm:$0xff] %v438
                  %v440 = vld [vmem:[%s366 + $0x240] sm:$0xff]
                  %441 = vst [vmem:[%s367 + $0x120] sm:$0xff] %v440
                  %v442 = vld [vmem:[%s366 + $0x250] sm:$0xff]
                  %443 = vst [vmem:[%s367 + $0x128] sm:$0xff] %v442
                  %v444 = vld [vmem:[%s366 + $0x260] sm:$0xff]
                  %445 = vst [vmem:[%s367 + $0x130] sm:$0xff] %v444
                  %v446 = vld [vmem:[%s366 + $0x270] sm:$0xff]
                  %447 = vst [vmem:[%s367 + $0x138] sm:$0xff] %v446
                  %v448 = vld [vmem:[%s366 + $0x280] sm:$0xff]
                  %449 = vst [vmem:[%s367 + $0x140] sm:$0xff] %v448
                  %v450 = vld [vmem:[%s366 + $0x290] sm:$0xff]
                  %451 = vst [vmem:[%s367 + $0x148] sm:$0xff] %v450
                  %v452 = vld [vmem:[%s366 + $0x2a0] sm:$0xff]
                  %453 = vst [vmem:[%s367 + $0x150] sm:$0xff] %v452
                  %v454 = vld [vmem:[%s366 + $0x2b0] sm:$0xff]
                  %455 = vst [vmem:[%s367 + $0x158] sm:$0xff] %v454
                  %v456 = vld [vmem:[%s366 + $0x2c0] sm:$0xff]
                  %457 = vst [vmem:[%s367 + $0x160] sm:$0xff] %v456
                  %v458 = vld [vmem:[%s366 + $0x2d0] sm:$0xff]
                  %459 = vst [vmem:[%s367 + $0x168] sm:$0xff] %v458
                  %v460 = vld [vmem:[%s366 + $0x2e0] sm:$0xff]
                  %461 = vst [vmem:[%s367 + $0x170] sm:$0xff] %v460
                  %v462 = vld [vmem:[%s366 + $0x2f0] sm:$0xff]
                  %463 = vst [vmem:[%s367 + $0x178] sm:$0xff] %v462
                  %v464 = vld [vmem:[%s366 + $0x300] sm:$0xff]
                  %465 = vst [vmem:[%s367 + $0x180] sm:$0xff] %v464
                  %v466 = vld [vmem:[%s366 + $0x310] sm:$0xff]
                  %467 = vst [vmem:[%s367 + $0x188] sm:$0xff] %v466
                  %v468 = vld [vmem:[%s366 + $0x320] sm:$0xff]
                  %469 = vst [vmem:[%s367 + $0x190] sm:$0xff] %v468
                  %v470 = vld [vmem:[%s366 + $0x330] sm:$0xff]
                  %471 = vst [vmem:[%s367 + $0x198] sm:$0xff] %v470
                  %v472 = vld [vmem:[%s366 + $0x340] sm:$0xff]
                  %473 = vst [vmem:[%s367 + $0x1a0] sm:$0xff] %v472
                  %v474 = vld [vmem:[%s366 + $0x350] sm:$0xff]
                  %475 = vst [vmem:[%s367 + $0x1a8] sm:$0xff] %v474
                  %v476 = vld [vmem:[%s366 + $0x360] sm:$0xff]
                  %477 = vst [vmem:[%s367 + $0x1b0] sm:$0xff] %v476
                  %v478 = vld [vmem:[%s366 + $0x370] sm:$0xff]
                  %479 = vst [vmem:[%s367 + $0x1b8] sm:$0xff] %v478
                  %v480 = vld [vmem:[%s366 + $0x380] sm:$0xff]
                  %481 = vst [vmem:[%s367 + $0x1c0] sm:$0xff] %v480
                  %v482 = vld [vmem:[%s366 + $0x390] sm:$0xff]
                  %483 = vst [vmem:[%s367 + $0x1c8] sm:$0xff] %v482
                  %v484 = vld [vmem:[%s366 + $0x3a0] sm:$0xff]
                  %485 = vst [vmem:[%s367 + $0x1d0] sm:$0xff] %v484
                  %v486 = vld [vmem:[%s366 + $0x3b0] sm:$0xff]
                  %487 = vst [vmem:[%s367 + $0x1d8] sm:$0xff] %v486
                  %v488 = vld [vmem:[%s366 + $0x3c0] sm:$0xff]
                  %489 = vst [vmem:[%s367 + $0x1e0] sm:$0xff] %v488
                  %v490 = vld [vmem:[%s366 + $0x3d0] sm:$0xff]
                  %491 = vst [vmem:[%s367 + $0x1e8] sm:$0xff] %v490
                  %v492 = vld [vmem:[%s366 + $0x3e0] sm:$0xff]
                  %493 = vst [vmem:[%s367 + $0x1f0] sm:$0xff] %v492
                  %v494 = vld [vmem:[%s366 + $0x3f0] sm:$0xff]
                  %495 = vst [vmem:[%s367 + $0x1f8] sm:$0xff] %v494
                $region71: #{discriminator_forward.8} parent=65 // loop_footer
                  %s365 = sadd.s32 1, %s361
                $region72: #{discriminator_forward.8} parent=65 // loop_footer_branch
                  %360 = sbr.rel target = $region68
                $region73: #{discriminator_forward.8} parent=65 // loop_exit
                  _
              $region66: #{discriminator_forward.8} parent=50 // pred_fallthru
                _
              // Predicated region
              $region74: #{discriminator_forward.8} parent=50 // pred_check
                _
              $region75: #{discriminator_forward.8} parent=50 // pred_check_branch
                %497 = sbr.rel target = $region77
              $region76: #{discriminator_forward.8} parent=50 // pred_region
                _
              $region77: #{discriminator_forward.8} parent=50 // pred_fallthru
                _
            $region51: #{discriminator_forward.8} parent=46 // pred_fallthru
              _
            // Predicated region
            $region52: #{discriminator_forward.8} parent=46 // pred_check
              _
            $region53: #{discriminator_forward.8} parent=46 // pred_check_branch
              %219 = sbr.rel target = $region55
            $region54: #{discriminator_forward.8} parent=46 // pred_region
              %s221 = ssub.s32 256, 1
              loop: start=0, step=1, limit=1
              $region56: #{discriminator_forward.8} parent=54 // loop_pre_header
                _
              $region57: #{discriminator_forward.8} parent=54 // loop_header
                %s223 = sphi 0, %s227
                %p224 = scmp.ge.s32.totalorder %s223, 1
                %s228 = sphi %s213, %s213
                %s229 = sphi %s207, %s207
              $region58: #{discriminator_forward.8} parent=54 // loop_header_branch
                %226 = sbr.rel (%p224) target = $region62
              $region59: #{discriminator_forward.8} parent=54 // loop_body
                %v230 = vld [vmem:[%s228] sm:%s221]
                %231 = vst [vmem:[%s229] sm:%s221] %v230
                %v232 = vld [vmem:[%s228 + $0x10] sm:%s221]
                %233 = vst [vmem:[%s229 + $0x8] sm:%s221] %v232
                %v234 = vld [vmem:[%s228 + $0x20] sm:%s221]
                %235 = vst [vmem:[%s229 + $0x10] sm:%s221] %v234
                %v236 = vld [vmem:[%s228 + $0x30] sm:%s221]
                %237 = vst [vmem:[%s229 + $0x18] sm:%s221] %v236
                %v238 = vld [vmem:[%s228 + $0x40] sm:%s221]
                %239 = vst [vmem:[%s229 + $0x20] sm:%s221] %v238
                %v240 = vld [vmem:[%s228 + $0x50] sm:%s221]
                %241 = vst [vmem:[%s229 + $0x28] sm:%s221] %v240
                %v242 = vld [vmem:[%s228 + $0x60] sm:%s221]
                %243 = vst [vmem:[%s229 + $0x30] sm:%s221] %v242
                %v244 = vld [vmem:[%s228 + $0x70] sm:%s221]
                %245 = vst [vmem:[%s229 + $0x38] sm:%s221] %v244
                %v246 = vld [vmem:[%s228 + $0x80] sm:%s221]
                %247 = vst [vmem:[%s229 + $0x40] sm:%s221] %v246
                %v248 = vld [vmem:[%s228 + $0x90] sm:%s221]
                %249 = vst [vmem:[%s229 + $0x48] sm:%s221] %v248
                %v250 = vld [vmem:[%s228 + $0xa0] sm:%s221]
                %251 = vst [vmem:[%s229 + $0x50] sm:%s221] %v250
                %v252 = vld [vmem:[%s228 + $0xb0] sm:%s221]
                %253 = vst [vmem:[%s229 + $0x58] sm:%s221] %v252
                %v254 = vld [vmem:[%s228 + $0xc0] sm:%s221]
                %255 = vst [vmem:[%s229 + $0x60] sm:%s221] %v254
                %v256 = vld [vmem:[%s228 + $0xd0] sm:%s221]
                %257 = vst [vmem:[%s229 + $0x68] sm:%s221] %v256
                %v258 = vld [vmem:[%s228 + $0xe0] sm:%s221]
                %259 = vst [vmem:[%s229 + $0x70] sm:%s221] %v258
                %v260 = vld [vmem:[%s228 + $0xf0] sm:%s221]
                %261 = vst [vmem:[%s229 + $0x78] sm:%s221] %v260
                %v262 = vld [vmem:[%s228 + $0x100] sm:%s221]
                %263 = vst [vmem:[%s229 + $0x80] sm:%s221] %v262
                %v264 = vld [vmem:[%s228 + $0x110] sm:%s221]
                %265 = vst [vmem:[%s229 + $0x88] sm:%s221] %v264
                %v266 = vld [vmem:[%s228 + $0x120] sm:%s221]
                %267 = vst [vmem:[%s229 + $0x90] sm:%s221] %v266
                %v268 = vld [vmem:[%s228 + $0x130] sm:%s221]
                %269 = vst [vmem:[%s229 + $0x98] sm:%s221] %v268
                %v270 = vld [vmem:[%s228 + $0x140] sm:%s221]
                %271 = vst [vmem:[%s229 + $0xa0] sm:%s221] %v270
                %v272 = vld [vmem:[%s228 + $0x150] sm:%s221]
                %273 = vst [vmem:[%s229 + $0xa8] sm:%s221] %v272
                %v274 = vld [vmem:[%s228 + $0x160] sm:%s221]
                %275 = vst [vmem:[%s229 + $0xb0] sm:%s221] %v274
                %v276 = vld [vmem:[%s228 + $0x170] sm:%s221]
                %277 = vst [vmem:[%s229 + $0xb8] sm:%s221] %v276
                %v278 = vld [vmem:[%s228 + $0x180] sm:%s221]
                %279 = vst [vmem:[%s229 + $0xc0] sm:%s221] %v278
                %v280 = vld [vmem:[%s228 + $0x190] sm:%s221]
                %281 = vst [vmem:[%s229 + $0xc8] sm:%s221] %v280
                %v282 = vld [vmem:[%s228 + $0x1a0] sm:%s221]
                %283 = vst [vmem:[%s229 + $0xd0] sm:%s221] %v282
                %v284 = vld [vmem:[%s228 + $0x1b0] sm:%s221]
                %285 = vst [vmem:[%s229 + $0xd8] sm:%s221] %v284
                %v286 = vld [vmem:[%s228 + $0x1c0] sm:%s221]
                %287 = vst [vmem:[%s229 + $0xe0] sm:%s221] %v286
                %v288 = vld [vmem:[%s228 + $0x1d0] sm:%s221]
                %289 = vst [vmem:[%s229 + $0xe8] sm:%s221] %v288
                %v290 = vld [vmem:[%s228 + $0x1e0] sm:%s221]
                %291 = vst [vmem:[%s229 + $0xf0] sm:%s221] %v290
                %v292 = vld [vmem:[%s228 + $0x1f0] sm:%s221]
                %293 = vst [vmem:[%s229 + $0xf8] sm:%s221] %v292
                %v294 = vld [vmem:[%s228 + $0x200] sm:%s221]
                %295 = vst [vmem:[%s229 + $0x100] sm:%s221] %v294
                %v296 = vld [vmem:[%s228 + $0x210] sm:%s221]
                %297 = vst [vmem:[%s229 + $0x108] sm:%s221] %v296
                %v298 = vld [vmem:[%s228 + $0x220] sm:%s221]
                %299 = vst [vmem:[%s229 + $0x110] sm:%s221] %v298
                %v300 = vld [vmem:[%s228 + $0x230] sm:%s221]
                %301 = vst [vmem:[%s229 + $0x118] sm:%s221] %v300
                %v302 = vld [vmem:[%s228 + $0x240] sm:%s221]
                %303 = vst [vmem:[%s229 + $0x120] sm:%s221] %v302
                %v304 = vld [vmem:[%s228 + $0x250] sm:%s221]
                %305 = vst [vmem:[%s229 + $0x128] sm:%s221] %v304
                %v306 = vld [vmem:[%s228 + $0x260] sm:%s221]
                %307 = vst [vmem:[%s229 + $0x130] sm:%s221] %v306
                %v308 = vld [vmem:[%s228 + $0x270] sm:%s221]
                %309 = vst [vmem:[%s229 + $0x138] sm:%s221] %v308
                %v310 = vld [vmem:[%s228 + $0x280] sm:%s221]
                %311 = vst [vmem:[%s229 + $0x140] sm:%s221] %v310
                %v312 = vld [vmem:[%s228 + $0x290] sm:%s221]
                %313 = vst [vmem:[%s229 + $0x148] sm:%s221] %v312
                %v314 = vld [vmem:[%s228 + $0x2a0] sm:%s221]
                %315 = vst [vmem:[%s229 + $0x150] sm:%s221] %v314
                %v316 = vld [vmem:[%s228 + $0x2b0] sm:%s221]
                %317 = vst [vmem:[%s229 + $0x158] sm:%s221] %v316
                %v318 = vld [vmem:[%s228 + $0x2c0] sm:%s221]
                %319 = vst [vmem:[%s229 + $0x160] sm:%s221] %v318
                %v320 = vld [vmem:[%s228 + $0x2d0] sm:%s221]
                %321 = vst [vmem:[%s229 + $0x168] sm:%s221] %v320
                %v322 = vld [vmem:[%s228 + $0x2e0] sm:%s221]
                %323 = vst [vmem:[%s229 + $0x170] sm:%s221] %v322
                %v324 = vld [vmem:[%s228 + $0x2f0] sm:%s221]
                %325 = vst [vmem:[%s229 + $0x178] sm:%s221] %v324
                %v326 = vld [vmem:[%s228 + $0x300] sm:%s221]
                %327 = vst [vmem:[%s229 + $0x180] sm:%s221] %v326
                %v328 = vld [vmem:[%s228 + $0x310] sm:%s221]
                %329 = vst [vmem:[%s229 + $0x188] sm:%s221] %v328
                %v330 = vld [vmem:[%s228 + $0x320] sm:%s221]
                %331 = vst [vmem:[%s229 + $0x190] sm:%s221] %v330
                %v332 = vld [vmem:[%s228 + $0x330] sm:%s221]
                %333 = vst [vmem:[%s229 + $0x198] sm:%s221] %v332
                %v334 = vld [vmem:[%s228 + $0x340] sm:%s221]
                %335 = vst [vmem:[%s229 + $0x1a0] sm:%s221] %v334
                %v336 = vld [vmem:[%s228 + $0x350] sm:%s221]
                %337 = vst [vmem:[%s229 + $0x1a8] sm:%s221] %v336
                %v338 = vld [vmem:[%s228 + $0x360] sm:%s221]
                %339 = vst [vmem:[%s229 + $0x1b0] sm:%s221] %v338
                %v340 = vld [vmem:[%s228 + $0x370] sm:%s221]
                %341 = vst [vmem:[%s229 + $0x1b8] sm:%s221] %v340
                %v342 = vld [vmem:[%s228 + $0x380] sm:%s221]
                %343 = vst [vmem:[%s229 + $0x1c0] sm:%s221] %v342
                %v344 = vld [vmem:[%s228 + $0x390] sm:%s221]
                %345 = vst [vmem:[%s229 + $0x1c8] sm:%s221] %v344
                %v346 = vld [vmem:[%s228 + $0x3a0] sm:%s221]
                %347 = vst [vmem:[%s229 + $0x1d0] sm:%s221] %v346
                %v348 = vld [vmem:[%s228 + $0x3b0] sm:%s221]
                %349 = vst [vmem:[%s229 + $0x1d8] sm:%s221] %v348
                %v350 = vld [vmem:[%s228 + $0x3c0] sm:%s221]
                %351 = vst [vmem:[%s229 + $0x1e0] sm:%s221] %v350
                %v352 = vld [vmem:[%s228 + $0x3d0] sm:%s221]
                %353 = vst [vmem:[%s229 + $0x1e8] sm:%s221] %v352
                %v354 = vld [vmem:[%s228 + $0x3e0] sm:%s221]
                %355 = vst [vmem:[%s229 + $0x1f0] sm:%s221] %v354
                %v356 = vld [vmem:[%s228 + $0x3f0] sm:%s221]
                %357 = vst [vmem:[%s229 + $0x1f8] sm:%s221] %v356
              $region60: #{discriminator_forward.8} parent=54 // loop_footer
                %s227 = sadd.s32 1, %s223
              $region61: #{discriminator_forward.8} parent=54 // loop_footer_branch
                %222 = sbr.rel target = $region57
              $region62: #{discriminator_forward.8} parent=54 // loop_exit
                _
            $region55: #{discriminator_forward.8} parent=46 // pred_fallthru
              _
          $region47: #{discriminator_forward.8} parent=42 // pred_fallthru
            _
          %498 = vnop
        $region43: #{discriminator_forward.8} parent=15 // pred_fallthru
          _
        // Predicated region
        $region78: #{discriminator_forward.8} parent=15 // pred_check
          %p499 = pneg %p104
        $region79: #{discriminator_forward.8} parent=15 // pred_check_branch
          %501 = sbr.rel (%p499) target = $region81
        $region80: #{discriminator_forward.8} parent=15 // pred_region
          %s502 = smul.u32 2, %s17
          %p503 = scmp.lt.s32.totalorder %s502, 3
          %s504 = scalar_select %p503, %s502, 3
          %s505 = scalar_lea.vmem %s2, %s504
          %s506 = smul.u32 2, %s17
        $region81: #{discriminator_forward.8} parent=15 // pred_fallthru
          _
      $region16: #{discriminator_forward.8} parent=5 // pred_fallthru
        _
      %p507 = scmp.le.s32.totalorder 1, %s9
      %p508 = scmp.lt.s32.totalorder %s9, 17
      %p509 = pnand %p507, %p508
      %p510 = pneg %p509
      // Predicated region
      $region82: #{discriminator_forward.8} parent=5 // pred_check
        _
      $region83: #{discriminator_forward.8} parent=5 // pred_check_branch
        %512 = sbr.rel (%p509) target = $region85
      $region84: #{discriminator_forward.8} parent=5 // pred_region
        %s513 = ssub.s32 %s9, 1
        %s514 = sand.u32 %s43, 1
        %s515 = sand.u32 %s43, 1
        %s516 = smul.addr %s515, 64
        %s517 = scalar_lea.vmem [#allocation3], %s516
        // Predicated region
        $region86: #{discriminator_forward.8} parent=84 // pred_check
          %p518 = pneg %p56
        $region87: #{discriminator_forward.8} parent=84 // pred_check_branch
          %520 = sbr.rel (%p518) target = $region89
        $region88: #{discriminator_forward.8} parent=84 // pred_region
          _
        $region89: #{discriminator_forward.8} parent=84 // pred_fallthru
          _
        %s521 = sand.u32 %s71, 1
        %s522 = sand.u32 %s71, 1
        %s523 = smul.addr %s522, 512
        %s524 = scalar_lea.vmem [#allocation4], %s523
        // Predicated region
        $region90: #{discriminator_forward.8} parent=84 // pred_check
          %p525 = pneg %p84
        $region91: #{discriminator_forward.8} parent=84 // pred_check_branch
          %527 = sbr.rel (%p525) target = $region93
        $region92: #{discriminator_forward.8} parent=84 // pred_region
          _
        $region93: #{discriminator_forward.8} parent=84 // pred_fallthru
          _
        %s528 = sand.u32 %s43, 1
        %s529 = sand.u32 %s43, 1
        %s530 = smul.addr %s529, 64
        %s531 = scalar_lea.vmem [#allocation3], %s530
        %p532 = pneg %p56
        %p533 = pneg %p53
        %s534 = sand.u32 %s71, 1
        %s535 = sand.u32 %s71, 1
        %s536 = smul.addr %s535, 512
        %s537 = scalar_lea.vmem [#allocation4], %s536
        %p538 = pneg %p84
        %p539 = pneg %p81
        %s540 = smul.u32 2, %s20
        %p541 = scmp.lt.s32.totalorder %s540, 3
        %s542 = scalar_select %p541, %s540, 3
        %s543 = scalar_lea.vmem %s2, %s542
        %p544 = pneg %p110
        %p545 = pneg %p107
        %p546 = pneg %p138
        %p547 = pneg %p135
        %s548 = sand.u32 %s125, 1
        %s549 = sand.u32 %s125, 1
        %s550 = smul.addr %s549, 64
        %s551 = scalar_lea.vmem [#allocation5], %s550
        %s552 = smul.u32 4, %s19
        %s553 = smul.u32 4, %s21
        %s554 = smul.u32 64, %s21
        %s555 = smul.u32 2, %s20
        %s556 = smul.u32 2, %s20
        %p557 = scmp.lt.s32.totalorder %s556, 3
        %s558 = scalar_select %p557, %s556, 3
        %s559 = scalar_lea.vmem %s2, %s558
        %s560 = smul.u32 2, %s20
        %s561 = smul.u32 4, %s19
        %s562 = smul.u32 2, %s20
        %p563 = scmp.eq.s32.totalorder %s21, 0
        // Predicated region
        $region94: #{discriminator_forward.8} parent=84 // pred_check
          %p564 = pneg %p563
        $region95: #{discriminator_forward.8} parent=84 // pred_check_branch
          %566 = sbr.rel (%p564) target = $region97
        $region96: #{discriminator_forward.8} parent=84 // pred_region
          %567 = vst [vmem:[#allocation2] sm:$0xff] 0.0
          %568 = vst [vmem:[#allocation2 + $0x8] sm:$0xff] 0.0
          %569 = vst [vmem:[#allocation2 + $0x10] sm:$0xff] 0.0
          %570 = vst [vmem:[#allocation2 + $0x18] sm:$0xff] 0.0
          %571 = vst [vmem:[#allocation2 + $0x20] sm:$0xff] 0.0
          %572 = vst [vmem:[#allocation2 + $0x28] sm:$0xff] 0.0
          %573 = vst [vmem:[#allocation2 + $0x30] sm:$0xff] 0.0
          %574 = vst [vmem:[#allocation2 + $0x38] sm:$0xff] 0.0
        $region97: #{discriminator_forward.8} parent=84 // pred_fallthru
          _
        %v575 = vld [vmem:[#allocation2] sm:$0xff]
        %v576 = vld [vmem:[#allocation2 + $0x8] sm:$0xff]
        %v577 = vld [vmem:[#allocation2 + $0x10] sm:$0xff]
        %v578 = vld [vmem:[#allocation2 + $0x18] sm:$0xff]
        %v579 = vld [vmem:[#allocation2 + $0x20] sm:$0xff]
        %v580 = vld [vmem:[#allocation2 + $0x28] sm:$0xff]
        %v581 = vld [vmem:[#allocation2 + $0x30] sm:$0xff]
        %v582 = vld [vmem:[#allocation2 + $0x38] sm:$0xff]
        %v583 = vld [vmem:[%s517] sm:$0xff]
        %v584 = vld [vmem:[%s517 + $0x8] sm:$0xff]
        %v585 = vld [vmem:[%s517 + $0x10] sm:$0xff]
        %v586 = vld [vmem:[%s517 + $0x18] sm:$0xff]
        %v587 = vld [vmem:[%s517 + $0x20] sm:$0xff]
        %v588 = vld [vmem:[%s517 + $0x28] sm:$0xff]
        %v589 = vld [vmem:[%s517 + $0x30] sm:$0xff]
        %v590 = vld [vmem:[%s517 + $0x38] sm:$0xff]
        %v591 = vld [vmem:[%s524] sm:$0xff]
        %v592 = vld [vmem:[%s524 + $0x8] sm:$0xff]
        %v593 = vld [vmem:[%s524 + $0x10] sm:$0xff]
        %v594 = vld [vmem:[%s524 + $0x18] sm:$0xff]
        %v595 = vld [vmem:[%s524 + $0x20] sm:$0xff]
        %v596 = vld [vmem:[%s524 + $0x28] sm:$0xff]
        %v597 = vld [vmem:[%s524 + $0x30] sm:$0xff]
        %v598 = vld [vmem:[%s524 + $0x38] sm:$0xff]
        %v599 = vld [vmem:[%s524 + $0x40] sm:$0xff]
        %v600 = vld [vmem:[%s524 + $0x48] sm:$0xff]
        %v601 = vld [vmem:[%s524 + $0x50] sm:$0xff]
        %v602 = vld [vmem:[%s524 + $0x58] sm:$0xff]
        %v603 = vld [vmem:[%s524 + $0x60] sm:$0xff]
        %v604 = vld [vmem:[%s524 + $0x68] sm:$0xff]
        %v605 = vld [vmem:[%s524 + $0x70] sm:$0xff]
        %v606 = vld [vmem:[%s524 + $0x78] sm:$0xff]
        %v607 = vld [vmem:[%s524 + $0x80] sm:$0xff]
        %v608 = vld [vmem:[%s524 + $0x88] sm:$0xff]
        %v609 = vld [vmem:[%s524 + $0x90] sm:$0xff]
        %v610 = vld [vmem:[%s524 + $0x98] sm:$0xff]
        %v611 = vld [vmem:[%s524 + $0xa0] sm:$0xff]
        %v612 = vld [vmem:[%s524 + $0xa8] sm:$0xff]
        %v613 = vld [vmem:[%s524 + $0xb0] sm:$0xff]
        %v614 = vld [vmem:[%s524 + $0xb8] sm:$0xff]
        %v615 = vld [vmem:[%s524 + $0xc0] sm:$0xff]
        %v616 = vld [vmem:[%s524 + $0xc8] sm:$0xff]
        %v617 = vld [vmem:[%s524 + $0xd0] sm:$0xff]
        %v618 = vld [vmem:[%s524 + $0xd8] sm:$0xff]
        %v619 = vld [vmem:[%s524 + $0xe0] sm:$0xff]
        %v620 = vld [vmem:[%s524 + $0xe8] sm:$0xff]
        %v621 = vld [vmem:[%s524 + $0xf0] sm:$0xff]
        %v622 = vld [vmem:[%s524 + $0xf8] sm:$0xff]
        %v623 = vld [vmem:[%s524 + $0x100] sm:$0xff]
        %v624 = vld [vmem:[%s524 + $0x108] sm:$0xff]
        %v625 = vld [vmem:[%s524 + $0x110] sm:$0xff]
        %v626 = vld [vmem:[%s524 + $0x118] sm:$0xff]
        %v627 = vld [vmem:[%s524 + $0x120] sm:$0xff]
        %v628 = vld [vmem:[%s524 + $0x128] sm:$0xff]
        %v629 = vld [vmem:[%s524 + $0x130] sm:$0xff]
        %v630 = vld [vmem:[%s524 + $0x138] sm:$0xff]
        %v631 = vld [vmem:[%s524 + $0x140] sm:$0xff]
        %v632 = vld [vmem:[%s524 + $0x148] sm:$0xff]
        %v633 = vld [vmem:[%s524 + $0x150] sm:$0xff]
        %v634 = vld [vmem:[%s524 + $0x158] sm:$0xff]
        %v635 = vld [vmem:[%s524 + $0x160] sm:$0xff]
        %v636 = vld [vmem:[%s524 + $0x168] sm:$0xff]
        %v637 = vld [vmem:[%s524 + $0x170] sm:$0xff]
        %v638 = vld [vmem:[%s524 + $0x178] sm:$0xff]
        %v639 = vld [vmem:[%s524 + $0x180] sm:$0xff]
        %v640 = vld [vmem:[%s524 + $0x188] sm:$0xff]
        %v641 = vld [vmem:[%s524 + $0x190] sm:$0xff]
        %v642 = vld [vmem:[%s524 + $0x198] sm:$0xff]
        %v643 = vld [vmem:[%s524 + $0x1a0] sm:$0xff]
        %v644 = vld [vmem:[%s524 + $0x1a8] sm:$0xff]
        %v645 = vld [vmem:[%s524 + $0x1b0] sm:$0xff]
        %v646 = vld [vmem:[%s524 + $0x1b8] sm:$0xff]
        %v647 = vld [vmem:[%s524 + $0x1c0] sm:$0xff]
        %v648 = vld [vmem:[%s524 + $0x1c8] sm:$0xff]
        %v649 = vld [vmem:[%s524 + $0x1d0] sm:$0xff]
        %v650 = vld [vmem:[%s524 + $0x1d8] sm:$0xff]
        %v651 = vld [vmem:[%s524 + $0x1e0] sm:$0xff]
        %v652 = vld [vmem:[%s524 + $0x1e8] sm:$0xff]
        %v653 = vld [vmem:[%s524 + $0x1f0] sm:$0xff]
        %v654 = vld [vmem:[%s524 + $0x1f8] sm:$0xff]
        %v663 = vunpack.c.l.b16 %v583
        %v664 = vunpack.c.h.b16 %v583
        %v665 = vunpack.c.l.b16 %v584
        %v666 = vunpack.c.h.b16 %v584
        %v667 = vunpack.c.l.b16 %v585
        %v668 = vunpack.c.h.b16 %v585
        %v669 = vunpack.c.l.b16 %v586
        %v670 = vunpack.c.h.b16 %v586
        %v671 = vunpack.c.l.b16 %v587
        %v672 = vunpack.c.h.b16 %v587
        %v673 = vunpack.c.l.b16 %v588
        %v674 = vunpack.c.h.b16 %v588
        %v675 = vunpack.c.l.b16 %v589
        %v676 = vunpack.c.h.b16 %v589
        %v677 = vunpack.c.l.b16 %v590
        %v678 = vunpack.c.h.b16 %v590
        %v679 = vpack.c.b16 %v667, %v663
        %v680 = vpack.c.b16 %v668, %v664
        %v681 = vpack.c.b16 %v669, %v665
        %v682 = vpack.c.b16 %v670, %v666
        %v683 = vpack.c.b16 %v675, %v671
        %v684 = vpack.c.b16 %v676, %v672
        %v685 = vpack.c.b16 %v677, %v673
        %v686 = vpack.c.b16 %v678, %v674
        %v759 = vunpack.c.l.b16 %v591
        %v760 = vunpack.c.h.b16 %v591
        %v761 = vunpack.c.l.b16 %v592
        %v762 = vunpack.c.h.b16 %v592
        %v763 = vunpack.c.l.b16 %v593
        %v764 = vunpack.c.h.b16 %v593
        %v765 = vunpack.c.l.b16 %v594
        %v766 = vunpack.c.h.b16 %v594
        %v767 = vunpack.c.l.b16 %v595
        %v768 = vunpack.c.h.b16 %v595
        %v769 = vunpack.c.l.b16 %v596
        %v770 = vunpack.c.h.b16 %v596
        %v771 = vunpack.c.l.b16 %v597
        %v772 = vunpack.c.h.b16 %v597
        %v773 = vunpack.c.l.b16 %v598
        %v774 = vunpack.c.h.b16 %v598
        %v775 = vunpack.c.l.b16 %v599
        %v776 = vunpack.c.h.b16 %v599
        %v777 = vunpack.c.l.b16 %v600
        %v778 = vunpack.c.h.b16 %v600
        %v779 = vunpack.c.l.b16 %v601
        %v780 = vunpack.c.h.b16 %v601
        %v781 = vunpack.c.l.b16 %v602
        %v782 = vunpack.c.h.b16 %v602
        %v783 = vunpack.c.l.b16 %v603
        %v784 = vunpack.c.h.b16 %v603
        %v785 = vunpack.c.l.b16 %v604
        %v786 = vunpack.c.h.b16 %v604
        %v787 = vunpack.c.l.b16 %v605
        %v788 = vunpack.c.h.b16 %v605
        %v789 = vunpack.c.l.b16 %v606
        %v790 = vunpack.c.h.b16 %v606
        %v791 = vunpack.c.l.b16 %v607
        %v792 = vunpack.c.h.b16 %v607
        %v793 = vunpack.c.l.b16 %v608
        %v794 = vunpack.c.h.b16 %v608
        %v795 = vunpack.c.l.b16 %v609
        %v796 = vunpack.c.h.b16 %v609
        %v797 = vunpack.c.l.b16 %v610
        %v798 = vunpack.c.h.b16 %v610
        %v799 = vunpack.c.l.b16 %v611
        %v800 = vunpack.c.h.b16 %v611
        %v801 = vunpack.c.l.b16 %v612
        %v802 = vunpack.c.h.b16 %v612
        %v803 = vunpack.c.l.b16 %v613
        %v804 = vunpack.c.h.b16 %v613
        %v805 = vunpack.c.l.b16 %v614
        %v806 = vunpack.c.h.b16 %v614
        %v807 = vunpack.c.l.b16 %v615
        %v808 = vunpack.c.h.b16 %v615
        %v809 = vunpack.c.l.b16 %v616
        %v810 = vunpack.c.h.b16 %v616
        %v811 = vunpack.c.l.b16 %v617
        %v812 = vunpack.c.h.b16 %v617
        %v813 = vunpack.c.l.b16 %v618
        %v814 = vunpack.c.h.b16 %v618
        %v815 = vunpack.c.l.b16 %v619
        %v816 = vunpack.c.h.b16 %v619
        %v817 = vunpack.c.l.b16 %v620
        %v818 = vunpack.c.h.b16 %v620
        %v819 = vunpack.c.l.b16 %v621
        %v820 = vunpack.c.h.b16 %v621
        %v821 = vunpack.c.l.b16 %v622
        %v822 = vunpack.c.h.b16 %v622
        %v823 = vunpack.c.l.b16 %v623
        %v824 = vunpack.c.h.b16 %v623
        %v825 = vunpack.c.l.b16 %v624
        %v826 = vunpack.c.h.b16 %v624
        %v827 = vunpack.c.l.b16 %v625
        %v828 = vunpack.c.h.b16 %v625
        %v829 = vunpack.c.l.b16 %v626
        %v830 = vunpack.c.h.b16 %v626
        %v831 = vunpack.c.l.b16 %v627
        %v832 = vunpack.c.h.b16 %v627
        %v833 = vunpack.c.l.b16 %v628
        %v834 = vunpack.c.h.b16 %v628
        %v835 = vunpack.c.l.b16 %v629
        %v836 = vunpack.c.h.b16 %v629
        %v837 = vunpack.c.l.b16 %v630
        %v838 = vunpack.c.h.b16 %v630
        %v839 = vunpack.c.l.b16 %v631
        %v840 = vunpack.c.h.b16 %v631
        %v841 = vunpack.c.l.b16 %v632
        %v842 = vunpack.c.h.b16 %v632
        %v843 = vunpack.c.l.b16 %v633
        %v844 = vunpack.c.h.b16 %v633
        %v845 = vunpack.c.l.b16 %v634
        %v846 = vunpack.c.h.b16 %v634
        %v847 = vunpack.c.l.b16 %v635
        %v848 = vunpack.c.h.b16 %v635
        %v849 = vunpack.c.l.b16 %v636
        %v850 = vunpack.c.h.b16 %v636
        %v851 = vunpack.c.l.b16 %v637
        %v852 = vunpack.c.h.b16 %v637
        %v853 = vunpack.c.l.b16 %v638
        %v854 = vunpack.c.h.b16 %v638
        %v855 = vunpack.c.l.b16 %v639
        %v856 = vunpack.c.h.b16 %v639
        %v857 = vunpack.c.l.b16 %v640
        %v858 = vunpack.c.h.b16 %v640
        %v859 = vunpack.c.l.b16 %v641
        %v860 = vunpack.c.h.b16 %v641
        %v861 = vunpack.c.l.b16 %v642
        %v862 = vunpack.c.h.b16 %v642
        %v863 = vunpack.c.l.b16 %v643
        %v864 = vunpack.c.h.b16 %v643
        %v865 = vunpack.c.l.b16 %v644
        %v866 = vunpack.c.h.b16 %v644
        %v867 = vunpack.c.l.b16 %v645
        %v868 = vunpack.c.h.b16 %v645
        %v869 = vunpack.c.l.b16 %v646
        %v870 = vunpack.c.h.b16 %v646
        %v871 = vunpack.c.l.b16 %v647
        %v872 = vunpack.c.h.b16 %v647
        %v873 = vunpack.c.l.b16 %v648
        %v874 = vunpack.c.h.b16 %v648
        %v875 = vunpack.c.l.b16 %v649
        %v876 = vunpack.c.h.b16 %v649
        %v877 = vunpack.c.l.b16 %v650
        %v878 = vunpack.c.h.b16 %v650
        %v879 = vunpack.c.l.b16 %v651
        %v880 = vunpack.c.h.b16 %v651
        %v881 = vunpack.c.l.b16 %v652
        %v882 = vunpack.c.h.b16 %v652
        %v883 = vunpack.c.l.b16 %v653
        %v884 = vunpack.c.h.b16 %v653
        %v885 = vunpack.c.l.b16 %v654
        %v886 = vunpack.c.h.b16 %v654
        %v887 = vpack.c.b16 %v761, %v759
        %v888 = vpack.c.b16 %v762, %v760
        %v889 = vpack.c.b16 %v765, %v763
        %v890 = vpack.c.b16 %v766, %v764
        %v891 = vpack.c.b16 %v769, %v767
        %v892 = vpack.c.b16 %v770, %v768
        %v893 = vpack.c.b16 %v773, %v771
        %v894 = vpack.c.b16 %v774, %v772
        %v895 = vpack.c.b16 %v777, %v775
        %v896 = vpack.c.b16 %v778, %v776
        %v897 = vpack.c.b16 %v781, %v779
        %v898 = vpack.c.b16 %v782, %v780
        %v899 = vpack.c.b16 %v785, %v783
        %v900 = vpack.c.b16 %v786, %v784
        %v901 = vpack.c.b16 %v789, %v787
        %v902 = vpack.c.b16 %v790, %v788
        %v903 = vpack.c.b16 %v793, %v791
        %v904 = vpack.c.b16 %v794, %v792
        %v905 = vpack.c.b16 %v797, %v795
        %v906 = vpack.c.b16 %v798, %v796
        %v907 = vpack.c.b16 %v801, %v799
        %v908 = vpack.c.b16 %v802, %v800
        %v909 = vpack.c.b16 %v805, %v803
        %v910 = vpack.c.b16 %v806, %v804
        %v911 = vpack.c.b16 %v809, %v807
        %v912 = vpack.c.b16 %v810, %v808
        %v913 = vpack.c.b16 %v813, %v811
        %v914 = vpack.c.b16 %v814, %v812
        %v915 = vpack.c.b16 %v817, %v815
        %v916 = vpack.c.b16 %v818, %v816
        %v917 = vpack.c.b16 %v821, %v819
        %v918 = vpack.c.b16 %v822, %v820
        %v919 = vpack.c.b16 %v825, %v823
        %v920 = vpack.c.b16 %v826, %v824
        %v921 = vpack.c.b16 %v829, %v827
        %v922 = vpack.c.b16 %v830, %v828
        %v923 = vpack.c.b16 %v833, %v831
        %v924 = vpack.c.b16 %v834, %v832
        %v925 = vpack.c.b16 %v837, %v835
        %v926 = vpack.c.b16 %v838, %v836
        %v927 = vpack.c.b16 %v841, %v839
        %v928 = vpack.c.b16 %v842, %v840
        %v929 = vpack.c.b16 %v845, %v843
        %v930 = vpack.c.b16 %v846, %v844
        %v931 = vpack.c.b16 %v849, %v847
        %v932 = vpack.c.b16 %v850, %v848
        %v933 = vpack.c.b16 %v853, %v851
        %v934 = vpack.c.b16 %v854, %v852
        %v935 = vpack.c.b16 %v857, %v855
        %v936 = vpack.c.b16 %v858, %v856
        %v937 = vpack.c.b16 %v861, %v859
        %v938 = vpack.c.b16 %v862, %v860
        %v939 = vpack.c.b16 %v865, %v863
        %v940 = vpack.c.b16 %v866, %v864
        %v941 = vpack.c.b16 %v869, %v867
        %v942 = vpack.c.b16 %v870, %v868
        %v943 = vpack.c.b16 %v873, %v871
        %v944 = vpack.c.b16 %v874, %v872
        %v945 = vpack.c.b16 %v877, %v875
        %v946 = vpack.c.b16 %v878, %v876
        %v947 = vpack.c.b16 %v881, %v879
        %v948 = vpack.c.b16 %v882, %v880
        %v949 = vpack.c.b16 %v885, %v883
        %v950 = vpack.c.b16 %v886, %v884
        %1015 = vmatpush.bf16.msra.mxu0 %v901
        %1016 = vmatpush.bf16.msra.mxu0 %v899
        %1017 = vmatpush.bf16.msra.mxu0 %v897
        %1018 = vmatpush.bf16.msra.mxu0 %v895
        %1019 = vmatpush.bf16.msra.mxu0 %v893
        %1020 = vmatpush.bf16.msra.mxu0 %v891
        %1021 = vmatpush.bf16.msra.mxu0 %v889
        %1022 = vmatpush.bf16.msra.mxu0 %v887
        %1023 = vmatmul.bf16.gmra.mxu0 %v679
        %v1024 = vpop.f32.mrf.mxu0
        %v1025 = vadd.f32 0.0, %v1024
        %v1026 = vpop.f32.mrf.mxu0
        %v1027 = vadd.f32 0.0, %v1026
        %1028 = vmatmul.bf16.gmra.mxu0 %v683
        %v1029 = vpop.f32.mrf.mxu0
        %v1030 = vadd.f32 0.0, %v1029
        %v1031 = vpop.f32.mrf.mxu0
        %v1032 = vadd.f32 0.0, %v1031
        %1033 = vdwg.mxu0
        %1034 = vmatpush.bf16.msra.mxu0 %v917
        %1035 = vmatpush.bf16.msra.mxu0 %v915
        %1036 = vmatpush.bf16.msra.mxu0 %v913
        %1037 = vmatpush.bf16.msra.mxu0 %v911
        %1038 = vmatpush.bf16.msra.mxu0 %v909
        %1039 = vmatpush.bf16.msra.mxu0 %v907
        %1040 = vmatpush.bf16.msra.mxu0 %v905
        %1041 = vmatpush.bf16.msra.mxu0 %v903
        %1042 = vmatmul.bf16.gmra.mxu0 %v680
        %v1043 = vpop.f32.mrf.mxu0
        %v1044 = vadd.f32 %v1025, %v1043
        %v1045 = vpop.f32.mrf.mxu0
        %v1046 = vadd.f32 %v1027, %v1045
        %1047 = vmatmul.bf16.gmra.mxu0 %v684
        %v1048 = vpop.f32.mrf.mxu0
        %v1049 = vadd.f32 %v1030, %v1048
        %v1050 = vpop.f32.mrf.mxu0
        %v1051 = vadd.f32 %v1032, %v1050
        %1052 = vdwg.mxu0
        %1053 = vmatpush.bf16.msra.mxu0 %v933
        %1054 = vmatpush.bf16.msra.mxu0 %v931
        %1055 = vmatpush.bf16.msra.mxu0 %v929
        %1056 = vmatpush.bf16.msra.mxu0 %v927
        %1057 = vmatpush.bf16.msra.mxu0 %v925
        %1058 = vmatpush.bf16.msra.mxu0 %v923
        %1059 = vmatpush.bf16.msra.mxu0 %v921
        %1060 = vmatpush.bf16.msra.mxu0 %v919
        %1061 = vmatmul.bf16.gmra.mxu0 %v681
        %v1062 = vpop.f32.mrf.mxu0
        %v1063 = vadd.f32 %v1044, %v1062
        %v1064 = vpop.f32.mrf.mxu0
        %v1065 = vadd.f32 %v1046, %v1064
        %1066 = vmatmul.bf16.gmra.mxu0 %v685
        %v1067 = vpop.f32.mrf.mxu0
        %v1068 = vadd.f32 %v1049, %v1067
        %v1069 = vpop.f32.mrf.mxu0
        %v1070 = vadd.f32 %v1051, %v1069
        %1071 = vdwg.mxu0
        %1072 = vmatpush.bf16.msra.mxu0 %v949
        %1073 = vmatpush.bf16.msra.mxu0 %v947
        %1074 = vmatpush.bf16.msra.mxu0 %v945
        %1075 = vmatpush.bf16.msra.mxu0 %v943
        %1076 = vmatpush.bf16.msra.mxu0 %v941
        %1077 = vmatpush.bf16.msra.mxu0 %v939
        %1078 = vmatpush.bf16.msra.mxu0 %v937
        %1079 = vmatpush.bf16.msra.mxu0 %v935
        %1080 = vmatmul.bf16.gmra.mxu0 %v682
        %v1081 = vpop.f32.mrf.mxu0
        %v1082 = vadd.f32 %v1063, %v1081
        %v1083 = vpop.f32.mrf.mxu0
        %v1084 = vadd.f32 %v1065, %v1083
        %1085 = vmatmul.bf16.gmra.mxu0 %v686
        %v1086 = vpop.f32.mrf.mxu0
        %v1087 = vadd.f32 %v1068, %v1086
        %v1088 = vpop.f32.mrf.mxu0
        %v1089 = vadd.f32 %v1070, %v1088
        %1090 = vdwg.mxu0
        %1091 = vmatpush.bf16.msra.mxu0 %v902
        %1092 = vmatpush.bf16.msra.mxu0 %v900
        %1093 = vmatpush.bf16.msra.mxu0 %v898
        %1094 = vmatpush.bf16.msra.mxu0 %v896
        %1095 = vmatpush.bf16.msra.mxu0 %v894
        %1096 = vmatpush.bf16.msra.mxu0 %v892
        %1097 = vmatpush.bf16.msra.mxu0 %v890
        %1098 = vmatpush.bf16.msra.mxu0 %v888
        %1099 = vmatmul.bf16.gmra.mxu0 %v679
        %v1100 = vpop.f32.mrf.mxu0
        %v1101 = vadd.f32 0.0, %v1100
        %v1102 = vpop.f32.mrf.mxu0
        %v1103 = vadd.f32 0.0, %v1102
        %1104 = vmatmul.bf16.gmra.mxu0 %v683
        %v1105 = vpop.f32.mrf.mxu0
        %v1106 = vadd.f32 0.0, %v1105
        %v1107 = vpop.f32.mrf.mxu0
        %v1108 = vadd.f32 0.0, %v1107
        %1109 = vdwg.mxu0
        %1110 = vmatpush.bf16.msra.mxu0 %v918
        %1111 = vmatpush.bf16.msra.mxu0 %v916
        %1112 = vmatpush.bf16.msra.mxu0 %v914
        %1113 = vmatpush.bf16.msra.mxu0 %v912
        %1114 = vmatpush.bf16.msra.mxu0 %v910
        %1115 = vmatpush.bf16.msra.mxu0 %v908
        %1116 = vmatpush.bf16.msra.mxu0 %v906
        %1117 = vmatpush.bf16.msra.mxu0 %v904
        %1118 = vmatmul.bf16.gmra.mxu0 %v680
        %v1119 = vpop.f32.mrf.mxu0
        %v1120 = vadd.f32 %v1101, %v1119
        %v1121 = vpop.f32.mrf.mxu0
        %v1122 = vadd.f32 %v1103, %v1121
        %1123 = vmatmul.bf16.gmra.mxu0 %v684
        %v1124 = vpop.f32.mrf.mxu0
        %v1125 = vadd.f32 %v1106, %v1124
        %v1126 = vpop.f32.mrf.mxu0
        %v1127 = vadd.f32 %v1108, %v1126
        %1128 = vdwg.mxu0
        %1129 = vmatpush.bf16.msra.mxu0 %v934
        %1130 = vmatpush.bf16.msra.mxu0 %v932
        %1131 = vmatpush.bf16.msra.mxu0 %v930
        %1132 = vmatpush.bf16.msra.mxu0 %v928
        %1133 = vmatpush.bf16.msra.mxu0 %v926
        %1134 = vmatpush.bf16.msra.mxu0 %v924
        %1135 = vmatpush.bf16.msra.mxu0 %v922
        %1136 = vmatpush.bf16.msra.mxu0 %v920
        %1137 = vmatmul.bf16.gmra.mxu0 %v681
        %v1138 = vpop.f32.mrf.mxu0
        %v1139 = vadd.f32 %v1120, %v1138
        %v1140 = vpop.f32.mrf.mxu0
        %v1141 = vadd.f32 %v1122, %v1140
        %1142 = vmatmul.bf16.gmra.mxu0 %v685
        %v1143 = vpop.f32.mrf.mxu0
        %v1144 = vadd.f32 %v1125, %v1143
        %v1145 = vpop.f32.mrf.mxu0
        %v1146 = vadd.f32 %v1127, %v1145
        %1147 = vdwg.mxu0
        %1148 = vmatpush.bf16.msra.mxu0 %v950
        %1149 = vmatpush.bf16.msra.mxu0 %v948
        %1150 = vmatpush.bf16.msra.mxu0 %v946
        %1151 = vmatpush.bf16.msra.mxu0 %v944
        %1152 = vmatpush.bf16.msra.mxu0 %v942
        %1153 = vmatpush.bf16.msra.mxu0 %v940
        %1154 = vmatpush.bf16.msra.mxu0 %v938
        %1155 = vmatpush.bf16.msra.mxu0 %v936
        %1156 = vmatmul.bf16.gmra.mxu0 %v682
        %v1157 = vpop.f32.mrf.mxu0
        %v1158 = vadd.f32 %v1139, %v1157
        %v1159 = vpop.f32.mrf.mxu0
        %v1160 = vadd.f32 %v1141, %v1159
        %1161 = vmatmul.bf16.gmra.mxu0 %v686
        %v1162 = vpop.f32.mrf.mxu0
        %v1163 = vadd.f32 %v1144, %v1162
        %v1164 = vpop.f32.mrf.mxu0
        %v1165 = vadd.f32 %v1146, %v1164
        %1166 = vdwg.mxu0
        %v1167 = vadd.f32 %v575, %v1082
        %v1168 = vadd.f32 %v576, %v1158
        %v1169 = vadd.f32 %v577, %v1084
        %v1170 = vadd.f32 %v578, %v1160
        %v1171 = vadd.f32 %v579, %v1087
        %v1172 = vadd.f32 %v580, %v1163
        %v1173 = vadd.f32 %v581, %v1089
        %v1174 = vadd.f32 %v582, %v1165
        %1175 = vst [vmem:[#allocation2] sm:$0xff] %v1167
        %1176 = vst [vmem:[#allocation2 + $0x8] sm:$0xff] %v1168
        %1177 = vst [vmem:[#allocation2 + $0x10] sm:$0xff] %v1169
        %1178 = vst [vmem:[#allocation2 + $0x18] sm:$0xff] %v1170
        %1179 = vst [vmem:[#allocation2 + $0x20] sm:$0xff] %v1171
        %1180 = vst [vmem:[#allocation2 + $0x28] sm:$0xff] %v1172
        %1181 = vst [vmem:[#allocation2 + $0x30] sm:$0xff] %v1173
        %1182 = vst [vmem:[#allocation2 + $0x38] sm:$0xff] %v1174
        %p1183 = scmp.eq.s32.totalorder %s21, 7
        // Predicated region
        $region98: #{discriminator_forward.8} parent=84 // pred_check
          %p1184 = pneg %p1183
        $region99: #{discriminator_forward.8} parent=84 // pred_check_branch
          %1186 = sbr.rel (%p1184) target = $region101
        $region100: #{discriminator_forward.8} parent=84 // pred_region
          %v1187 = vld [vmem:[#allocation2] sm:$0xff]
          %v1188 = vld [vmem:[#allocation2 + $0x8] sm:$0xff]
          %v1189 = vld [vmem:[#allocation2 + $0x10] sm:$0xff]
          %v1190 = vld [vmem:[#allocation2 + $0x18] sm:$0xff]
          %v1191 = vld [vmem:[#allocation2 + $0x20] sm:$0xff]
          %v1192 = vld [vmem:[#allocation2 + $0x28] sm:$0xff]
          %v1193 = vld [vmem:[#allocation2 + $0x30] sm:$0xff]
          %v1194 = vld [vmem:[#allocation2 + $0x38] sm:$0xff]
          %v1195 = vld [vmem:[%s559] sm:$0x3]
          %v1197 = vperm.slane %v1195, 0
          %v1198 = vperm.slane %v1195, 1
          %v1201 = vadd.f32 %v1187, %v1197
          %v1202 = vadd.f32 %v1188, %v1198
          %v1203 = vadd.f32 %v1189, %v1197
          %v1204 = vadd.f32 %v1190, %v1198
          %v1205 = vadd.f32 %v1191, %v1197
          %v1206 = vadd.f32 %v1192, %v1198
          %v1207 = vadd.f32 %v1193, %v1197
          %v1208 = vadd.f32 %v1194, %v1198
          %v1209 = vlaneseq
          %v1210 = vshrl.u32 %v1209, 7
          %v1211 = vadd.s32 %v1210, 8
          %v1212 = vadd.s32 %v1210, 16
          %v1213 = vadd.s32 %v1210, 24
          %vm1214 = vcmp.ge.s32.totalorder %v1210, 0
          %vm1215 = vcmp.ge.s32.totalorder %v1211, 0
          %vm1216 = vcmp.ge.s32.totalorder %v1212, 0
          %vm1217 = vcmp.ge.s32.totalorder %v1213, 0
          %vm1218 = vcmp.lt.s32.totalorder %v1210, 9
          %vm1219 = vcmp.lt.s32.totalorder %v1211, 9
          %vm1220 = vcmp.lt.s32.totalorder %v1212, 9
          %vm1221 = vcmp.lt.s32.totalorder %v1213, 9
          %vm1222 = vmand %vm1214, %vm1218
          %vm1223 = vmand %vm1215, %vm1219
          %vm1224 = vmand %vm1216, %vm1220
          %vm1225 = vmand %vm1217, %vm1221
          %v1226 = vsel %vm1222, %v1201, 0.0
          %v1227 = vsel %vm1222, %v1202, 0.0
          %v1228 = vsel %vm1223, %v1203, 0.0
          %v1229 = vsel %vm1223, %v1204, 0.0
          %v1230 = vsel %vm1224, %v1205, 0.0
          %v1231 = vsel %vm1224, %v1206, 0.0
          %v1232 = vsel %vm1225, %v1207, 0.0
          %v1233 = vsel %vm1225, %v1208, 0.0
          %v1234 = vadd.f32 %v1226, %v1228
          %v1235 = vadd.f32 %v1234, %v1230
          %v1236 = vadd.f32 %v1235, %v1232
          %v1237 = vrot.slane %v1236, 4
          %v1238 = vadd.f32 %v1236, %v1237
          %v1239 = vrot.slane %v1238, 2
          %v1240 = vadd.f32 %v1238, %v1239
          %v1241 = vrot.slane %v1240, 1
          %v1242 = vadd.f32 %v1240, %v1241
          %v1243 = vadd.f32 %v1227, %v1229
          %v1244 = vadd.f32 %v1243, %v1231
          %v1245 = vadd.f32 %v1244, %v1233
          %v1246 = vrot.slane %v1245, 4
          %v1247 = vadd.f32 %v1245, %v1246
          %v1248 = vrot.slane %v1247, 2
          %v1249 = vadd.f32 %v1247, %v1248
          %v1250 = vrot.slane %v1249, 1
          %v1251 = vadd.f32 %v1249, %v1250
          %v1252 = vmul.f32 %v1242, 0.11111111
          %v1253 = vmul.f32 %v1251, 0.11111111
          %v1254 = vsub.f32 %v1201, %v1252
          %v1255 = vsub.f32 %v1202, %v1253
          %v1256 = vsub.f32 %v1203, %v1252
          %v1257 = vsub.f32 %v1204, %v1253
          %v1258 = vsub.f32 %v1205, %v1252
          %v1259 = vsub.f32 %v1206, %v1253
          %v1260 = vsub.f32 %v1207, %v1252
          %v1261 = vsub.f32 %v1208, %v1253
          %v1262 = vsel %vm1222, %v1254, 0.0
          %v1263 = vsel %vm1222, %v1255, 0.0
          %v1264 = vsel %vm1223, %v1256, 0.0
          %v1265 = vsel %vm1223, %v1257, 0.0
          %v1266 = vsel %vm1224, %v1258, 0.0
          %v1267 = vsel %vm1224, %v1259, 0.0
          %v1268 = vsel %vm1225, %v1260, 0.0
          %v1269 = vsel %vm1225, %v1261, 0.0
          %v1270 = vmul.f32 %v1262, %v1262
          %v1271 = vmul.f32 %v1263, %v1263
          %v1272 = vmul.f32 %v1264, %v1264
          %v1273 = vmul.f32 %v1265, %v1265
          %v1274 = vmul.f32 %v1266, %v1266
          %v1275 = vmul.f32 %v1267, %v1267
          %v1276 = vmul.f32 %v1268, %v1268
          %v1277 = vmul.f32 %v1269, %v1269
          %v1278 = vadd.f32 %v1270, %v1272
          %v1279 = vadd.f32 %v1278, %v1274
          %v1280 = vadd.f32 %v1279, %v1276
          %v1281 = vrot.slane %v1280, 4
          %v1282 = vadd.f32 %v1280, %v1281
          %v1283 = vrot.slane %v1282, 2
          %v1284 = vadd.f32 %v1282, %v1283
          %v1285 = vrot.slane %v1284, 1
          %v1286 = vadd.f32 %v1284, %v1285
          %v1287 = vadd.f32 %v1271, %v1273
          %v1288 = vadd.f32 %v1287, %v1275
          %v1289 = vadd.f32 %v1288, %v1277
          %v1290 = vrot.slane %v1289, 4
          %v1291 = vadd.f32 %v1289, %v1290
          %v1292 = vrot.slane %v1291, 2
          %v1293 = vadd.f32 %v1291, %v1292
          %v1294 = vrot.slane %v1293, 1
          %v1295 = vadd.f32 %v1293, %v1294
          %v1296 = vmul.f32 %v1286, 0.11111111
          %v1297 = vmul.f32 %v1295, 0.11111111
          %v1298 = vadd.f32 %v1296, 1e-05
          %v1299 = vadd.f32 %v1297, 1e-05
          %v1300 = vrsqrt.pop %v1298
          %v1301 = vmul.f32 %v1300, %v1298
          %v1302 = vmul.f32 %v1301, %v1300
          %v1303 = vmul.f32 0.5, %v1302
          %v1304 = vsub.f32 1.5, %v1303
          %v1305 = vmul.f32 %v1300, %v1304
          %vm1306 = vweird.f32 %v1298
          %vm1307 = vweird.f32 %v1300
          %vm1308 = vmor %vm1306, %vm1307
          %v1309 = vsel %vm1308, %v1300, %v1305
          %v1310 = vrsqrt.pop %v1299
          %v1311 = vmul.f32 %v1310, %v1299
          %v1312 = vmul.f32 %v1311, %v1310
          %v1313 = vmul.f32 0.5, %v1312
          %v1314 = vsub.f32 1.5, %v1313
          %v1315 = vmul.f32 %v1310, %v1314
          %vm1316 = vweird.f32 %v1299
          %vm1317 = vweird.f32 %v1310
          %vm1318 = vmor %vm1316, %vm1317
          %v1319 = vsel %vm1318, %v1310, %v1315
          %v1320 = vmul.f32 %v1254, %v1309
          %v1321 = vmul.f32 %v1255, %v1319
          %v1322 = vmul.f32 %v1256, %v1309
          %v1323 = vmul.f32 %v1257, %v1319
          %v1324 = vmul.f32 %v1258, %v1309
          %v1325 = vmul.f32 %v1259, %v1319
          %v1326 = vmul.f32 %v1260, %v1309
          %v1327 = vmul.f32 %v1261, %v1319
          %vm1328 = vcmp.gt.f32.partialorder %v1320, 0.0
          %vm1329 = vcmp.gt.f32.partialorder %v1321, 0.0
          %vm1330 = vcmp.gt.f32.partialorder %v1322, 0.0
          %vm1331 = vcmp.gt.f32.partialorder %v1323, 0.0
          %vm1332 = vcmp.gt.f32.partialorder %v1324, 0.0
          %vm1333 = vcmp.gt.f32.partialorder %v1325, 0.0
          %vm1334 = vcmp.gt.f32.partialorder %v1326, 0.0
          %vm1335 = vcmp.gt.f32.partialorder %v1327, 0.0
          %v1336 = vmul.f32 %v1320, 0.2
          %v1337 = vmul.f32 %v1321, 0.2
          %v1338 = vmul.f32 %v1322, 0.2
          %v1339 = vmul.f32 %v1323, 0.2
          %v1340 = vmul.f32 %v1324, 0.2
          %v1341 = vmul.f32 %v1325, 0.2
          %v1342 = vmul.f32 %v1326, 0.2
          %v1343 = vmul.f32 %v1327, 0.2
          %v1344 = vsel %vm1328, %v1320, %v1336
          %v1345 = vsel %vm1329, %v1321, %v1337
          %v1346 = vsel %vm1330, %v1322, %v1338
          %v1347 = vsel %vm1331, %v1323, %v1339
          %v1348 = vsel %vm1332, %v1324, %v1340
          %v1349 = vsel %vm1333, %v1325, %v1341
          %v1350 = vsel %vm1334, %v1326, %v1342
          %v1351 = vsel %vm1335, %v1327, %v1343
          %v1352 = vsel %vm1222, %v1344, %v1201
          %v1353 = vsel %vm1222, %v1345, %v1202
          %v1354 = vsel %vm1223, %v1346, %v1203
          %v1355 = vsel %vm1223, %v1347, %v1204
          %v1356 = vsel %vm1224, %v1348, %v1205
          %v1357 = vsel %vm1224, %v1349, %v1206
          %v1358 = vsel %vm1225, %v1350, %v1207
          %v1359 = vsel %vm1225, %v1351, %v1208
          %vm1360 = vcmp.ge.s32.totalorder %v1210, 9
          %vm1361 = vcmp.ge.s32.totalorder %v1211, 9
          %vm1362 = vcmp.ge.s32.totalorder %v1212, 9
          %vm1363 = vcmp.ge.s32.totalorder %v1213, 9
          %vm1364 = vcmp.lt.s32.totalorder %v1210, 18
          %vm1365 = vcmp.lt.s32.totalorder %v1211, 18
          %vm1366 = vcmp.lt.s32.totalorder %v1212, 18
          %vm1367 = vcmp.lt.s32.totalorder %v1213, 18
          %vm1368 = vmand %vm1360, %vm1364
          %vm1369 = vmand %vm1361, %vm1365
          %vm1370 = vmand %vm1362, %vm1366
          %vm1371 = vmand %vm1363, %vm1367
          %v1372 = vsel %vm1368, %v1201, 0.0
          %v1373 = vsel %vm1368, %v1202, 0.0
          %v1374 = vsel %vm1369, %v1203, 0.0
          %v1375 = vsel %vm1369, %v1204, 0.0
          %v1376 = vsel %vm1370, %v1205, 0.0
          %v1377 = vsel %vm1370, %v1206, 0.0
          %v1378 = vsel %vm1371, %v1207, 0.0
          %v1379 = vsel %vm1371, %v1208, 0.0
          %v1380 = vadd.f32 %v1372, %v1374
          %v1381 = vadd.f32 %v1380, %v1376
          %v1382 = vadd.f32 %v1381, %v1378
          %v1383 = vrot.slane %v1382, 4
          %v1384 = vadd.f32 %v1382, %v1383
          %v1385 = vrot.slane %v1384, 2
          %v1386 = vadd.f32 %v1384, %v1385
          %v1387 = vrot.slane %v1386, 1
          %v1388 = vadd.f32 %v1386, %v1387
          %v1389 = vadd.f32 %v1373, %v1375
          %v1390 = vadd.f32 %v1389, %v1377
          %v1391 = vadd.f32 %v1390, %v1379
          %v1392 = vrot.slane %v1391, 4
          %v1393 = vadd.f32 %v1391, %v1392
          %v1394 = vrot.slane %v1393, 2
          %v1395 = vadd.f32 %v1393, %v1394
          %v1396 = vrot.slane %v1395, 1
          %v1397 = vadd.f32 %v1395, %v1396
          %v1398 = vmul.f32 %v1388, 0.11111111
          %v1399 = vmul.f32 %v1397, 0.11111111
          %v1400 = vsub.f32 %v1201, %v1398
          %v1401 = vsub.f32 %v1202, %v1399
          %v1402 = vsub.f32 %v1203, %v1398
          %v1403 = vsub.f32 %v1204, %v1399
          %v1404 = vsub.f32 %v1205, %v1398
          %v1405 = vsub.f32 %v1206, %v1399
          %v1406 = vsub.f32 %v1207, %v1398
          %v1407 = vsub.f32 %v1208, %v1399
          %v1408 = vsel %vm1368, %v1400, 0.0
          %v1409 = vsel %vm1368, %v1401, 0.0
          %v1410 = vsel %vm1369, %v1402, 0.0
          %v1411 = vsel %vm1369, %v1403, 0.0
          %v1412 = vsel %vm1370, %v1404, 0.0
          %v1413 = vsel %vm1370, %v1405, 0.0
          %v1414 = vsel %vm1371, %v1406, 0.0
          %v1415 = vsel %vm1371, %v1407, 0.0
          %v1416 = vmul.f32 %v1408, %v1408
          %v1417 = vmul.f32 %v1409, %v1409
          %v1418 = vmul.f32 %v1410, %v1410
          %v1419 = vmul.f32 %v1411, %v1411
          %v1420 = vmul.f32 %v1412, %v1412
          %v1421 = vmul.f32 %v1413, %v1413
          %v1422 = vmul.f32 %v1414, %v1414
          %v1423 = vmul.f32 %v1415, %v1415
          %v1424 = vadd.f32 %v1416, %v1418
          %v1425 = vadd.f32 %v1424, %v1420
          %v1426 = vadd.f32 %v1425, %v1422
          %v1427 = vrot.slane %v1426, 4
          %v1428 = vadd.f32 %v1426, %v1427
          %v1429 = vrot.slane %v1428, 2
          %v1430 = vadd.f32 %v1428, %v1429
          %v1431 = vrot.slane %v1430, 1
          %v1432 = vadd.f32 %v1430, %v1431
          %v1433 = vadd.f32 %v1417, %v1419
          %v1434 = vadd.f32 %v1433, %v1421
          %v1435 = vadd.f32 %v1434, %v1423
          %v1436 = vrot.slane %v1435, 4
          %v1437 = vadd.f32 %v1435, %v1436
          %v1438 = vrot.slane %v1437, 2
          %v1439 = vadd.f32 %v1437, %v1438
          %v1440 = vrot.slane %v1439, 1
          %v1441 = vadd.f32 %v1439, %v1440
          %v1442 = vmul.f32 %v1432, 0.11111111
          %v1443 = vmul.f32 %v1441, 0.11111111
          %v1444 = vadd.f32 %v1442, 1e-05
          %v1445 = vadd.f32 %v1443, 1e-05
          %v1446 = vrsqrt.pop %v1444
          %v1447 = vmul.f32 %v1446, %v1444
          %v1448 = vmul.f32 %v1447, %v1446
          %v1449 = vmul.f32 0.5, %v1448
          %v1450 = vsub.f32 1.5, %v1449
          %v1451 = vmul.f32 %v1446, %v1450
          %vm1452 = vweird.f32 %v1444
          %vm1453 = vweird.f32 %v1446
          %vm1454 = vmor %vm1452, %vm1453
          %v1455 = vsel %vm1454, %v1446, %v1451
          %v1456 = vrsqrt.pop %v1445
          %v1457 = vmul.f32 %v1456, %v1445
          %v1458 = vmul.f32 %v1457, %v1456
          %v1459 = vmul.f32 0.5, %v1458
          %v1460 = vsub.f32 1.5, %v1459
          %v1461 = vmul.f32 %v1456, %v1460
          %vm1462 = vweird.f32 %v1445
          %vm1463 = vweird.f32 %v1456
          %vm1464 = vmor %vm1462, %vm1463
          %v1465 = vsel %vm1464, %v1456, %v1461
          %v1466 = vmul.f32 %v1400, %v1455
          %v1467 = vmul.f32 %v1401, %v1465
          %v1468 = vmul.f32 %v1402, %v1455
          %v1469 = vmul.f32 %v1403, %v1465
          %v1470 = vmul.f32 %v1404, %v1455
          %v1471 = vmul.f32 %v1405, %v1465
          %v1472 = vmul.f32 %v1406, %v1455
          %v1473 = vmul.f32 %v1407, %v1465
          %vm1474 = vcmp.gt.f32.partialorder %v1466, 0.0
          %vm1475 = vcmp.gt.f32.partialorder %v1467, 0.0
          %vm1476 = vcmp.gt.f32.partialorder %v1468, 0.0
          %vm1477 = vcmp.gt.f32.partialorder %v1469, 0.0
          %vm1478 = vcmp.gt.f32.partialorder %v1470, 0.0
          %vm1479 = vcmp.gt.f32.partialorder %v1471, 0.0
          %vm1480 = vcmp.gt.f32.partialorder %v1472, 0.0
          %vm1481 = vcmp.gt.f32.partialorder %v1473, 0.0
          %v1482 = vmul.f32 %v1466, 0.2
          %v1483 = vmul.f32 %v1467, 0.2
          %v1484 = vmul.f32 %v1468, 0.2
          %v1485 = vmul.f32 %v1469, 0.2
          %v1486 = vmul.f32 %v1470, 0.2
          %v1487 = vmul.f32 %v1471, 0.2
          %v1488 = vmul.f32 %v1472, 0.2
          %v1489 = vmul.f32 %v1473, 0.2
          %v1490 = vsel %vm1474, %v1466, %v1482
          %v1491 = vsel %vm1475, %v1467, %v1483
          %v1492 = vsel %vm1476, %v1468, %v1484
          %v1493 = vsel %vm1477, %v1469, %v1485
          %v1494 = vsel %vm1478, %v1470, %v1486
          %v1495 = vsel %vm1479, %v1471, %v1487
          %v1496 = vsel %vm1480, %v1472, %v1488
          %v1497 = vsel %vm1481, %v1473, %v1489
          %v1498 = vsel %vm1368, %v1490, %v1352
          %v1499 = vsel %vm1368, %v1491, %v1353
          %v1500 = vsel %vm1369, %v1492, %v1354
          %v1501 = vsel %vm1369, %v1493, %v1355
          %v1502 = vsel %vm1370, %v1494, %v1356
          %v1503 = vsel %vm1370, %v1495, %v1357
          %v1504 = vsel %vm1371, %v1496, %v1358
          %v1505 = vsel %vm1371, %v1497, %v1359
          %1506 = vst [vmem:[%s551] sm:$0xff] %v1498
          %1507 = vst [vmem:[%s551 + $0x8] sm:$0xff] %v1499
          %1508 = vst [vmem:[%s551 + $0x10] sm:$0xff] %v1500
          %1509 = vst [vmem:[%s551 + $0x18] sm:$0xff] %v1501
          %1510 = vst [vmem:[%s551 + $0x20] sm:$0xff] %v1502
          %1511 = vst [vmem:[%s551 + $0x28] sm:$0xff] %v1503
          %1512 = vst [vmem:[%s551 + $0x30] sm:$0xff] %v1504
          %1513 = vst [vmem:[%s551 + $0x38] sm:$0xff] %v1505
        $region101: #{discriminator_forward.8} parent=84 // pred_fallthru
          _
        %s1514 = sand.u32 %s125, 1
        %s1515 = sand.u32 %s125, 1
        %s1516 = smul.addr %s1515, 64
        %s1517 = scalar_lea.vmem [#allocation5], %s1516
        // Predicated region
        $region102: #{discriminator_forward.8} parent=84 // pred_check
          %p1518 = pneg %p135
        $region103: #{discriminator_forward.8} parent=84 // pred_check_branch
          %1520 = sbr.rel (%p1518) target = $region105
        $region104: #{discriminator_forward.8} parent=84 // pred_region
          %s1521 = smul.u32 4, %s19
          %s1522 = smul.u32 2, %s20
          %s1523 = smul.addr %s1521, 4
          %s1524 = sadd.s32 %s1522, %s1523
          %s1525 = smul.addr %s1524, 8
          %s1526 = scalar_lea.vmem %s3, %s1525
          // Predicated region
          $region106: #{discriminator_forward.8} parent=104 // pred_check
            _
          $region107: #{discriminator_forward.8} parent=104 // pred_check_branch
            %1528 = sbr.rel (0) target = $region109
          $region108: #{discriminator_forward.8} parent=104 // pred_region
            // Predicated region
            $region110: #{discriminator_forward.8} parent=108 // pred_check
              _
            $region111: #{discriminator_forward.8} parent=108 // pred_check_branch
              %1530 = sbr.rel (0) target = $region113
            $region112: #{discriminator_forward.8} parent=108 // pred_region
              loop: start=0, step=1, limit=1
              $region114: #{discriminator_forward.8} parent=112 // loop_pre_header
                _
              $region115: #{discriminator_forward.8} parent=112 // loop_header
                %s1532 = sphi 0, %s1536
                %p1533 = scmp.ge.s32.totalorder %s1532, 1
                %s1537 = sphi %s1517, %s1517
                %s1538 = sphi %s1526, %s1526
              $region116: #{discriminator_forward.8} parent=112 // loop_header_branch
                %1535 = sbr.rel (%p1533) target = $region120
              $region117: #{discriminator_forward.8} parent=112 // loop_body
                %v1539 = vld [vmem:[%s1537] sm:$0xff]
                %1540 = vst [vmem:[%s1538] sm:$0xff] %v1539
                %v1541 = vld [vmem:[%s1537 + $0x8] sm:$0xff]
                %1542 = vst [vmem:[%s1538 + $0x8] sm:$0xff] %v1541
                %v1543 = vld [vmem:[%s1537 + $0x10] sm:$0xff]
                %1544 = vst [vmem:[%s1538 + $0x20] sm:$0xff] %v1543
                %v1545 = vld [vmem:[%s1537 + $0x18] sm:$0xff]
                %1546 = vst [vmem:[%s1538 + $0x28] sm:$0xff] %v1545
                %v1547 = vld [vmem:[%s1537 + $0x20] sm:$0xff]
                %1548 = vst [vmem:[%s1538 + $0x40] sm:$0xff] %v1547
                %v1549 = vld [vmem:[%s1537 + $0x28] sm:$0xff]
                %1550 = vst [vmem:[%s1538 + $0x48] sm:$0xff] %v1549
                %v1551 = vld [vmem:[%s1537 + $0x30] sm:$0xff]
                %1552 = vst [vmem:[%s1538 + $0x60] sm:$0xff] %v1551
                %v1553 = vld [vmem:[%s1537 + $0x38] sm:$0xff]
                %1554 = vst [vmem:[%s1538 + $0x68] sm:$0xff] %v1553
              $region118: #{discriminator_forward.8} parent=112 // loop_footer
                %s1536 = sadd.s32 1, %s1532
              $region119: #{discriminator_forward.8} parent=112 // loop_footer_branch
                %1531 = sbr.rel target = $region115
              $region120: #{discriminator_forward.8} parent=112 // loop_exit
                _
            $region113: #{discriminator_forward.8} parent=108 // pred_fallthru
              _
            // Predicated region
            $region121: #{discriminator_forward.8} parent=108 // pred_check
              _
            $region122: #{discriminator_forward.8} parent=108 // pred_check_branch
              %1556 = sbr.rel target = $region124
            $region123: #{discriminator_forward.8} parent=108 // pred_region
              _
            $region124: #{discriminator_forward.8} parent=108 // pred_fallthru
              _
          $region109: #{discriminator_forward.8} parent=104 // pred_fallthru
            _
          %1557 = vnop
        $region105: #{discriminator_forward.8} parent=84 // pred_fallthru
          _
      $region85: #{discriminator_forward.8} parent=5 // pred_fallthru
        _
      %p1558 = scmp.le.s32.totalorder 2, %s9
      // Predicated region
      $region125: #{discriminator_forward.8} parent=5 // pred_check
        %p1559 = pneg %p1558
      $region126: #{discriminator_forward.8} parent=5 // pred_check_branch
        %1561 = sbr.rel (%p1559) target = $region128
      $region127: #{discriminator_forward.8} parent=5 // pred_region
        %s1562 = ssub.s32 %s9, 2
        // Predicated region
        $region129: #{discriminator_forward.8} parent=127 // pred_check
          %p1563 = pneg %p141
        $region130: #{discriminator_forward.8} parent=127 // pred_check_branch
          %1565 = sbr.rel (%p1563) target = $region132
        $region131: #{discriminator_forward.8} parent=127 // pred_region
          %s1566 = sand.u32 %s126, 1
          %s1567 = sand.u32 %s126, 1
          %s1568 = smul.addr %s1567, 64
          %s1569 = scalar_lea.vmem [#allocation5], %s1568
        $region132: #{discriminator_forward.8} parent=127 // pred_fallthru
          _
      $region128: #{discriminator_forward.8} parent=5 // pred_fallthru
        _
    $region6: #{discriminator_forward.8} parent=1 // loop_footer
      %s13 = sadd.s32 1, %s9
    $region7: #{discriminator_forward.8} parent=1 // loop_footer_branch
      %8 = sbr.rel target = $region3
    $region8: #{discriminator_forward.8} parent=1 // loop_exit
      _

// kernel: discriminator_forward.9
$region0: #{discriminator_forward.9}
  #allocation0 [shape = 'u32[]', space=smem, size = 0x4, offset = 0x4, fixed_abs, tag = 'smem constant byte address 0x4 - core index']
  #allocation1 [shape = 'u32[72,128]{1,0:T(1,128)}', space=vmem, size = 0x9000, scoped, tag = 'internal scratch']
  #allocation2 [shape = 'f32[1,1]{1,0:T(1,128)S(1)}', space=vmem, size = 0x200, scoped, tag = 'scoped memory for discriminator_forward.9']
  %s0 = inlined_call_operand.vmem [shape: f32[8,8192], index: 0, kind: input, shape index: {}]
  %s1 = inlined_call_operand.vmem [shape: f32[1,8192], index: 1, kind: input, shape index: {}]
  %s2 = inlined_call_operand.<no memory space> [shape: f32[1,1], index: 2, kind: input, shape index: {}]
  %s3 = inlined_call_operand.vmem [shape: f32[8,1], index: 3, kind: output, shape index: {}]
  %s4 = sld [smem:[#allocation0]]
  $region22: #{discriminator_forward.9} parent=0
    _
  %s6 = ssub.s32 1, %s4
  %s7 = scalar_select 0, %s6, %s4
  %v8 = vstv %s2
  %9 = vst [vmem:[#allocation2] sm:$0x1] %v8
  // Predicated region
  $region2: #{discriminator_forward.9} parent=0 // pred_check
    _
  $region3: #{discriminator_forward.9} parent=0 // pred_check_branch
    %11 = sbr.rel (0) target = $region5
  $region4: #{discriminator_forward.9} parent=0 // pred_region
    _
  $region5: #{discriminator_forward.9} parent=0 // pred_fallthru
    _
  // Predicated region
  $region6: #{discriminator_forward.9} parent=0 // pred_check
    _
  $region7: #{discriminator_forward.9} parent=0 // pred_check_branch
    %13 = sbr.rel (0) target = $region9
  $region8: #{discriminator_forward.9} parent=0 // pred_region
    _
  $region9: #{discriminator_forward.9} parent=0 // pred_fallthru
    _
  // Predicated region
  $region10: #{discriminator_forward.9} parent=0 // pred_check
    _
  $region11: #{discriminator_forward.9} parent=0 // pred_check_branch
    %15 = sbr.rel (0) target = $region13
  $region12: #{discriminator_forward.9} parent=0 // pred_region
    _
  $region13: #{discriminator_forward.9} parent=0 // pred_fallthru
    _
  %v16 = vld [vmem:[%s0] sm:$0xff]
  %v17 = vld [vmem:[%s0 + $0x8] sm:$0xff]
  %v18 = vld [vmem:[%s0 + $0x10] sm:$0xff]
  %v19 = vld [vmem:[%s0 + $0x18] sm:$0xff]
  %v20 = vld [vmem:[%s0 + $0x20] sm:$0xff]
  %v21 = vld [vmem:[%s0 + $0x28] sm:$0xff]
  %v22 = vld [vmem:[%s0 + $0x30] sm:$0xff]
  %v23 = vld [vmem:[%s0 + $0x38] sm:$0xff]
  %v24 = vld [vmem:[%s0 + $0x40] sm:$0xff]
  %v25 = vld [vmem:[%s0 + $0x48] sm:$0xff]
  %v26 = vld [vmem:[%s0 + $0x50] sm:$0xff]
  %v27 = vld [vmem:[%s0 + $0x58] sm:$0xff]
  %v28 = vld [vmem:[%s0 + $0x60] sm:$0xff]
  %v29 = vld [vmem:[%s0 + $0x68] sm:$0xff]
  %v30 = vld [vmem:[%s0 + $0x70] sm:$0xff]
  %v31 = vld [vmem:[%s0 + $0x78] sm:$0xff]
  %v32 = vld [vmem:[%s0 + $0x80] sm:$0xff]
  %v33 = vld [vmem:[%s0 + $0x88] sm:$0xff]
  %v34 = vld [vmem:[%s0 + $0x90] sm:$0xff]
  %v35 = vld [vmem:[%s0 + $0x98] sm:$0xff]
  %v36 = vld [vmem:[%s0 + $0xa0] sm:$0xff]
  %v37 = vld [vmem:[%s0 + $0xa8] sm:$0xff]
  %v38 = vld [vmem:[%s0 + $0xb0] sm:$0xff]
  %v39 = vld [vmem:[%s0 + $0xb8] sm:$0xff]
  %v40 = vld [vmem:[%s0 + $0xc0] sm:$0xff]
  %v41 = vld [vmem:[%s0 + $0xc8] sm:$0xff]
  %v42 = vld [vmem:[%s0 + $0xd0] sm:$0xff]
  %v43 = vld [vmem:[%s0 + $0xd8] sm:$0xff]
  %v44 = vld [vmem:[%s0 + $0xe0] sm:$0xff]
  %v45 = vld [vmem:[%s0 + $0xe8] sm:$0xff]
  %v46 = vld [vmem:[%s0 + $0xf0] sm:$0xff]
  %v47 = vld [vmem:[%s0 + $0xf8] sm:$0xff]
  %v48 = vld [vmem:[%s0 + $0x100] sm:$0xff]
  %v49 = vld [vmem:[%s0 + $0x108] sm:$0xff]
  %v50 = vld [vmem:[%s0 + $0x110] sm:$0xff]
  %v51 = vld [vmem:[%s0 + $0x118] sm:$0xff]
  %v52 = vld [vmem:[%s0 + $0x120] sm:$0xff]
  %v53 = vld [vmem:[%s0 + $0x128] sm:$0xff]
  %v54 = vld [vmem:[%s0 + $0x130] sm:$0xff]
  %v55 = vld [vmem:[%s0 + $0x138] sm:$0xff]
  %v56 = vld [vmem:[%s0 + $0x140] sm:$0xff]
  %v57 = vld [vmem:[%s0 + $0x148] sm:$0xff]
  %v58 = vld [vmem:[%s0 + $0x150] sm:$0xff]
  %v59 = vld [vmem:[%s0 + $0x158] sm:$0xff]
  %v60 = vld [vmem:[%s0 + $0x160] sm:$0xff]
  %v61 = vld [vmem:[%s0 + $0x168] sm:$0xff]
  %v62 = vld [vmem:[%s0 + $0x170] sm:$0xff]
  %v63 = vld [vmem:[%s0 + $0x178] sm:$0xff]
  %v64 = vld [vmem:[%s0 + $0x180] sm:$0xff]
  %v65 = vld [vmem:[%s0 + $0x188] sm:$0xff]
  %v66 = vld [vmem:[%s0 + $0x190] sm:$0xff]
  %v67 = vld [vmem:[%s0 + $0x198] sm:$0xff]
  %v68 = vld [vmem:[%s0 + $0x1a0] sm:$0xff]
  %v69 = vld [vmem:[%s0 + $0x1a8] sm:$0xff]
  %v70 = vld [vmem:[%s0 + $0x1b0] sm:$0xff]
  %v71 = vld [vmem:[%s0 + $0x1b8] sm:$0xff]
  %v72 = vld [vmem:[%s0 + $0x1c0] sm:$0xff]
  %v73 = vld [vmem:[%s0 + $0x1c8] sm:$0xff]
  %v74 = vld [vmem:[%s0 + $0x1d0] sm:$0xff]
  %v75 = vld [vmem:[%s0 + $0x1d8] sm:$0xff]
  %v76 = vld [vmem:[%s0 + $0x1e0] sm:$0xff]
  %v77 = vld [vmem:[%s0 + $0x1e8] sm:$0xff]
  %v78 = vld [vmem:[%s0 + $0x1f0] sm:$0xff]
  %v79 = vld [vmem:[%s0 + $0x1f8] sm:$0xff]
  %v80 = vld [vmem:[%s1] sm:$0xff]
  %v81 = vld [vmem:[%s1 + $0x8] sm:$0xff]
  %v82 = vld [vmem:[%s1 + $0x10] sm:$0xff]
  %v83 = vld [vmem:[%s1 + $0x18] sm:$0xff]
  %v84 = vld [vmem:[%s1 + $0x20] sm:$0xff]
  %v85 = vld [vmem:[%s1 + $0x28] sm:$0xff]
  %v86 = vld [vmem:[%s1 + $0x30] sm:$0xff]
  %v87 = vld [vmem:[%s1 + $0x38] sm:$0xff]
  %v96 = vperm.slane %v80, 0
  %v97 = vperm.slane %v80, 1
  %v98 = vperm.slane %v80, 2
  %v99 = vperm.slane %v80, 3
  %v100 = vperm.slane %v80, 4
  %v101 = vperm.slane %v80, 5
  %v102 = vperm.slane %v80, 6
  %v103 = vperm.slane %v80, 7
  %v104 = vperm.slane %v81, 0
  %v105 = vperm.slane %v81, 1
  %v106 = vperm.slane %v81, 2
  %v107 = vperm.slane %v81, 3
  %v108 = vperm.slane %v81, 4
  %v109 = vperm.slane %v81, 5
  %v110 = vperm.slane %v81, 6
  %v111 = vperm.slane %v81, 7
  %v112 = vperm.slane %v82, 0
  %v113 = vperm.slane %v82, 1
  %v114 = vperm.slane %v82, 2
  %v115 = vperm.slane %v82, 3
  %v116 = vperm.slane %v82, 4
  %v117 = vperm.slane %v82, 5
  %v118 = vperm.slane %v82, 6
  %v119 = vperm.slane %v82, 7
  %v120 = vperm.slane %v83, 0
  %v121 = vperm.slane %v83, 1
  %v122 = vperm.slane %v83, 2
  %v123 = vperm.slane %v83, 3
  %v124 = vperm.slane %v83, 4
  %v125 = vperm.slane %v83, 5
  %v126 = vperm.slane %v83, 6
  %v127 = vperm.slane %v83, 7
  %v128 = vperm.slane %v84, 0
  %v129 = vperm.slane %v84, 1
  %v130 = vperm.slane %v84, 2
  %v131 = vperm.slane %v84, 3
  %v132 = vperm.slane %v84, 4
  %v133 = vperm.slane %v84, 5
  %v134 = vperm.slane %v84, 6
  %v135 = vperm.slane %v84, 7
  %v136 = vperm.slane %v85, 0
  %v137 = vperm.slane %v85, 1
  %v138 = vperm.slane %v85, 2
  %v139 = vperm.slane %v85, 3
  %v140 = vperm.slane %v85, 4
  %v141 = vperm.slane %v85, 5
  %v142 = vperm.slane %v85, 6
  %v143 = vperm.slane %v85, 7
  %v144 = vperm.slane %v86, 0
  %v145 = vperm.slane %v86, 1
  %v146 = vperm.slane %v86, 2
  %v147 = vperm.slane %v86, 3
  %v148 = vperm.slane %v86, 4
  %v149 = vperm.slane %v86, 5
  %v150 = vperm.slane %v86, 6
  %v151 = vperm.slane %v86, 7
  %v152 = vperm.slane %v87, 0
  %v153 = vperm.slane %v87, 1
  %v154 = vperm.slane %v87, 2
  %v155 = vperm.slane %v87, 3
  %v156 = vperm.slane %v87, 4
  %v157 = vperm.slane %v87, 5
  %v158 = vperm.slane %v87, 6
  %v159 = vperm.slane %v87, 7
  %v224 = vmul.f32 %v16, %v96
  %v225 = vmul.f32 %v17, %v97
  %v226 = vmul.f32 %v18, %v98
  %v227 = vmul.f32 %v19, %v99
  %v228 = vmul.f32 %v20, %v100
  %v229 = vmul.f32 %v21, %v101
  %v230 = vmul.f32 %v22, %v102
  %v231 = vmul.f32 %v23, %v103
  %v232 = vmul.f32 %v24, %v104
  %v233 = vmul.f32 %v25, %v105
  %v234 = vmul.f32 %v26, %v106
  %v235 = vmul.f32 %v27, %v107
  %v236 = vmul.f32 %v28, %v108
  %v237 = vmul.f32 %v29, %v109
  %v238 = vmul.f32 %v30, %v110
  %v239 = vmul.f32 %v31, %v111
  %v240 = vmul.f32 %v32, %v112
  %v241 = vmul.f32 %v33, %v113
  %v242 = vmul.f32 %v34, %v114
  %v243 = vmul.f32 %v35, %v115
  %v244 = vmul.f32 %v36, %v116
  %v245 = vmul.f32 %v37, %v117
  %v246 = vmul.f32 %v38, %v118
  %v247 = vmul.f32 %v39, %v119
  %v248 = vmul.f32 %v40, %v120
  %v249 = vmul.f32 %v41, %v121
  %v250 = vmul.f32 %v42, %v122
  %v251 = vmul.f32 %v43, %v123
  %v252 = vmul.f32 %v44, %v124
  %v253 = vmul.f32 %v45, %v125
  %v254 = vmul.f32 %v46, %v126
  %v255 = vmul.f32 %v47, %v127
  %v256 = vmul.f32 %v48, %v128
  %v257 = vmul.f32 %v49, %v129
  %v258 = vmul.f32 %v50, %v130
  %v259 = vmul.f32 %v51, %v131
  %v260 = vmul.f32 %v52, %v132
  %v261 = vmul.f32 %v53, %v133
  %v262 = vmul.f32 %v54, %v134
  %v263 = vmul.f32 %v55, %v135
  %v264 = vmul.f32 %v56, %v136
  %v265 = vmul.f32 %v57, %v137
  %v266 = vmul.f32 %v58, %v138
  %v267 = vmul.f32 %v59, %v139
  %v268 = vmul.f32 %v60, %v140
  %v269 = vmul.f32 %v61, %v141
  %v270 = vmul.f32 %v62, %v142
  %v271 = vmul.f32 %v63, %v143
  %v272 = vmul.f32 %v64, %v144
  %v273 = vmul.f32 %v65, %v145
  %v274 = vmul.f32 %v66, %v146
  %v275 = vmul.f32 %v67, %v147
  %v276 = vmul.f32 %v68, %v148
  %v277 = vmul.f32 %v69, %v149
  %v278 = vmul.f32 %v70, %v150
  %v279 = vmul.f32 %v71, %v151
  %v280 = vmul.f32 %v72, %v152
  %v281 = vmul.f32 %v73, %v153
  %v282 = vmul.f32 %v74, %v154
  %v283 = vmul.f32 %v75, %v155
  %v284 = vmul.f32 %v76, %v156
  %v285 = vmul.f32 %v77, %v157
  %v286 = vmul.f32 %v78, %v158
  %v287 = vmul.f32 %v79, %v159
  %v288 = vadd.f32 %v224, %v225
  %v289 = vadd.f32 %v288, %v226
  %v290 = vadd.f32 %v289, %v227
  %v291 = vadd.f32 %v290, %v228
  %v292 = vadd.f32 %v291, %v229
  %v293 = vadd.f32 %v292, %v230
  %v294 = vadd.f32 %v293, %v231
  %v295 = vadd.f32 %v294, %v232
  %v296 = vadd.f32 %v295, %v233
  %v297 = vadd.f32 %v296, %v234
  %v298 = vadd.f32 %v297, %v235
  %v299 = vadd.f32 %v298, %v236
  %v300 = vadd.f32 %v299, %v237
  %v301 = vadd.f32 %v300, %v238
  %v302 = vadd.f32 %v301, %v239
  %v303 = vadd.f32 %v302, %v240
  %v304 = vadd.f32 %v303, %v241
  %v305 = vadd.f32 %v304, %v242
  %v306 = vadd.f32 %v305, %v243
  %v307 = vadd.f32 %v306, %v244
  %v308 = vadd.f32 %v307, %v245
  %v309 = vadd.f32 %v308, %v246
  %v310 = vadd.f32 %v309, %v247
  %v311 = vadd.f32 %v310, %v248
  %v312 = vadd.f32 %v311, %v249
  %v313 = vadd.f32 %v312, %v250
  %v314 = vadd.f32 %v313, %v251
  %v315 = vadd.f32 %v314, %v252
  %v316 = vadd.f32 %v315, %v253
  %v317 = vadd.f32 %v316, %v254
  %v318 = vadd.f32 %v317, %v255
  %v319 = vadd.f32 %v318, %v256
  %v320 = vadd.f32 %v319, %v257
  %v321 = vadd.f32 %v320, %v258
  %v322 = vadd.f32 %v321, %v259
  %v323 = vadd.f32 %v322, %v260
  %v324 = vadd.f32 %v323, %v261
  %v325 = vadd.f32 %v324, %v262
  %v326 = vadd.f32 %v325, %v263
  %v327 = vadd.f32 %v326, %v264
  %v328 = vadd.f32 %v327, %v265
  %v329 = vadd.f32 %v328, %v266
  %v330 = vadd.f32 %v329, %v267
  %v331 = vadd.f32 %v330, %v268
  %v332 = vadd.f32 %v331, %v269
  %v333 = vadd.f32 %v332, %v270
  %v334 = vadd.f32 %v333, %v271
  %v335 = vadd.f32 %v334, %v272
  %v336 = vadd.f32 %v335, %v273
  %v337 = vadd.f32 %v336, %v274
  %v338 = vadd.f32 %v337, %v275
  %v339 = vadd.f32 %v338, %v276
  %v340 = vadd.f32 %v339, %v277
  %v341 = vadd.f32 %v340, %v278
  %v342 = vadd.f32 %v341, %v279
  %v343 = vadd.f32 %v342, %v280
  %v344 = vadd.f32 %v343, %v281
  %v345 = vadd.f32 %v344, %v282
  %v346 = vadd.f32 %v345, %v283
  %v347 = vadd.f32 %v346, %v284
  %v348 = vadd.f32 %v347, %v285
  %v349 = vadd.f32 %v348, %v286
  %v350 = vadd.f32 %v349, %v287
  %351 = vadd.xlane.f32.xlu0 %v350
  %v352 = vpop.xlane.xlu0 %351
  %v353 = vld [vmem:[#allocation2] sm:$0x1]
  %v355 = vperm.slane %v353, 0
  %v357 = vadd.f32 %v352, %v355
  %vm358 = vcmask 7168
  %359 = vst.msk [vmem:[%s3] sm:$0xff] %vm358, %v357
  // Predicated region
  $region14: #{discriminator_forward.9} parent=0 // pred_check
    _
  $region15: #{discriminator_forward.9} parent=0 // pred_check_branch
    %361 = sbr.rel (0) target = $region17
  $region16: #{discriminator_forward.9} parent=0 // pred_region
    _
  $region17: #{discriminator_forward.9} parent=0 // pred_fallthru
    _
  // Predicated region
  $region18: #{discriminator_forward.9} parent=0 // pred_check
    _
  $region19: #{discriminator_forward.9} parent=0 // pred_check_branch
    %363 = sbr.rel (0) target = $region21
  $region20: #{discriminator_forward.9} parent=0 // pred_region
    _
  $region21: #{discriminator_forward.9} parent=0 // pred_fallthru
    _

</llo_original>
